<compile_context>
chip_gen: v5e
topology: v5e:2x2
jax: 0.10.0
libtpu: 0.0.40
codegen_flags: <defaults>
</compile_context>

<pallas_src>
import functools

import jax
import jax.numpy as jnp
from jax import lax
from jax.experimental import pallas as pl
from jax.experimental.pallas import tpu as pltpu


# VMEM budget: stay well under v7x's 64 MiB physical VMEM per TensorCore
# (leave headroom for compiler internal scratch); also fine on v5e/v6e (128 MiB).
_VMEM_LIMIT_BYTES = 48 * 1024 * 1024
# ~30 full-block f32 temporaries stay live through the two unrolled skeletons
# plus 2 double-buffered inputs (4 blocks) -> conservative live-set multiplier.
_LIVE_FACTOR = 34


# ----------------------------------------------------------------------------
# In-kernel morphology helpers (traced inside the Pallas body).
# ----------------------------------------------------------------------------
def _masked_roll(x, shift, axis, boundary_mask):
    """Neighbor gather via an XLU rotation.

    y[i] = x[i - shift] (cyclic); at the wrap boundary (given by
    `boundary_mask`, a broadcastable (H, W) boolean) the value is replaced by x
    itself, which is equivalent to +/-inf padding for min/max pools because
    min(x, x) == max(x, x) == x.
    """
    n = x.shape[axis]
    rolled = pltpu.roll(x, shift % n, axis=axis)
    return jnp.where(boundary_mask, x, rolled)


def _min3(x, axis, first_mask, last_mask):
    # size-3 min pool along `axis`, stride 1, +inf padding (== -max_pool(-x)).
    prev_ = _masked_roll(x, 1, axis, first_mask)    # x[i-1]; identity at i == 0
    next_ = _masked_roll(x, -1, axis, last_mask)    # x[i+1]; identity at i == n-1
    return jnp.minimum(x, jnp.minimum(prev_, next_))


def _max3(x, axis, first_mask, last_mask):
    # size-3 max pool along `axis`, stride 1, -inf padding.
    prev_ = _masked_roll(x, 1, axis, first_mask)
    next_ = _masked_roll(x, -1, axis, last_mask)
    return jnp.maximum(x, jnp.maximum(prev_, next_))


def _soft_erode(img, masks):  # img: (..., H, W)
    (h0, h1), (w0, w1) = masks
    h_ax, w_ax = img.ndim - 2, img.ndim - 1
    p1 = _min3(img, h_ax, h0, h1)   # (3,1) min pool over H
    p2 = _min3(img, w_ax, w0, w1)   # (1,3) min pool over W
    return jnp.minimum(p1, p2)


def _soft_dilate(img, masks):
    # 3x3 max pool with -inf padding is separable.
    (h0, h1), (w0, w1) = masks
    h_ax, w_ax = img.ndim - 2, img.ndim - 1
    return _max3(_max3(img, h_ax, h0, h1), w_ax, w0, w1)


def _soft_open(img, masks):
    return _soft_dilate(_soft_erode(img, masks), masks)


def _soft_skel(img, n_iter, masks):
    # TODO(synk): on v6e/v7x the H-axis (sublane) shifts could be re-reads of a
    # VMEM scratch copy (ref[pl.ds(...)]) to move work off the 2-unit XLU, and
    # the scalar reductions could go through the idle MXU; kept roll-based here.
    img1 = _soft_open(img, masks)
    skel = jnp.maximum(img - img1, 0.0)

    def body(_, carry):
        im, sk = carry
        im = _soft_erode(im, masks)
        im1 = _soft_open(im, masks)
        delta = jnp.maximum(im - im1, 0.0)
        # Outer relu of the reference (relu(delta - sk*delta)) is redundant:
        # delta >= 0 and sk in [0, 1], so delta * (1 - sk) >= 0.
        sk = sk + delta - sk * delta
        return im, sk

    if n_iter > 0:
        _, skel = lax.fori_loop(0, n_iter, body, (img, skel), unroll=True)
    return skel


# ----------------------------------------------------------------------------
# Pallas kernel: per-step forward pass, partial loss written to own out block.
# ----------------------------------------------------------------------------
def _loss_kernel(pred_ref, true_ref, out_ref, *, n_iter, alpha, smooth,
                 weight_dice, n_batch_total, n_elem_total, skel_true_dtype):
    x = pred_ref[...].astype(jnp.float32)   # logits,  (Bt, C, H, W)
    t = true_ref[...].astype(jnp.float32)   # targets, (Bt, C, H, W)
    _, _, H, W = x.shape

    # --- shared transcendentals: one exp feeds both BCE and sigmoid -----------
    e = jnp.exp(-jnp.abs(x))                       # exp(-|x|)

    # BCEWithLogitsLoss (stable form); sum here, global mean applied via
    # n_elem_total.  (log(1+e) vs log1p(e): per-element error < 2^-24, and
    # plain log lowers on every TPU generation.)
    bce_sum = jnp.sum(jnp.maximum(x, 0.0) - x * t + jnp.log(1.0 + e))

    # sigmoid(x) derived from the same exp; exact divide so the probability
    # path (dice / clDice / pred skeleton) matches the reference closely.
    inv1pe = 1.0 / (1.0 + e)
    p = jnp.where(x >= 0.0, inv1pe, e * inv1pe)

    # --- Binary soft dice on logits (per sample) -------------------------------
    # TODO(synk): BinaryDiceLoss_Logits is not provided upstream; a standard
    # per-sample soft dice (sigmoid + 1 - (2*inter+s)/(sum_p+sum_t+s), mean over
    # the batch) is used as the stand-in.
    inter = jnp.sum(p * t, axis=(1, 2, 3), keepdims=True)          # (Bt,1,1,1)
    denom = (jnp.sum(p, axis=(1, 2, 3), keepdims=True)
             + jnp.sum(t, axis=(1, 2, 3), keepdims=True))
    dice_sum = jnp.sum(1.0 - (2.0 * inter + smooth) / (denom + smooth))

    # --- clDice ----------------------------------------------------------------
    # Broadcastable (H, W) boundary masks, built once and reused by every shift
    # of both skeletons (no full-tile boolean temporaries).
    row = lax.broadcasted_iota(jnp.int32, (H, W), 0)
    col = lax.broadcasted_iota(jnp.int32, (H, W), 1)
    masks = ((row == 0, row == H - 1), (col == 0, col == W - 1))

    skel_pred = _soft_skel(p, n_iter, masks)
    # TODO(synk): set skel_true_dtype=jnp.bfloat16 on v6e/v7x to halve the
    # vreg/VMEM footprint of the target skeleton (don't on v5e: no bf16 VPU).
    skel_true = _soft_skel(t.astype(skel_true_dtype), n_iter,
                           masks).astype(jnp.float32)

    # Channel-wise sums (dim=1 in the PyTorch reference) -> per-pixel ratios.
    tprec = (jnp.sum(skel_pred * t, axis=1) + smooth) * pl.reciprocal(
        jnp.sum(skel_pred, axis=1) + smooth, approx=True)          # (Bt, H, W)
    tsens = (jnp.sum(skel_true * p, axis=1) + smooth) * pl.reciprocal(
        jnp.sum(skel_true, axis=1) + smooth, approx=True)          # (Bt, H, W)
    cl_pix = 1.0 - 2.0 * (tprec * tsens) * pl.reciprocal(tprec + tsens,
                                                         approx=True)
    # Sum over the Bt samples of the per-sample (H, W) mean.
    cl_sum = jnp.sum(cl_pix) / (H * W)

    # The total loss is linear in the per-sample terms, so pre-scale and emit a
    # single partial scalar for this grid step (summed in the wrapper).
    contrib = ((1.0 - weight_dice) * bce_sum / n_elem_total
               + weight_dice * ((1.0 - alpha) * dice_sum
                                + alpha * cl_sum) / n_batch_total)
    out_ref[...] = jnp.full(out_ref.shape, contrib, jnp.float32)


# ----------------------------------------------------------------------------
# Wrapper.
# ----------------------------------------------------------------------------
def _pick_batch_tile(batch, per_sample_bytes, budget_bytes):
    """Largest batch tile whose live set fits the VMEM budget.

    Prefers leaving >= 2 grid steps (when batch >= 2) so the "parallel" batch
    axis can shard across the two TensorCores on v7x.
    """
    max_fit = max(1, budget_bytes // max(1, per_sample_bytes * _LIVE_FACTOR))
    divisors = [d for d in range(1, batch + 1) if batch % d == 0]
    fitting = [d for d in divisors if d <= max_fit] or [1]
    two_step = [d for d in fitting if batch // d >= 2]
    return max(two_step) if two_step else max(fitting)


def bce_softdice_cldice(y_pred, y_true, *, iter_=3, alpha=0.5, smooth=1.0,
                        weight_dice=0.5, skel_true_dtype=jnp.float32):
    assert y_pred.ndim == 4 and y_pred.shape == y_true.shape
    B, C, H, W = y_pred.shape

    per_sample_bytes = C * H * W * 4
    bt = _pick_batch_tile(B, per_sample_bytes, _VMEM_LIMIT_BYTES)
    g = B // bt

    kernel = functools.partial(
        _loss_kernel,
        n_iter=int(iter_),
        alpha=float(alpha),
        smooth=float(smooth),
        weight_dice=float(weight_dice),
        n_batch_total=int(B),
        n_elem_total=int(B * C * H * W),
        skel_true_dtype=skel_true_dtype,
    )

    # TODO(synk): for large H*W (per-sample live set > VMEM budget even at
    # bt=1), tile H with a (2 + 3*iter_)-row halo and repack so the lane axis
    # (W) is >= 128; not needed at these shapes.
    block = (bt, C, H, W)

    n_elem = B * C * H * W
    cost = pl.CostEstimate(
        flops=int(n_elem * (40 + 60 * int(iter_))),
        transcendentals=int(2 * n_elem),
        bytes_accessed=int(2 * n_elem * y_pred.dtype.itemsize
                           + g * 8 * 128 * 4),
    )

    partials = pl.pallas_call(
        kernel,
        out_shape=jax.ShapeDtypeStruct((g, 8, 128), jnp.float32),
        grid_spec=pltpu.PrefetchScalarGridSpec(
            num_scalar_prefetch=0,
            grid=(g,),
            in_specs=[
                pl.BlockSpec(block, lambda b: (b, 0, 0, 0)),
                pl.BlockSpec(block, lambda b: (b, 0, 0, 0)),
            ],
            # One lane-dense (8,128) tile per grid step: no cross-step state,
            # so the batch axis can run "parallel" (megacore on v7x).
            out_specs=pl.BlockSpec((1, 8, 128), lambda b: (b, 0, 0)),
        ),
        compiler_params=pltpu.CompilerParams(
            dimension_semantics=("parallel",),
            vmem_limit_bytes=int(_VMEM_LIMIT_BYTES),
        ),
        cost_estimate=cost,
    )(y_pred, y_true)   # no host-side astype: kernel casts to f32 internally

    return jnp.sum(partials[:, 0, 0])


if __name__ == "__main__":
    key = jax.random.PRNGKey(0)
    k_pred, k_true = jax.random.split(key)

    B, C, H, W = 2, 4, 16, 16  # NCHW
    y_pred = jax.random.normal(k_pred, (B, C, H, W), dtype=jnp.float32)  # logits
    y_true = (jax.random.uniform(k_true, (B, C, H, W)) > 0.5).astype(jnp.float32)

    loss = bce_softdice_cldice(y_pred, y_true, iter_=3, alpha=0.5, smooth=1.0,
                               weight_dice=0.5)
    loss = jax.block_until_ready(loss)
    assert loss.shape == () and bool(jnp.isfinite(loss))
    print("KERNEL_OK")
</pallas_src>

<mosaic_0001>
module attributes {stable_mosaic.version = 11 : i64} {
  func.func @_loss_kernel(%arg0: i32, %arg1: memref<1x4x16x16xf32, #tpu.memory_space<vmem>>, %arg2: memref<1x4x16x16xf32, #tpu.memory_space<vmem>>, %arg3: memref<1x8x128xf32, #tpu.memory_space<vmem>>) attributes {dimension_semantics = [#tpu.dimension_semantics<parallel>], iteration_bounds = array<i64: 2>, scalar_prefetch = 0 : i64, scratch_operands = 0 : i64, tpu.core_type = #tpu.core_type<tc>, window_params = [{transform_indices = @transform_0, window_bounds = array<i64: 1, 4, 16, 16>}, {transform_indices = @transform_1, window_bounds = array<i64: 1, 4, 16, 16>}, {transform_indices = @transform_2, window_bounds = array<i64: 1, 8, 128>}]} {
    %c0 = arith.constant 0 : index
    %c0_0 = arith.constant 0 : index
    %c0_1 = arith.constant 0 : index
    %c0_2 = arith.constant 0 : index
    %0 = vector.load %arg1[%c0, %c0_0, %c0_1, %c0_2] : memref<1x4x16x16xf32, #tpu.memory_space<vmem>>, vector<1x4x16x16xf32>
    %c0_3 = arith.constant 0 : index
    %c0_4 = arith.constant 0 : index
    %c0_5 = arith.constant 0 : index
    %c0_6 = arith.constant 0 : index
    %1 = vector.load %arg2[%c0_3, %c0_4, %c0_5, %c0_6] : memref<1x4x16x16xf32, #tpu.memory_space<vmem>>, vector<1x4x16x16xf32>
    %2 = math.absf %0 : vector<1x4x16x16xf32>
    %cst = arith.constant 0.000000e+00 : f32
    %3 = vector.broadcast %cst : f32 to vector<1x4x16x16xf32>
    %4 = arith.subf %3, %2 : vector<1x4x16x16xf32>
    %5 = math.exp %4 : vector<1x4x16x16xf32>
    %cst_7 = arith.constant 0.000000e+00 : f32
    %6 = vector.broadcast %cst_7 : f32 to vector<1x4x16x16xf32>
    %7 = arith.maximumf %0, %6 : vector<1x4x16x16xf32>
    %8 = arith.mulf %0, %1 : vector<1x4x16x16xf32>
    %9 = arith.subf %7, %8 : vector<1x4x16x16xf32>
    %cst_8 = arith.constant 1.000000e+00 : f32
    %10 = vector.broadcast %cst_8 : f32 to vector<1x4x16x16xf32>
    %11 = arith.addf %10, %5 : vector<1x4x16x16xf32>
    %12 = math.log %11 : vector<1x4x16x16xf32>
    %13 = arith.addf %9, %12 : vector<1x4x16x16xf32>
    %14 = vector.shape_cast %13 : vector<1x4x16x16xf32> to vector<1x1x4x16x16xf32>
    %cst_9 = arith.constant dense<0.000000e+00> : vector<1xf32>
    %15 = vector.multi_reduction <add>, %14, %cst_9 [1, 2, 3, 4] : vector<1x1x4x16x16xf32> to vector<1xf32>
    %16 = vector.shape_cast %15 : vector<1xf32> to vector<1x1x1x1x1xf32>
    %17 = vector.extract %16[0, 0, 0, 0, 0] : f32 from vector<1x1x1x1x1xf32>
    %cst_10 = arith.constant 1.000000e+00 : f32
    %18 = vector.broadcast %cst_10 : f32 to vector<1x4x16x16xf32>
    %19 = arith.addf %18, %5 : vector<1x4x16x16xf32>
    %cst_11 = arith.constant 1.000000e+00 : f32
    %20 = vector.broadcast %cst_11 : f32 to vector<1x4x16x16xf32>
    %21 = arith.divf %20, %19 : vector<1x4x16x16xf32>
    %cst_12 = arith.constant 0.000000e+00 : f32
    %22 = vector.broadcast %cst_12 : f32 to vector<1x4x16x16xf32>
    %23 = arith.cmpf oge, %0, %22 : vector<1x4x16x16xf32>
    %24 = arith.mulf %5, %21 : vector<1x4x16x16xf32>
    %25 = arith.select %23, %21, %24 : vector<1x4x16x16xi1>, vector<1x4x16x16xf32>
    %26 = arith.mulf %25, %1 : vector<1x4x16x16xf32>
    %cst_13 = arith.constant dense<0.000000e+00> : vector<1xf32>
    %27 = vector.multi_reduction <add>, %26, %cst_13 [1, 2, 3] : vector<1x4x16x16xf32> to vector<1xf32>
    %28 = vector.shape_cast %27 : vector<1xf32> to vector<1x1x1x1xf32>
    %cst_14 = arith.constant dense<0.000000e+00> : vector<1xf32>
    %29 = vector.multi_reduction <add>, %25, %cst_14 [1, 2, 3] : vector<1x4x16x16xf32> to vector<1xf32>
    %30 = vector.shape_cast %29 : vector<1xf32> to vector<1x1x1x1xf32>
    %cst_15 = arith.constant dense<0.000000e+00> : vector<1xf32>
    %31 = vector.multi_reduction <add>, %1, %cst_15 [1, 2, 3] : vector<1x4x16x16xf32> to vector<1xf32>
    %32 = vector.shape_cast %31 : vector<1xf32> to vector<1x1x1x1xf32>
    %33 = arith.addf %30, %32 : vector<1x1x1x1xf32>
    %cst_16 = arith.constant 2.000000e+00 : f32
    %34 = vector.broadcast %cst_16 : f32 to vector<1x1x1x1xf32>
    %35 = arith.mulf %34, %28 : vector<1x1x1x1xf32>
    %cst_17 = arith.constant 1.000000e+00 : f32
    %36 = vector.broadcast %cst_17 : f32 to vector<1x1x1x1xf32>
    %37 = arith.addf %35, %36 : vector<1x1x1x1xf32>
    %cst_18 = arith.constant 1.000000e+00 : f32
    %38 = vector.broadcast %cst_18 : f32 to vector<1x1x1x1xf32>
    %39 = arith.addf %33, %38 : vector<1x1x1x1xf32>
    %40 = arith.divf %37, %39 : vector<1x1x1x1xf32>
    %cst_19 = arith.constant 1.000000e+00 : f32
    %41 = vector.broadcast %cst_19 : f32 to vector<1x1x1x1xf32>
    %42 = arith.subf %41, %40 : vector<1x1x1x1xf32>
    %43 = vector.shape_cast %42 : vector<1x1x1x1xf32> to vector<1x1x1x1x1xf32>
    %cst_20 = arith.constant dense<0.000000e+00> : vector<1xf32>
    %44 = vector.multi_reduction <add>, %43, %cst_20 [1, 2, 3, 4] : vector<1x1x1x1x1xf32> to vector<1xf32>
    %45 = vector.shape_cast %44 : vector<1xf32> to vector<1x1x1x1x1xf32>
    %46 = vector.extract %45[0, 0, 0, 0, 0] : f32 from vector<1x1x1x1x1xf32>
    %47 = tpu.iota {dimensions = array<i32: 0>} : vector<16x16xi32>
    %48 = tpu.iota {dimensions = array<i32: 1>} : vector<16x16xi32>
    %c0_i32 = arith.constant 0 : i32
    %49 = vector.broadcast %c0_i32 : i32 to vector<16x16xi32>
    %50 = arith.cmpi eq, %47, %49 : vector<16x16xi32>
    %c15_i32 = arith.constant 15 : i32
    %51 = vector.broadcast %c15_i32 : i32 to vector<16x16xi32>
    %52 = arith.cmpi eq, %47, %51 : vector<16x16xi32>
    %c0_i32_21 = arith.constant 0 : i32
    %53 = vector.broadcast %c0_i32_21 : i32 to vector<16x16xi32>
    %54 = arith.cmpi eq, %48, %53 : vector<16x16xi32>
    %c15_i32_22 = arith.constant 15 : i32
    %55 = vector.broadcast %c15_i32_22 : i32 to vector<16x16xi32>
    %56 = arith.cmpi eq, %48, %55 : vector<16x16xi32>
    %c1_i32 = arith.constant 1 : i32
    %57 = tpu.dynamic_rotate %25 by %c1_i32 dim 2 : vector<1x4x16x16xf32>, i32 -> vector<1x4x16x16xf32>
    %58 = vector.shape_cast %50 : vector<16x16xi1> to vector<1x1x16x16xi1>
    %59 = vector.broadcast %58 : vector<1x1x16x16xi1> to vector<1x4x16x16xi1>
    %60 = arith.select %59, %25, %57 : vector<1x4x16x16xi1>, vector<1x4x16x16xf32>
    %c15_i32_23 = arith.constant 15 : i32
    %61 = tpu.dynamic_rotate %25 by %c15_i32_23 dim 2 : vector<1x4x16x16xf32>, i32 -> vector<1x4x16x16xf32>
    %62 = vector.shape_cast %52 : vector<16x16xi1> to vector<1x1x16x16xi1>
    %63 = vector.broadcast %62 : vector<1x1x16x16xi1> to vector<1x4x16x16xi1>
    %64 = arith.select %63, %25, %61 : vector<1x4x16x16xi1>, vector<1x4x16x16xf32>
    %65 = arith.minimumf %60, %64 : vector<1x4x16x16xf32>
    %66 = arith.minimumf %25, %65 : vector<1x4x16x16xf32>
    %c1_i32_24 = arith.constant 1 : i32
    %67 = tpu.dynamic_rotate %25 by %c1_i32_24 dim 3 : vector<1x4x16x16xf32>, i32 -> vector<1x4x16x16xf32>
    %68 = vector.shape_cast %54 : vector<16x16xi1> to vector<1x1x16x16xi1>
    %69 = vector.broadcast %68 : vector<1x1x16x16xi1> to vector<1x4x16x16xi1>
    %70 = arith.select %69, %25, %67 : vector<1x4x16x16xi1>, vector<1x4x16x16xf32>
    %c15_i32_25 = arith.constant 15 : i32
    %71 = tpu.dynamic_rotate %25 by %c15_i32_25 dim 3 : vector<1x4x16x16xf32>, i32 -> vector<1x4x16x16xf32>
    %72 = vector.shape_cast %56 : vector<16x16xi1> to vector<1x1x16x16xi1>
    %73 = vector.broadcast %72 : vector<1x1x16x16xi1> to vector<1x4x16x16xi1>
    %74 = arith.select %73, %25, %71 : vector<1x4x16x16xi1>, vector<1x4x16x16xf32>
    %75 = arith.minimumf %70, %74 : vector<1x4x16x16xf32>
    %76 = arith.minimumf %25, %75 : vector<1x4x16x16xf32>
    %77 = arith.minimumf %66, %76 : vector<1x4x16x16xf32>
    %c1_i32_26 = arith.constant 1 : i32
    %78 = tpu.dynamic_rotate %77 by %c1_i32_26 dim 2 : vector<1x4x16x16xf32>, i32 -> vector<1x4x16x16xf32>
    %79 = vector.shape_cast %50 : vector<16x16xi1> to vector<1x1x16x16xi1>
    %80 = vector.broadcast %79 : vector<1x1x16x16xi1> to vector<1x4x16x16xi1>
    %81 = arith.select %80, %77, %78 : vector<1x4x16x16xi1>, vector<1x4x16x16xf32>
    %c15_i32_27 = arith.constant 15 : i32
    %82 = tpu.dynamic_rotate %77 by %c15_i32_27 dim 2 : vector<1x4x16x16xf32>, i32 -> vector<1x4x16x16xf32>
    %83 = vector.shape_cast %52 : vector<16x16xi1> to vector<1x1x16x16xi1>
    %84 = vector.broadcast %83 : vector<1x1x16x16xi1> to vector<1x4x16x16xi1>
    %85 = arith.select %84, %77, %82 : vector<1x4x16x16xi1>, vector<1x4x16x16xf32>
    %86 = arith.maximumf %81, %85 : vector<1x4x16x16xf32>
    %87 = arith.maximumf %77, %86 : vector<1x4x16x16xf32>
    %c1_i32_28 = arith.constant 1 : i32
    %88 = tpu.dynamic_rotate %87 by %c1_i32_28 dim 3 : vector<1x4x16x16xf32>, i32 -> vector<1x4x16x16xf32>
    %89 = vector.shape_cast %54 : vector<16x16xi1> to vector<1x1x16x16xi1>
    %90 = vector.broadcast %89 : vector<1x1x16x16xi1> to vector<1x4x16x16xi1>
    %91 = arith.select %90, %87, %88 : vector<1x4x16x16xi1>, vector<1x4x16x16xf32>
    %c15_i32_29 = arith.constant 15 : i32
    %92 = tpu.dynamic_rotate %87 by %c15_i32_29 dim 3 : vector<1x4x16x16xf32>, i32 -> vector<1x4x16x16xf32>
    %93 = vector.shape_cast %56 : vector<16x16xi1> to vector<1x1x16x16xi1>
    %94 = vector.broadcast %93 : vector<1x1x16x16xi1> to vector<1x4x16x16xi1>
    %95 = arith.select %94, %87, %92 : vector<1x4x16x16xi1>, vector<1x4x16x16xf32>
    %96 = arith.maximumf %91, %95 : vector<1x4x16x16xf32>
    %97 = arith.maximumf %87, %96 : vector<1x4x16x16xf32>
    %98 = arith.subf %25, %97 : vector<1x4x16x16xf32>
    %cst_30 = arith.constant 0.000000e+00 : f32
    %99 = vector.broadcast %cst_30 : f32 to vector<1x4x16x16xf32>
    %100 = arith.maximumf %98, %99 : vector<1x4x16x16xf32>
    %c0_i32_31 = arith.constant 0 : i32
    %c1_i32_32 = arith.constant 1 : i32
    %101 = tpu.dynamic_rotate %25 by %c1_i32_32 dim 2 : vector<1x4x16x16xf32>, i32 -> vector<1x4x16x16xf32>
    %102 = vector.shape_cast %50 : vector<16x16xi1> to vector<1x1x16x16xi1>
    %103 = vector.broadcast %102 : vector<1x1x16x16xi1> to vector<1x4x16x16xi1>
    %104 = arith.select %103, %25, %101 : vector<1x4x16x16xi1>, vector<1x4x16x16xf32>
    %c15_i32_33 = arith.constant 15 : i32
    %105 = tpu.dynamic_rotate %25 by %c15_i32_33 dim 2 : vector<1x4x16x16xf32>, i32 -> vector<1x4x16x16xf32>
    %106 = vector.shape_cast %52 : vector<16x16xi1> to vector<1x1x16x16xi1>
    %107 = vector.broadcast %106 : vector<1x1x16x16xi1> to vector<1x4x16x16xi1>
    %108 = arith.select %107, %25, %105 : vector<1x4x16x16xi1>, vector<1x4x16x16xf32>
    %109 = arith.minimumf %104, %108 : vector<1x4x16x16xf32>
    %110 = arith.minimumf %25, %109 : vector<1x4x16x16xf32>
    %c1_i32_34 = arith.constant 1 : i32
    %111 = tpu.dynamic_rotate %25 by %c1_i32_34 dim 3 : vector<1x4x16x16xf32>, i32 -> vector<1x4x16x16xf32>
    %112 = vector.shape_cast %54 : vector<16x16xi1> to vector<1x1x16x16xi1>
    %113 = vector.broadcast %112 : vector<1x1x16x16xi1> to vector<1x4x16x16xi1>
    %114 = arith.select %113, %25, %111 : vector<1x4x16x16xi1>, vector<1x4x16x16xf32>
    %c15_i32_35 = arith.constant 15 : i32
    %115 = tpu.dynamic_rotate %25 by %c15_i32_35 dim 3 : vector<1x4x16x16xf32>, i32 -> vector<1x4x16x16xf32>
    %116 = vector.shape_cast %56 : vector<16x16xi1> to vector<1x1x16x16xi1>
    %117 = vector.broadcast %116 : vector<1x1x16x16xi1> to vector<1x4x16x16xi1>
    %118 = arith.select %117, %25, %115 : vector<1x4x16x16xi1>, vector<1x4x16x16xf32>
    %119 = arith.minimumf %114, %118 : vector<1x4x16x16xf32>
    %120 = arith.minimumf %25, %119 : vector<1x4x16x16xf32>
    %121 = arith.minimumf %110, %120 : vector<1x4x16x16xf32>
    %c1_i32_36 = arith.constant 1 : i32
    %122 = tpu.dynamic_rotate %121 by %c1_i32_36 dim 2 : vector<1x4x16x16xf32>, i32 -> vector<1x4x16x16xf32>
    %123 = vector.shape_cast %50 : vector<16x16xi1> to vector<1x1x16x16xi1>
    %124 = vector.broadcast %123 : vector<1x1x16x16xi1> to vector<1x4x16x16xi1>
    %125 = arith.select %124, %121, %122 : vector<1x4x16x16xi1>, vector<1x4x16x16xf32>
    %c15_i32_37 = arith.constant 15 : i32
    %126 = tpu.dynamic_rotate %121 by %c15_i32_37 dim 2 : vector<1x4x16x16xf32>, i32 -> vector<1x4x16x16xf32>
    %127 = vector.shape_cast %52 : vector<16x16xi1> to vector<1x1x16x16xi1>
    %128 = vector.broadcast %127 : vector<1x1x16x16xi1> to vector<1x4x16x16xi1>
    %129 = arith.select %128, %121, %126 : vector<1x4x16x16xi1>, vector<1x4x16x16xf32>
    %130 = arith.minimumf %125, %129 : vector<1x4x16x16xf32>
    %131 = arith.minimumf %121, %130 : vector<1x4x16x16xf32>
    %c1_i32_38 = arith.constant 1 : i32
    %132 = tpu.dynamic_rotate %121 by %c1_i32_38 dim 3 : vector<1x4x16x16xf32>, i32 -> vector<1x4x16x16xf32>
    %133 = vector.shape_cast %54 : vector<16x16xi1> to vector<1x1x16x16xi1>
    %134 = vector.broadcast %133 : vector<1x1x16x16xi1> to vector<1x4x16x16xi1>
    %135 = arith.select %134, %121, %132 : vector<1x4x16x16xi1>, vector<1x4x16x16xf32>
    %c15_i32_39 = arith.constant 15 : i32
    %136 = tpu.dynamic_rotate %121 by %c15_i32_39 dim 3 : vector<1x4x16x16xf32>, i32 -> vector<1x4x16x16xf32>
    %137 = vector.shape_cast %56 : vector<16x16xi1> to vector<1x1x16x16xi1>
    %138 = vector.broadcast %137 : vector<1x1x16x16xi1> to vector<1x4x16x16xi1>
    %139 = arith.select %138, %121, %136 : vector<1x4x16x16xi1>, vector<1x4x16x16xf32>
    %140 = arith.minimumf %135, %139 : vector<1x4x16x16xf32>
    %141 = arith.minimumf %121, %140 : vector<1x4x16x16xf32>
    %142 = arith.minimumf %131, %141 : vector<1x4x16x16xf32>
    %c1_i32_40 = arith.constant 1 : i32
    %143 = tpu.dynamic_rotate %142 by %c1_i32_40 dim 2 : vector<1x4x16x16xf32>, i32 -> vector<1x4x16x16xf32>
    %144 = vector.shape_cast %50 : vector<16x16xi1> to vector<1x1x16x16xi1>
    %145 = vector.broadcast %144 : vector<1x1x16x16xi1> to vector<1x4x16x16xi1>
    %146 = arith.select %145, %142, %143 : vector<1x4x16x16xi1>, vector<1x4x16x16xf32>
    %c15_i32_41 = arith.constant 15 : i32
    %147 = tpu.dynamic_rotate %142 by %c15_i32_41 dim 2 : vector<1x4x16x16xf32>, i32 -> vector<1x4x16x16xf32>
    %148 = vector.shape_cast %52 : vector<16x16xi1> to vector<1x1x16x16xi1>
    %149 = vector.broadcast %148 : vector<1x1x16x16xi1> to vector<1x4x16x16xi1>
    %150 = arith.select %149, %142, %147 : vector<1x4x16x16xi1>, vector<1x4x16x16xf32>
    %151 = arith.maximumf %146, %150 : vector<1x4x16x16xf32>
    %152 = arith.maximumf %142, %151 : vector<1x4x16x16xf32>
    %c1_i32_42 = arith.constant 1 : i32
    %153 = tpu.dynamic_rotate %152 by %c1_i32_42 dim 3 : vector<1x4x16x16xf32>, i32 -> vector<1x4x16x16xf32>
    %154 = vector.shape_cast %54 : vector<16x16xi1> to vector<1x1x16x16xi1>
    %155 = vector.broadcast %154 : vector<1x1x16x16xi1> to vector<1x4x16x16xi1>
    %156 = arith.select %155, %152, %153 : vector<1x4x16x16xi1>, vector<1x4x16x16xf32>
    %c15_i32_43 = arith.constant 15 : i32
    %157 = tpu.dynamic_rotate %152 by %c15_i32_43 dim 3 : vector<1x4x16x16xf32>, i32 -> vector<1x4x16x16xf32>
    %158 = vector.shape_cast %56 : vector<16x16xi1> to vector<1x1x16x16xi1>
    %159 = vector.broadcast %158 : vector<1x1x16x16xi1> to vector<1x4x16x16xi1>
    %160 = arith.select %159, %152, %157 : vector<1x4x16x16xi1>, vector<1x4x16x16xf32>
    %161 = arith.maximumf %156, %160 : vector<1x4x16x16xf32>
    %162 = arith.maximumf %152, %161 : vector<1x4x16x16xf32>
    %163 = arith.subf %121, %162 : vector<1x4x16x16xf32>
    %cst_44 = arith.constant 0.000000e+00 : f32
    %164 = vector.broadcast %cst_44 : f32 to vector<1x4x16x16xf32>
    %165 = arith.maximumf %163, %164 : vector<1x4x16x16xf32>
    %166 = arith.addf %100, %165 : vector<1x4x16x16xf32>
    %167 = arith.mulf %100, %165 : vector<1x4x16x16xf32>
    %168 = arith.subf %166, %167 : vector<1x4x16x16xf32>
    %c1_i32_45 = arith.constant 1 : i32
    %c1_i32_46 = arith.constant 1 : i32
    %169 = tpu.dynamic_rotate %121 by %c1_i32_46 dim 2 : vector<1x4x16x16xf32>, i32 -> vector<1x4x16x16xf32>
    %170 = vector.shape_cast %50 : vector<16x16xi1> to vector<1x1x16x16xi1>
    %171 = vector.broadcast %170 : vector<1x1x16x16xi1> to vector<1x4x16x16xi1>
    %172 = arith.select %171, %121, %169 : vector<1x4x16x16xi1>, vector<1x4x16x16xf32>
    %c15_i32_47 = arith.constant 15 : i32
    %173 = tpu.dynamic_rotate %121 by %c15_i32_47 dim 2 : vector<1x4x16x16xf32>, i32 -> vector<1x4x16x16xf32>
    %174 = vector.shape_cast %52 : vector<16x16xi1> to vector<1x1x16x16xi1>
    %175 = vector.broadcast %174 : vector<1x1x16x16xi1> to vector<1x4x16x16xi1>
    %176 = arith.select %175, %121, %173 : vector<1x4x16x16xi1>, vector<1x4x16x16xf32>
    %177 = arith.minimumf %172, %176 : vector<1x4x16x16xf32>
    %178 = arith.minimumf %121, %177 : vector<1x4x16x16xf32>
    %c1_i32_48 = arith.constant 1 : i32
    %179 = tpu.dynamic_rotate %121 by %c1_i32_48 dim 3 : vector<1x4x16x16xf32>, i32 -> vector<1x4x16x16xf32>
    %180 = vector.shape_cast %54 : vector<16x16xi1> to vector<1x1x16x16xi1>
    %181 = vector.broadcast %180 : vector<1x1x16x16xi1> to vector<1x4x16x16xi1>
    %182 = arith.select %181, %121, %179 : vector<1x4x16x16xi1>, vector<1x4x16x16xf32>
    %c15_i32_49 = arith.constant 15 : i32
    %183 = tpu.dynamic_rotate %121 by %c15_i32_49 dim 3 : vector<1x4x16x16xf32>, i32 -> vector<1x4x16x16xf32>
    %184 = vector.shape_cast %56 : vector<16x16xi1> to vector<1x1x16x16xi1>
    %185 = vector.broadcast %184 : vector<1x1x16x16xi1> to vector<1x4x16x16xi1>
    %186 = arith.select %185, %121, %183 : vector<1x4x16x16xi1>, vector<1x4x16x16xf32>
    %187 = arith.minimumf %182, %186 : vector<1x4x16x16xf32>
    %188 = arith.minimumf %121, %187 : vector<1x4x16x16xf32>
    %189 = arith.minimumf %178, %188 : vector<1x4x16x16xf32>
    %c1_i32_50 = arith.constant 1 : i32
    %190 = tpu.dynamic_rotate %189 by %c1_i32_50 dim 2 : vector<1x4x16x16xf32>, i32 -> vector<1x4x16x16xf32>
    %191 = vector.shape_cast %50 : vector<16x16xi1> to vector<1x1x16x16xi1>
    %192 = vector.broadcast %191 : vector<1x1x16x16xi1> to vector<1x4x16x16xi1>
    %193 = arith.select %192, %189, %190 : vector<1x4x16x16xi1>, vector<1x4x16x16xf32>
    %c15_i32_51 = arith.constant 15 : i32
    %194 = tpu.dynamic_rotate %189 by %c15_i32_51 dim 2 : vector<1x4x16x16xf32>, i32 -> vector<1x4x16x16xf32>
    %195 = vector.shape_cast %52 : vector<16x16xi1> to vector<1x1x16x16xi1>
    %196 = vector.broadcast %195 : vector<1x1x16x16xi1> to vector<1x4x16x16xi1>
    %197 = arith.select %196, %189, %194 : vector<1x4x16x16xi1>, vector<1x4x16x16xf32>
    %198 = arith.minimumf %193, %197 : vector<1x4x16x16xf32>
    %199 = arith.minimumf %189, %198 : vector<1x4x16x16xf32>
    %c1_i32_52 = arith.constant 1 : i32
    %200 = tpu.dynamic_rotate %189 by %c1_i32_52 dim 3 : vector<1x4x16x16xf32>, i32 -> vector<1x4x16x16xf32>
    %201 = vector.shape_cast %54 : vector<16x16xi1> to vector<1x1x16x16xi1>
    %202 = vector.broadcast %201 : vector<1x1x16x16xi1> to vector<1x4x16x16xi1>
    %203 = arith.select %202, %189, %200 : vector<1x4x16x16xi1>, vector<1x4x16x16xf32>
    %c15_i32_53 = arith.constant 15 : i32
    %204 = tpu.dynamic_rotate %189 by %c15_i32_53 dim 3 : vector<1x4x16x16xf32>, i32 -> vector<1x4x16x16xf32>
    %205 = vector.shape_cast %56 : vector<16x16xi1> to vector<1x1x16x16xi1>
    %206 = vector.broadcast %205 : vector<1x1x16x16xi1> to vector<1x4x16x16xi1>
    %207 = arith.select %206, %189, %204 : vector<1x4x16x16xi1>, vector<1x4x16x16xf32>
    %208 = arith.minimumf %203, %207 : vector<1x4x16x16xf32>
    %209 = arith.minimumf %189, %208 : vector<1x4x16x16xf32>
    %210 = arith.minimumf %199, %209 : vector<1x4x16x16xf32>
    %c1_i32_54 = arith.constant 1 : i32
    %211 = tpu.dynamic_rotate %210 by %c1_i32_54 dim 2 : vector<1x4x16x16xf32>, i32 -> vector<1x4x16x16xf32>
    %212 = vector.shape_cast %50 : vector<16x16xi1> to vector<1x1x16x16xi1>
    %213 = vector.broadcast %212 : vector<1x1x16x16xi1> to vector<1x4x16x16xi1>
    %214 = arith.select %213, %210, %211 : vector<1x4x16x16xi1>, vector<1x4x16x16xf32>
    %c15_i32_55 = arith.constant 15 : i32
    %215 = tpu.dynamic_rotate %210 by %c15_i32_55 dim 2 : vector<1x4x16x16xf32>, i32 -> vector<1x4x16x16xf32>
    %216 = vector.shape_cast %52 : vector<16x16xi1> to vector<1x1x16x16xi1>
    %217 = vector.broadcast %216 : vector<1x1x16x16xi1> to vector<1x4x16x16xi1>
    %218 = arith.select %217, %210, %215 : vector<1x4x16x16xi1>, vector<1x4x16x16xf32>
    %219 = arith.maximumf %214, %218 : vector<1x4x16x16xf32>
    %220 = arith.maximumf %210, %219 : vector<1x4x16x16xf32>
    %c1_i32_56 = arith.constant 1 : i32
    %221 = tpu.dynamic_rotate %220 by %c1_i32_56 dim 3 : vector<1x4x16x16xf32>, i32 -> vector<1x4x16x16xf32>
    %222 = vector.shape_cast %54 : vector<16x16xi1> to vector<1x1x16x16xi1>
    %223 = vector.broadcast %222 : vector<1x1x16x16xi1> to vector<1x4x16x16xi1>
    %224 = arith.select %223, %220, %221 : vector<1x4x16x16xi1>, vector<1x4x16x16xf32>
    %c15_i32_57 = arith.constant 15 : i32
    %225 = tpu.dynamic_rotate %220 by %c15_i32_57 dim 3 : vector<1x4x16x16xf32>, i32 -> vector<1x4x16x16xf32>
    %226 = vector.shape_cast %56 : vector<16x16xi1> to vector<1x1x16x16xi1>
    %227 = vector.broadcast %226 : vector<1x1x16x16xi1> to vector<1x4x16x16xi1>
    %228 = arith.select %227, %220, %225 : vector<1x4x16x16xi1>, vector<1x4x16x16xf32>
    %229 = arith.maximumf %224, %228 : vector<1x4x16x16xf32>
    %230 = arith.maximumf %220, %229 : vector<1x4x16x16xf32>
    %231 = arith.subf %189, %230 : vector<1x4x16x16xf32>
    %cst_58 = arith.constant 0.000000e+00 : f32
    %232 = vector.broadcast %cst_58 : f32 to vector<1x4x16x16xf32>
    %233 = arith.maximumf %231, %232 : vector<1x4x16x16xf32>
    %234 = arith.addf %168, %233 : vector<1x4x16x16xf32>
    %235 = arith.mulf %168, %233 : vector<1x4x16x16xf32>
    %236 = arith.subf %234, %235 : vector<1x4x16x16xf32>
    %c2_i32 = arith.constant 2 : i32
    %c1_i32_59 = arith.constant 1 : i32
    %237 = tpu.dynamic_rotate %189 by %c1_i32_59 dim 2 : vector<1x4x16x16xf32>, i32 -> vector<1x4x16x16xf32>
    %238 = vector.shape_cast %50 : vector<16x16xi1> to vector<1x1x16x16xi1>
    %239 = vector.broadcast %238 : vector<1x1x16x16xi1> to vector<1x4x16x16xi1>
    %240 = arith.select %239, %189, %237 : vector<1x4x16x16xi1>, vector<1x4x16x16xf32>
    %c15_i32_60 = arith.constant 15 : i32
    %241 = tpu.dynamic_rotate %189 by %c15_i32_60 dim 2 : vector<1x4x16x16xf32>, i32 -> vector<1x4x16x16xf32>
    %242 = vector.shape_cast %52 : vector<16x16xi1> to vector<1x1x16x16xi1>
    %243 = vector.broadcast %242 : vector<1x1x16x16xi1> to vector<1x4x16x16xi1>
    %244 = arith.select %243, %189, %241 : vector<1x4x16x16xi1>, vector<1x4x16x16xf32>
    %245 = arith.minimumf %240, %244 : vector<1x4x16x16xf32>
    %246 = arith.minimumf %189, %245 : vector<1x4x16x16xf32>
    %c1_i32_61 = arith.constant 1 : i32
    %247 = tpu.dynamic_rotate %189 by %c1_i32_61 dim 3 : vector<1x4x16x16xf32>, i32 -> vector<1x4x16x16xf32>
    %248 = vector.shape_cast %54 : vector<16x16xi1> to vector<1x1x16x16xi1>
    %249 = vector.broadcast %248 : vector<1x1x16x16xi1> to vector<1x4x16x16xi1>
    %250 = arith.select %249, %189, %247 : vector<1x4x16x16xi1>, vector<1x4x16x16xf32>
    %c15_i32_62 = arith.constant 15 : i32
    %251 = tpu.dynamic_rotate %189 by %c15_i32_62 dim 3 : vector<1x4x16x16xf32>, i32 -> vector<1x4x16x16xf32>
    %252 = vector.shape_cast %56 : vector<16x16xi1> to vector<1x1x16x16xi1>
    %253 = vector.broadcast %252 : vector<1x1x16x16xi1> to vector<1x4x16x16xi1>
    %254 = arith.select %253, %189, %251 : vector<1x4x16x16xi1>, vector<1x4x16x16xf32>
    %255 = arith.minimumf %250, %254 : vector<1x4x16x16xf32>
    %256 = arith.minimumf %189, %255 : vector<1x4x16x16xf32>
    %257 = arith.minimumf %246, %256 : vector<1x4x16x16xf32>
    %c1_i32_63 = arith.constant 1 : i32
    %258 = tpu.dynamic_rotate %257 by %c1_i32_63 dim 2 : vector<1x4x16x16xf32>, i32 -> vector<1x4x16x16xf32>
    %259 = vector.shape_cast %50 : vector<16x16xi1> to vector<1x1x16x16xi1>
    %260 = vector.broadcast %259 : vector<1x1x16x16xi1> to vector<1x4x16x16xi1>
    %261 = arith.select %260, %257, %258 : vector<1x4x16x16xi1>, vector<1x4x16x16xf32>
    %c15_i32_64 = arith.constant 15 : i32
    %262 = tpu.dynamic_rotate %257 by %c15_i32_64 dim 2 : vector<1x4x16x16xf32>, i32 -> vector<1x4x16x16xf32>
    %263 = vector.shape_cast %52 : vector<16x16xi1> to vector<1x1x16x16xi1>
    %264 = vector.broadcast %263 : vector<1x1x16x16xi1> to vector<1x4x16x16xi1>
    %265 = arith.select %264, %257, %262 : vector<1x4x16x16xi1>, vector<1x4x16x16xf32>
    %266 = arith.minimumf %261, %265 : vector<1x4x16x16xf32>
    %267 = arith.minimumf %257, %266 : vector<1x4x16x16xf32>
    %c1_i32_65 = arith.constant 1 : i32
    %268 = tpu.dynamic_rotate %257 by %c1_i32_65 dim 3 : vector<1x4x16x16xf32>, i32 -> vector<1x4x16x16xf32>
    %269 = vector.shape_cast %54 : vector<16x16xi1> to vector<1x1x16x16xi1>
    %270 = vector.broadcast %269 : vector<1x1x16x16xi1> to vector<1x4x16x16xi1>
    %271 = arith.select %270, %257, %268 : vector<1x4x16x16xi1>, vector<1x4x16x16xf32>
    %c15_i32_66 = arith.constant 15 : i32
    %272 = tpu.dynamic_rotate %257 by %c15_i32_66 dim 3 : vector<1x4x16x16xf32>, i32 -> vector<1x4x16x16xf32>
    %273 = vector.shape_cast %56 : vector<16x16xi1> to vector<1x1x16x16xi1>
    %274 = vector.broadcast %273 : vector<1x1x16x16xi1> to vector<1x4x16x16xi1>
    %275 = arith.select %274, %257, %272 : vector<1x4x16x16xi1>, vector<1x4x16x16xf32>
    %276 = arith.minimumf %271, %275 : vector<1x4x16x16xf32>
    %277 = arith.minimumf %257, %276 : vector<1x4x16x16xf32>
    %278 = arith.minimumf %267, %277 : vector<1x4x16x16xf32>
    %c1_i32_67 = arith.constant 1 : i32
    %279 = tpu.dynamic_rotate %278 by %c1_i32_67 dim 2 : vector<1x4x16x16xf32>, i32 -> vector<1x4x16x16xf32>
    %280 = vector.shape_cast %50 : vector<16x16xi1> to vector<1x1x16x16xi1>
    %281 = vector.broadcast %280 : vector<1x1x16x16xi1> to vector<1x4x16x16xi1>
    %282 = arith.select %281, %278, %279 : vector<1x4x16x16xi1>, vector<1x4x16x16xf32>
    %c15_i32_68 = arith.constant 15 : i32
    %283 = tpu.dynamic_rotate %278 by %c15_i32_68 dim 2 : vector<1x4x16x16xf32>, i32 -> vector<1x4x16x16xf32>
    %284 = vector.shape_cast %52 : vector<16x16xi1> to vector<1x1x16x16xi1>
    %285 = vector.broadcast %284 : vector<1x1x16x16xi1> to vector<1x4x16x16xi1>
    %286 = arith.select %285, %278, %283 : vector<1x4x16x16xi1>, vector<1x4x16x16xf32>
    %287 = arith.maximumf %282, %286 : vector<1x4x16x16xf32>
    %288 = arith.maximumf %278, %287 : vector<1x4x16x16xf32>
    %c1_i32_69 = arith.constant 1 : i32
    %289 = tpu.dynamic_rotate %288 by %c1_i32_69 dim 3 : vector<1x4x16x16xf32>, i32 -> vector<1x4x16x16xf32>
    %290 = vector.shape_cast %54 : vector<16x16xi1> to vector<1x1x16x16xi1>
    %291 = vector.broadcast %290 : vector<1x1x16x16xi1> to vector<1x4x16x16xi1>
    %292 = arith.select %291, %288, %289 : vector<1x4x16x16xi1>, vector<1x4x16x16xf32>
    %c15_i32_70 = arith.constant 15 : i32
    %293 = tpu.dynamic_rotate %288 by %c15_i32_70 dim 3 : vector<1x4x16x16xf32>, i32 -> vector<1x4x16x16xf32>
    %294 = vector.shape_cast %56 : vector<16x16xi1> to vector<1x1x16x16xi1>
    %295 = vector.broadcast %294 : vector<1x1x16x16xi1> to vector<1x4x16x16xi1>
    %296 = arith.select %295, %288, %293 : vector<1x4x16x16xi1>, vector<1x4x16x16xf32>
    %297 = arith.maximumf %292, %296 : vector<1x4x16x16xf32>
    %298 = arith.maximumf %288, %297 : vector<1x4x16x16xf32>
    %299 = arith.subf %257, %298 : vector<1x4x16x16xf32>
    %cst_71 = arith.constant 0.000000e+00 : f32
    %300 = vector.broadcast %cst_71 : f32 to vector<1x4x16x16xf32>
    %301 = arith.maximumf %299, %300 : vector<1x4x16x16xf32>
    %302 = arith.addf %236, %301 : vector<1x4x16x16xf32>
    %303 = arith.mulf %236, %301 : vector<1x4x16x16xf32>
    %304 = arith.subf %302, %303 : vector<1x4x16x16xf32>
    %c1_i32_72 = arith.constant 1 : i32
    %305 = tpu.dynamic_rotate %1 by %c1_i32_72 dim 2 : vector<1x4x16x16xf32>, i32 -> vector<1x4x16x16xf32>
    %306 = vector.shape_cast %50 : vector<16x16xi1> to vector<1x1x16x16xi1>
    %307 = vector.broadcast %306 : vector<1x1x16x16xi1> to vector<1x4x16x16xi1>
    %308 = arith.select %307, %1, %305 : vector<1x4x16x16xi1>, vector<1x4x16x16xf32>
    %c15_i32_73 = arith.constant 15 : i32
    %309 = tpu.dynamic_rotate %1 by %c15_i32_73 dim 2 : vector<1x4x16x16xf32>, i32 -> vector<1x4x16x16xf32>
    %310 = vector.shape_cast %52 : vector<16x16xi1> to vector<1x1x16x16xi1>
    %311 = vector.broadcast %310 : vector<1x1x16x16xi1> to vector<1x4x16x16xi1>
    %312 = arith.select %311, %1, %309 : vector<1x4x16x16xi1>, vector<1x4x16x16xf32>
    %313 = arith.minimumf %308, %312 : vector<1x4x16x16xf32>
    %314 = arith.minimumf %1, %313 : vector<1x4x16x16xf32>
    %c1_i32_74 = arith.constant 1 : i32
    %315 = tpu.dynamic_rotate %1 by %c1_i32_74 dim 3 : vector<1x4x16x16xf32>, i32 -> vector<1x4x16x16xf32>
    %316 = vector.shape_cast %54 : vector<16x16xi1> to vector<1x1x16x16xi1>
    %317 = vector.broadcast %316 : vector<1x1x16x16xi1> to vector<1x4x16x16xi1>
    %318 = arith.select %317, %1, %315 : vector<1x4x16x16xi1>, vector<1x4x16x16xf32>
    %c15_i32_75 = arith.constant 15 : i32
    %319 = tpu.dynamic_rotate %1 by %c15_i32_75 dim 3 : vector<1x4x16x16xf32>, i32 -> vector<1x4x16x16xf32>
    %320 = vector.shape_cast %56 : vector<16x16xi1> to vector<1x1x16x16xi1>
    %321 = vector.broadcast %320 : vector<1x1x16x16xi1> to vector<1x4x16x16xi1>
    %322 = arith.select %321, %1, %319 : vector<1x4x16x16xi1>, vector<1x4x16x16xf32>
    %323 = arith.minimumf %318, %322 : vector<1x4x16x16xf32>
    %324 = arith.minimumf %1, %323 : vector<1x4x16x16xf32>
    %325 = arith.minimumf %314, %324 : vector<1x4x16x16xf32>
    %c1_i32_76 = arith.constant 1 : i32
    %326 = tpu.dynamic_rotate %325 by %c1_i32_76 dim 2 : vector<1x4x16x16xf32>, i32 -> vector<1x4x16x16xf32>
    %327 = vector.shape_cast %50 : vector<16x16xi1> to vector<1x1x16x16xi1>
    %328 = vector.broadcast %327 : vector<1x1x16x16xi1> to vector<1x4x16x16xi1>
    %329 = arith.select %328, %325, %326 : vector<1x4x16x16xi1>, vector<1x4x16x16xf32>
    %c15_i32_77 = arith.constant 15 : i32
    %330 = tpu.dynamic_rotate %325 by %c15_i32_77 dim 2 : vector<1x4x16x16xf32>, i32 -> vector<1x4x16x16xf32>
    %331 = vector.shape_cast %52 : vector<16x16xi1> to vector<1x1x16x16xi1>
    %332 = vector.broadcast %331 : vector<1x1x16x16xi1> to vector<1x4x16x16xi1>
    %333 = arith.select %332, %325, %330 : vector<1x4x16x16xi1>, vector<1x4x16x16xf32>
    %334 = arith.maximumf %329, %333 : vector<1x4x16x16xf32>
    %335 = arith.maximumf %325, %334 : vector<1x4x16x16xf32>
    %c1_i32_78 = arith.constant 1 : i32
    %336 = tpu.dynamic_rotate %335 by %c1_i32_78 dim 3 : vector<1x4x16x16xf32>, i32 -> vector<1x4x16x16xf32>
    %337 = vector.shape_cast %54 : vector<16x16xi1> to vector<1x1x16x16xi1>
    %338 = vector.broadcast %337 : vector<1x1x16x16xi1> to vector<1x4x16x16xi1>
    %339 = arith.select %338, %335, %336 : vector<1x4x16x16xi1>, vector<1x4x16x16xf32>
    %c15_i32_79 = arith.constant 15 : i32
    %340 = tpu.dynamic_rotate %335 by %c15_i32_79 dim 3 : vector<1x4x16x16xf32>, i32 -> vector<1x4x16x16xf32>
    %341 = vector.shape_cast %56 : vector<16x16xi1> to vector<1x1x16x16xi1>
    %342 = vector.broadcast %341 : vector<1x1x16x16xi1> to vector<1x4x16x16xi1>
    %343 = arith.select %342, %335, %340 : vector<1x4x16x16xi1>, vector<1x4x16x16xf32>
    %344 = arith.maximumf %339, %343 : vector<1x4x16x16xf32>
    %345 = arith.maximumf %335, %344 : vector<1x4x16x16xf32>
    %346 = arith.subf %1, %345 : vector<1x4x16x16xf32>
    %cst_80 = arith.constant 0.000000e+00 : f32
    %347 = vector.broadcast %cst_80 : f32 to vector<1x4x16x16xf32>
    %348 = arith.maximumf %346, %347 : vector<1x4x16x16xf32>
    %c0_i32_81 = arith.constant 0 : i32
    %c1_i32_82 = arith.constant 1 : i32
    %349 = tpu.dynamic_rotate %1 by %c1_i32_82 dim 2 : vector<1x4x16x16xf32>, i32 -> vector<1x4x16x16xf32>
    %350 = vector.shape_cast %50 : vector<16x16xi1> to vector<1x1x16x16xi1>
    %351 = vector.broadcast %350 : vector<1x1x16x16xi1> to vector<1x4x16x16xi1>
    %352 = arith.select %351, %1, %349 : vector<1x4x16x16xi1>, vector<1x4x16x16xf32>
    %c15_i32_83 = arith.constant 15 : i32
    %353 = tpu.dynamic_rotate %1 by %c15_i32_83 dim 2 : vector<1x4x16x16xf32>, i32 -> vector<1x4x16x16xf32>
    %354 = vector.shape_cast %52 : vector<16x16xi1> to vector<1x1x16x16xi1>
    %355 = vector.broadcast %354 : vector<1x1x16x16xi1> to vector<1x4x16x16xi1>
    %356 = arith.select %355, %1, %353 : vector<1x4x16x16xi1>, vector<1x4x16x16xf32>
    %357 = arith.minimumf %352, %356 : vector<1x4x16x16xf32>
    %358 = arith.minimumf %1, %357 : vector<1x4x16x16xf32>
    %c1_i32_84 = arith.constant 1 : i32
    %359 = tpu.dynamic_rotate %1 by %c1_i32_84 dim 3 : vector<1x4x16x16xf32>, i32 -> vector<1x4x16x16xf32>
    %360 = vector.shape_cast %54 : vector<16x16xi1> to vector<1x1x16x16xi1>
    %361 = vector.broadcast %360 : vector<1x1x16x16xi1> to vector<1x4x16x16xi1>
    %362 = arith.select %361, %1, %359 : vector<1x4x16x16xi1>, vector<1x4x16x16xf32>
    %c15_i32_85 = arith.constant 15 : i32
    %363 = tpu.dynamic_rotate %1 by %c15_i32_85 dim 3 : vector<1x4x16x16xf32>, i32 -> vector<1x4x16x16xf32>
    %364 = vector.shape_cast %56 : vector<16x16xi1> to vector<1x1x16x16xi1>
    %365 = vector.broadcast %364 : vector<1x1x16x16xi1> to vector<1x4x16x16xi1>
    %366 = arith.select %365, %1, %363 : vector<1x4x16x16xi1>, vector<1x4x16x16xf32>
    %367 = arith.minimumf %362, %366 : vector<1x4x16x16xf32>
    %368 = arith.minimumf %1, %367 : vector<1x4x16x16xf32>
    %369 = arith.minimumf %358, %368 : vector<1x4x16x16xf32>
    %c1_i32_86 = arith.constant 1 : i32
    %370 = tpu.dynamic_rotate %369 by %c1_i32_86 dim 2 : vector<1x4x16x16xf32>, i32 -> vector<1x4x16x16xf32>
    %371 = vector.shape_cast %50 : vector<16x16xi1> to vector<1x1x16x16xi1>
    %372 = vector.broadcast %371 : vector<1x1x16x16xi1> to vector<1x4x16x16xi1>
    %373 = arith.select %372, %369, %370 : vector<1x4x16x16xi1>, vector<1x4x16x16xf32>
    %c15_i32_87 = arith.constant 15 : i32
    %374 = tpu.dynamic_rotate %369 by %c15_i32_87 dim 2 : vector<1x4x16x16xf32>, i32 -> vector<1x4x16x16xf32>
    %375 = vector.shape_cast %52 : vector<16x16xi1> to vector<1x1x16x16xi1>
    %376 = vector.broadcast %375 : vector<1x1x16x16xi1> to vector<1x4x16x16xi1>
    %377 = arith.select %376, %369, %374 : vector<1x4x16x16xi1>, vector<1x4x16x16xf32>
    %378 = arith.minimumf %373, %377 : vector<1x4x16x16xf32>
    %379 = arith.minimumf %369, %378 : vector<1x4x16x16xf32>
    %c1_i32_88 = arith.constant 1 : i32
    %380 = tpu.dynamic_rotate %369 by %c1_i32_88 dim 3 : vector<1x4x16x16xf32>, i32 -> vector<1x4x16x16xf32>
    %381 = vector.shape_cast %54 : vector<16x16xi1> to vector<1x1x16x16xi1>
    %382 = vector.broadcast %381 : vector<1x1x16x16xi1> to vector<1x4x16x16xi1>
    %383 = arith.select %382, %369, %380 : vector<1x4x16x16xi1>, vector<1x4x16x16xf32>
    %c15_i32_89 = arith.constant 15 : i32
    %384 = tpu.dynamic_rotate %369 by %c15_i32_89 dim 3 : vector<1x4x16x16xf32>, i32 -> vector<1x4x16x16xf32>
    %385 = vector.shape_cast %56 : vector<16x16xi1> to vector<1x1x16x16xi1>
    %386 = vector.broadcast %385 : vector<1x1x16x16xi1> to vector<1x4x16x16xi1>
    %387 = arith.select %386, %369, %384 : vector<1x4x16x16xi1>, vector<1x4x16x16xf32>
    %388 = arith.minimumf %383, %387 : vector<1x4x16x16xf32>
    %389 = arith.minimumf %369, %388 : vector<1x4x16x16xf32>
    %390 = arith.minimumf %379, %389 : vector<1x4x16x16xf32>
    %c1_i32_90 = arith.constant 1 : i32
    %391 = tpu.dynamic_rotate %390 by %c1_i32_90 dim 2 : vector<1x4x16x16xf32>, i32 -> vector<1x4x16x16xf32>
    %392 = vector.shape_cast %50 : vector<16x16xi1> to vector<1x1x16x16xi1>
    %393 = vector.broadcast %392 : vector<1x1x16x16xi1> to vector<1x4x16x16xi1>
    %394 = arith.select %393, %390, %391 : vector<1x4x16x16xi1>, vector<1x4x16x16xf32>
    %c15_i32_91 = arith.constant 15 : i32
    %395 = tpu.dynamic_rotate %390 by %c15_i32_91 dim 2 : vector<1x4x16x16xf32>, i32 -> vector<1x4x16x16xf32>
    %396 = vector.shape_cast %52 : vector<16x16xi1> to vector<1x1x16x16xi1>
    %397 = vector.broadcast %396 : vector<1x1x16x16xi1> to vector<1x4x16x16xi1>
    %398 = arith.select %397, %390, %395 : vector<1x4x16x16xi1>, vector<1x4x16x16xf32>
    %399 = arith.maximumf %394, %398 : vector<1x4x16x16xf32>
    %400 = arith.maximumf %390, %399 : vector<1x4x16x16xf32>
    %c1_i32_92 = arith.constant 1 : i32
    %401 = tpu.dynamic_rotate %400 by %c1_i32_92 dim 3 : vector<1x4x16x16xf32>, i32 -> vector<1x4x16x16xf32>
    %402 = vector.shape_cast %54 : vector<16x16xi1> to vector<1x1x16x16xi1>
    %403 = vector.broadcast %402 : vector<1x1x16x16xi1> to vector<1x4x16x16xi1>
    %404 = arith.select %403, %400, %401 : vector<1x4x16x16xi1>, vector<1x4x16x16xf32>
    %c15_i32_93 = arith.constant 15 : i32
    %405 = tpu.dynamic_rotate %400 by %c15_i32_93 dim 3 : vector<1x4x16x16xf32>, i32 -> vector<1x4x16x16xf32>
    %406 = vector.shape_cast %56 : vector<16x16xi1> to vector<1x1x16x16xi1>
    %407 = vector.broadcast %406 : vector<1x1x16x16xi1> to vector<1x4x16x16xi1>
    %408 = arith.select %407, %400, %405 : vector<1x4x16x16xi1>, vector<1x4x16x16xf32>
    %409 = arith.maximumf %404, %408 : vector<1x4x16x16xf32>
    %410 = arith.maximumf %400, %409 : vector<1x4x16x16xf32>
    %411 = arith.subf %369, %410 : vector<1x4x16x16xf32>
    %cst_94 = arith.constant 0.000000e+00 : f32
    %412 = vector.broadcast %cst_94 : f32 to vector<1x4x16x16xf32>
    %413 = arith.maximumf %411, %412 : vector<1x4x16x16xf32>
    %414 = arith.addf %348, %413 : vector<1x4x16x16xf32>
    %415 = arith.mulf %348, %413 : vector<1x4x16x16xf32>
    %416 = arith.subf %414, %415 : vector<1x4x16x16xf32>
    %c1_i32_95 = arith.constant 1 : i32
    %c1_i32_96 = arith.constant 1 : i32
    %417 = tpu.dynamic_rotate %369 by %c1_i32_96 dim 2 : vector<1x4x16x16xf32>, i32 -> vector<1x4x16x16xf32>
    %418 = vector.shape_cast %50 : vector<16x16xi1> to vector<1x1x16x16xi1>
    %419 = vector.broadcast %418 : vector<1x1x16x16xi1> to vector<1x4x16x16xi1>
    %420 = arith.select %419, %369, %417 : vector<1x4x16x16xi1>, vector<1x4x16x16xf32>
    %c15_i32_97 = arith.constant 15 : i32
    %421 = tpu.dynamic_rotate %369 by %c15_i32_97 dim 2 : vector<1x4x16x16xf32>, i32 -> vector<1x4x16x16xf32>
    %422 = vector.shape_cast %52 : vector<16x16xi1> to vector<1x1x16x16xi1>
    %423 = vector.broadcast %422 : vector<1x1x16x16xi1> to vector<1x4x16x16xi1>
    %424 = arith.select %423, %369, %421 : vector<1x4x16x16xi1>, vector<1x4x16x16xf32>
    %425 = arith.minimumf %420, %424 : vector<1x4x16x16xf32>
    %426 = arith.minimumf %369, %425 : vector<1x4x16x16xf32>
    %c1_i32_98 = arith.constant 1 : i32
    %427 = tpu.dynamic_rotate %369 by %c1_i32_98 dim 3 : vector<1x4x16x16xf32>, i32 -> vector<1x4x16x16xf32>
    %428 = vector.shape_cast %54 : vector<16x16xi1> to vector<1x1x16x16xi1>
    %429 = vector.broadcast %428 : vector<1x1x16x16xi1> to vector<1x4x16x16xi1>
    %430 = arith.select %429, %369, %427 : vector<1x4x16x16xi1>, vector<1x4x16x16xf32>
    %c15_i32_99 = arith.constant 15 : i32
    %431 = tpu.dynamic_rotate %369 by %c15_i32_99 dim 3 : vector<1x4x16x16xf32>, i32 -> vector<1x4x16x16xf32>
    %432 = vector.shape_cast %56 : vector<16x16xi1> to vector<1x1x16x16xi1>
    %433 = vector.broadcast %432 : vector<1x1x16x16xi1> to vector<1x4x16x16xi1>
    %434 = arith.select %433, %369, %431 : vector<1x4x16x16xi1>, vector<1x4x16x16xf32>
    %435 = arith.minimumf %430, %434 : vector<1x4x16x16xf32>
    %436 = arith.minimumf %369, %435 : vector<1x4x16x16xf32>
    %437 = arith.minimumf %426, %436 : vector<1x4x16x16xf32>
    %c1_i32_100 = arith.constant 1 : i32
    %438 = tpu.dynamic_rotate %437 by %c1_i32_100 dim 2 : vector<1x4x16x16xf32>, i32 -> vector<1x4x16x16xf32>
    %439 = vector.shape_cast %50 : vector<16x16xi1> to vector<1x1x16x16xi1>
    %440 = vector.broadcast %439 : vector<1x1x16x16xi1> to vector<1x4x16x16xi1>
    %441 = arith.select %440, %437, %438 : vector<1x4x16x16xi1>, vector<1x4x16x16xf32>
    %c15_i32_101 = arith.constant 15 : i32
    %442 = tpu.dynamic_rotate %437 by %c15_i32_101 dim 2 : vector<1x4x16x16xf32>, i32 -> vector<1x4x16x16xf32>
    %443 = vector.shape_cast %52 : vector<16x16xi1> to vector<1x1x16x16xi1>
    %444 = vector.broadcast %443 : vector<1x1x16x16xi1> to vector<1x4x16x16xi1>
    %445 = arith.select %444, %437, %442 : vector<1x4x16x16xi1>, vector<1x4x16x16xf32>
    %446 = arith.minimumf %441, %445 : vector<1x4x16x16xf32>
    %447 = arith.minimumf %437, %446 : vector<1x4x16x16xf32>
    %c1_i32_102 = arith.constant 1 : i32
    %448 = tpu.dynamic_rotate %437 by %c1_i32_102 dim 3 : vector<1x4x16x16xf32>, i32 -> vector<1x4x16x16xf32>
    %449 = vector.shape_cast %54 : vector<16x16xi1> to vector<1x1x16x16xi1>
    %450 = vector.broadcast %449 : vector<1x1x16x16xi1> to vector<1x4x16x16xi1>
    %451 = arith.select %450, %437, %448 : vector<1x4x16x16xi1>, vector<1x4x16x16xf32>
    %c15_i32_103 = arith.constant 15 : i32
    %452 = tpu.dynamic_rotate %437 by %c15_i32_103 dim 3 : vector<1x4x16x16xf32>, i32 -> vector<1x4x16x16xf32>
    %453 = vector.shape_cast %56 : vector<16x16xi1> to vector<1x1x16x16xi1>
    %454 = vector.broadcast %453 : vector<1x1x16x16xi1> to vector<1x4x16x16xi1>
    %455 = arith.select %454, %437, %452 : vector<1x4x16x16xi1>, vector<1x4x16x16xf32>
    %456 = arith.minimumf %451, %455 : vector<1x4x16x16xf32>
    %457 = arith.minimumf %437, %456 : vector<1x4x16x16xf32>
    %458 = arith.minimumf %447, %457 : vector<1x4x16x16xf32>
    %c1_i32_104 = arith.constant 1 : i32
    %459 = tpu.dynamic_rotate %458 by %c1_i32_104 dim 2 : vector<1x4x16x16xf32>, i32 -> vector<1x4x16x16xf32>
    %460 = vector.shape_cast %50 : vector<16x16xi1> to vector<1x1x16x16xi1>
    %461 = vector.broadcast %460 : vector<1x1x16x16xi1> to vector<1x4x16x16xi1>
    %462 = arith.select %461, %458, %459 : vector<1x4x16x16xi1>, vector<1x4x16x16xf32>
    %c15_i32_105 = arith.constant 15 : i32
    %463 = tpu.dynamic_rotate %458 by %c15_i32_105 dim 2 : vector<1x4x16x16xf32>, i32 -> vector<1x4x16x16xf32>
    %464 = vector.shape_cast %52 : vector<16x16xi1> to vector<1x1x16x16xi1>
    %465 = vector.broadcast %464 : vector<1x1x16x16xi1> to vector<1x4x16x16xi1>
    %466 = arith.select %465, %458, %463 : vector<1x4x16x16xi1>, vector<1x4x16x16xf32>
    %467 = arith.maximumf %462, %466 : vector<1x4x16x16xf32>
    %468 = arith.maximumf %458, %467 : vector<1x4x16x16xf32>
    %c1_i32_106 = arith.constant 1 : i32
    %469 = tpu.dynamic_rotate %468 by %c1_i32_106 dim 3 : vector<1x4x16x16xf32>, i32 -> vector<1x4x16x16xf32>
    %470 = vector.shape_cast %54 : vector<16x16xi1> to vector<1x1x16x16xi1>
    %471 = vector.broadcast %470 : vector<1x1x16x16xi1> to vector<1x4x16x16xi1>
    %472 = arith.select %471, %468, %469 : vector<1x4x16x16xi1>, vector<1x4x16x16xf32>
    %c15_i32_107 = arith.constant 15 : i32
    %473 = tpu.dynamic_rotate %468 by %c15_i32_107 dim 3 : vector<1x4x16x16xf32>, i32 -> vector<1x4x16x16xf32>
    %474 = vector.shape_cast %56 : vector<16x16xi1> to vector<1x1x16x16xi1>
    %475 = vector.broadcast %474 : vector<1x1x16x16xi1> to vector<1x4x16x16xi1>
    %476 = arith.select %475, %468, %473 : vector<1x4x16x16xi1>, vector<1x4x16x16xf32>
    %477 = arith.maximumf %472, %476 : vector<1x4x16x16xf32>
    %478 = arith.maximumf %468, %477 : vector<1x4x16x16xf32>
    %479 = arith.subf %437, %478 : vector<1x4x16x16xf32>
    %cst_108 = arith.constant 0.000000e+00 : f32
    %480 = vector.broadcast %cst_108 : f32 to vector<1x4x16x16xf32>
    %481 = arith.maximumf %479, %480 : vector<1x4x16x16xf32>
    %482 = arith.addf %416, %481 : vector<1x4x16x16xf32>
    %483 = arith.mulf %416, %481 : vector<1x4x16x16xf32>
    %484 = arith.subf %482, %483 : vector<1x4x16x16xf32>
    %c2_i32_109 = arith.constant 2 : i32
    %c1_i32_110 = arith.constant 1 : i32
    %485 = tpu.dynamic_rotate %437 by %c1_i32_110 dim 2 : vector<1x4x16x16xf32>, i32 -> vector<1x4x16x16xf32>
    %486 = vector.shape_cast %50 : vector<16x16xi1> to vector<1x1x16x16xi1>
    %487 = vector.broadcast %486 : vector<1x1x16x16xi1> to vector<1x4x16x16xi1>
    %488 = arith.select %487, %437, %485 : vector<1x4x16x16xi1>, vector<1x4x16x16xf32>
    %c15_i32_111 = arith.constant 15 : i32
    %489 = tpu.dynamic_rotate %437 by %c15_i32_111 dim 2 : vector<1x4x16x16xf32>, i32 -> vector<1x4x16x16xf32>
    %490 = vector.shape_cast %52 : vector<16x16xi1> to vector<1x1x16x16xi1>
    %491 = vector.broadcast %490 : vector<1x1x16x16xi1> to vector<1x4x16x16xi1>
    %492 = arith.select %491, %437, %489 : vector<1x4x16x16xi1>, vector<1x4x16x16xf32>
    %493 = arith.minimumf %488, %492 : vector<1x4x16x16xf32>
    %494 = arith.minimumf %437, %493 : vector<1x4x16x16xf32>
    %c1_i32_112 = arith.constant 1 : i32
    %495 = tpu.dynamic_rotate %437 by %c1_i32_112 dim 3 : vector<1x4x16x16xf32>, i32 -> vector<1x4x16x16xf32>
    %496 = vector.shape_cast %54 : vector<16x16xi1> to vector<1x1x16x16xi1>
    %497 = vector.broadcast %496 : vector<1x1x16x16xi1> to vector<1x4x16x16xi1>
    %498 = arith.select %497, %437, %495 : vector<1x4x16x16xi1>, vector<1x4x16x16xf32>
    %c15_i32_113 = arith.constant 15 : i32
    %499 = tpu.dynamic_rotate %437 by %c15_i32_113 dim 3 : vector<1x4x16x16xf32>, i32 -> vector<1x4x16x16xf32>
    %500 = vector.shape_cast %56 : vector<16x16xi1> to vector<1x1x16x16xi1>
    %501 = vector.broadcast %500 : vector<1x1x16x16xi1> to vector<1x4x16x16xi1>
    %502 = arith.select %501, %437, %499 : vector<1x4x16x16xi1>, vector<1x4x16x16xf32>
    %503 = arith.minimumf %498, %502 : vector<1x4x16x16xf32>
    %504 = arith.minimumf %437, %503 : vector<1x4x16x16xf32>
    %505 = arith.minimumf %494, %504 : vector<1x4x16x16xf32>
    %c1_i32_114 = arith.constant 1 : i32
    %506 = tpu.dynamic_rotate %505 by %c1_i32_114 dim 2 : vector<1x4x16x16xf32>, i32 -> vector<1x4x16x16xf32>
    %507 = vector.shape_cast %50 : vector<16x16xi1> to vector<1x1x16x16xi1>
    %508 = vector.broadcast %507 : vector<1x1x16x16xi1> to vector<1x4x16x16xi1>
    %509 = arith.select %508, %505, %506 : vector<1x4x16x16xi1>, vector<1x4x16x16xf32>
    %c15_i32_115 = arith.constant 15 : i32
    %510 = tpu.dynamic_rotate %505 by %c15_i32_115 dim 2 : vector<1x4x16x16xf32>, i32 -> vector<1x4x16x16xf32>
    %511 = vector.shape_cast %52 : vector<16x16xi1> to vector<1x1x16x16xi1>
    %512 = vector.broadcast %511 : vector<1x1x16x16xi1> to vector<1x4x16x16xi1>
    %513 = arith.select %512, %505, %510 : vector<1x4x16x16xi1>, vector<1x4x16x16xf32>
    %514 = arith.minimumf %509, %513 : vector<1x4x16x16xf32>
    %515 = arith.minimumf %505, %514 : vector<1x4x16x16xf32>
    %c1_i32_116 = arith.constant 1 : i32
    %516 = tpu.dynamic_rotate %505 by %c1_i32_116 dim 3 : vector<1x4x16x16xf32>, i32 -> vector<1x4x16x16xf32>
    %517 = vector.shape_cast %54 : vector<16x16xi1> to vector<1x1x16x16xi1>
    %518 = vector.broadcast %517 : vector<1x1x16x16xi1> to vector<1x4x16x16xi1>
    %519 = arith.select %518, %505, %516 : vector<1x4x16x16xi1>, vector<1x4x16x16xf32>
    %c15_i32_117 = arith.constant 15 : i32
    %520 = tpu.dynamic_rotate %505 by %c15_i32_117 dim 3 : vector<1x4x16x16xf32>, i32 -> vector<1x4x16x16xf32>
    %521 = vector.shape_cast %56 : vector<16x16xi1> to vector<1x1x16x16xi1>
    %522 = vector.broadcast %521 : vector<1x1x16x16xi1> to vector<1x4x16x16xi1>
    %523 = arith.select %522, %505, %520 : vector<1x4x16x16xi1>, vector<1x4x16x16xf32>
    %524 = arith.minimumf %519, %523 : vector<1x4x16x16xf32>
    %525 = arith.minimumf %505, %524 : vector<1x4x16x16xf32>
    %526 = arith.minimumf %515, %525 : vector<1x4x16x16xf32>
    %c1_i32_118 = arith.constant 1 : i32
    %527 = tpu.dynamic_rotate %526 by %c1_i32_118 dim 2 : vector<1x4x16x16xf32>, i32 -> vector<1x4x16x16xf32>
    %528 = vector.shape_cast %50 : vector<16x16xi1> to vector<1x1x16x16xi1>
    %529 = vector.broadcast %528 : vector<1x1x16x16xi1> to vector<1x4x16x16xi1>
    %530 = arith.select %529, %526, %527 : vector<1x4x16x16xi1>, vector<1x4x16x16xf32>
    %c15_i32_119 = arith.constant 15 : i32
    %531 = tpu.dynamic_rotate %526 by %c15_i32_119 dim 2 : vector<1x4x16x16xf32>, i32 -> vector<1x4x16x16xf32>
    %532 = vector.shape_cast %52 : vector<16x16xi1> to vector<1x1x16x16xi1>
    %533 = vector.broadcast %532 : vector<1x1x16x16xi1> to vector<1x4x16x16xi1>
    %534 = arith.select %533, %526, %531 : vector<1x4x16x16xi1>, vector<1x4x16x16xf32>
    %535 = arith.maximumf %530, %534 : vector<1x4x16x16xf32>
    %536 = arith.maximumf %526, %535 : vector<1x4x16x16xf32>
    %c1_i32_120 = arith.constant 1 : i32
    %537 = tpu.dynamic_rotate %536 by %c1_i32_120 dim 3 : vector<1x4x16x16xf32>, i32 -> vector<1x4x16x16xf32>
    %538 = vector.shape_cast %54 : vector<16x16xi1> to vector<1x1x16x16xi1>
    %539 = vector.broadcast %538 : vector<1x1x16x16xi1> to vector<1x4x16x16xi1>
    %540 = arith.select %539, %536, %537 : vector<1x4x16x16xi1>, vector<1x4x16x16xf32>
    %c15_i32_121 = arith.constant 15 : i32
    %541 = tpu.dynamic_rotate %536 by %c15_i32_121 dim 3 : vector<1x4x16x16xf32>, i32 -> vector<1x4x16x16xf32>
    %542 = vector.shape_cast %56 : vector<16x16xi1> to vector<1x1x16x16xi1>
    %543 = vector.broadcast %542 : vector<1x1x16x16xi1> to vector<1x4x16x16xi1>
    %544 = arith.select %543, %536, %541 : vector<1x4x16x16xi1>, vector<1x4x16x16xf32>
    %545 = arith.maximumf %540, %544 : vector<1x4x16x16xf32>
    %546 = arith.maximumf %536, %545 : vector<1x4x16x16xf32>
    %547 = arith.subf %505, %546 : vector<1x4x16x16xf32>
    %cst_122 = arith.constant 0.000000e+00 : f32
    %548 = vector.broadcast %cst_122 : f32 to vector<1x4x16x16xf32>
    %549 = arith.maximumf %547, %548 : vector<1x4x16x16xf32>
    %550 = arith.addf %484, %549 : vector<1x4x16x16xf32>
    %551 = arith.mulf %484, %549 : vector<1x4x16x16xf32>
    %552 = arith.subf %550, %551 : vector<1x4x16x16xf32>
    %553 = arith.mulf %304, %1 : vector<1x4x16x16xf32>
    %cst_123 = arith.constant dense<0.000000e+00> : vector<1x16x16xf32>
    %554 = vector.multi_reduction <add>, %553, %cst_123 [1] : vector<1x4x16x16xf32> to vector<1x16x16xf32>
    %cst_124 = arith.constant 1.000000e+00 : f32
    %555 = vector.broadcast %cst_124 : f32 to vector<1x16x16xf32>
    %556 = arith.addf %554, %555 : vector<1x16x16xf32>
    %cst_125 = arith.constant dense<0.000000e+00> : vector<1x16x16xf32>
    %557 = vector.multi_reduction <add>, %304, %cst_125 [1] : vector<1x4x16x16xf32> to vector<1x16x16xf32>
    %cst_126 = arith.constant 1.000000e+00 : f32
    %558 = vector.broadcast %cst_126 : f32 to vector<1x16x16xf32>
    %559 = arith.addf %557, %558 : vector<1x16x16xf32>
    %560 = tpu.reciprocal %559 {approx = true} : vector<1x16x16xf32> -> vector<1x16x16xf32>
    %561 = arith.mulf %556, %560 : vector<1x16x16xf32>
    %562 = arith.mulf %552, %25 : vector<1x4x16x16xf32>
    %cst_127 = arith.constant dense<0.000000e+00> : vector<1x16x16xf32>
    %563 = vector.multi_reduction <add>, %562, %cst_127 [1] : vector<1x4x16x16xf32> to vector<1x16x16xf32>
    %cst_128 = arith.constant 1.000000e+00 : f32
    %564 = vector.broadcast %cst_128 : f32 to vector<1x16x16xf32>
    %565 = arith.addf %563, %564 : vector<1x16x16xf32>
    %cst_129 = arith.constant dense<0.000000e+00> : vector<1x16x16xf32>
    %566 = vector.multi_reduction <add>, %552, %cst_129 [1] : vector<1x4x16x16xf32> to vector<1x16x16xf32>
    %cst_130 = arith.constant 1.000000e+00 : f32
    %567 = vector.broadcast %cst_130 : f32 to vector<1x16x16xf32>
    %568 = arith.addf %566, %567 : vector<1x16x16xf32>
    %569 = tpu.reciprocal %568 {approx = true} : vector<1x16x16xf32> -> vector<1x16x16xf32>
    %570 = arith.mulf %565, %569 : vector<1x16x16xf32>
    %571 = arith.mulf %561, %570 : vector<1x16x16xf32>
    %cst_131 = arith.constant 2.000000e+00 : f32
    %572 = vector.broadcast %cst_131 : f32 to vector<1x16x16xf32>
    %573 = arith.mulf %572, %571 : vector<1x16x16xf32>
    %574 = arith.addf %561, %570 : vector<1x16x16xf32>
    %575 = tpu.reciprocal %574 {approx = true} : vector<1x16x16xf32> -> vector<1x16x16xf32>
    %576 = arith.mulf %573, %575 : vector<1x16x16xf32>
    %cst_132 = arith.constant 1.000000e+00 : f32
    %577 = vector.broadcast %cst_132 : f32 to vector<1x16x16xf32>
    %578 = arith.subf %577, %576 : vector<1x16x16xf32>
    %579 = vector.shape_cast %578 : vector<1x16x16xf32> to vector<1x1x16x16xf32>
    %cst_133 = arith.constant dense<0.000000e+00> : vector<1xf32>
    %580 = vector.multi_reduction <add>, %579, %cst_133 [1, 2, 3] : vector<1x1x16x16xf32> to vector<1xf32>
    %581 = vector.shape_cast %580 : vector<1xf32> to vector<1x1x1x1xf32>
    %582 = vector.extract %581[0, 0, 0, 0] : f32 from vector<1x1x1x1xf32>
    %cst_134 = arith.constant 2.560000e+02 : f32
    %583 = arith.divf %582, %cst_134 : f32
    %cst_135 = arith.constant 5.000000e-01 : f32
    %584 = arith.mulf %cst_135, %17 : f32
    %cst_136 = arith.constant 2.048000e+03 : f32
    %585 = arith.divf %584, %cst_136 : f32
    %cst_137 = arith.constant 5.000000e-01 : f32
    %586 = arith.mulf %cst_137, %46 : f32
    %cst_138 = arith.constant 5.000000e-01 : f32
    %587 = arith.mulf %cst_138, %583 : f32
    %588 = arith.addf %586, %587 : f32
    %cst_139 = arith.constant 5.000000e-01 : f32
    %589 = arith.mulf %cst_139, %588 : f32
    %cst_140 = arith.constant 2.000000e+00 : f32
    %590 = arith.divf %589, %cst_140 : f32
    %591 = arith.addf %585, %590 : f32
    %592 = vector.broadcast %591 : f32 to vector<1x8x128xf32>
    %c0_141 = arith.constant 0 : index
    %c0_142 = arith.constant 0 : index
    %c0_143 = arith.constant 0 : index
    %593 = vector.load %arg3[%c0_141, %c0_142, %c0_143] : memref<1x8x128xf32, #tpu.memory_space<vmem>>, vector<1x8x128xf32>
    tpu.vector_store %arg3[%c0_141, %c0_142, %c0_143], %592 {strides = array<i32>} : memref<1x8x128xf32, #tpu.memory_space<vmem>>, vector<1x8x128xf32>,
    return
  }
  func.func @transform_0(%arg0: i32) -> (i32, i32, i32, i32) {
    %c0_i32 = arith.constant 0 : i32
    %c0_i32_0 = arith.constant 0 : i32
    %c0_i32_1 = arith.constant 0 : i32
    %c0_i32_2 = arith.constant 0 : i32
    return %arg0, %c0_i32, %c0_i32_0, %c0_i32_1 : i32, i32, i32, i32
  }
  func.func @transform_1(%arg0: i32) -> (i32, i32, i32, i32) {
    %c0_i32 = arith.constant 0 : i32
    %c0_i32_0 = arith.constant 0 : i32
    %c0_i32_1 = arith.constant 0 : i32
    %c0_i32_2 = arith.constant 0 : i32
    return %arg0, %c0_i32, %c0_i32_0, %c0_i32_1 : i32, i32, i32, i32
  }
  func.func @transform_2(%arg0: i32) -> (i32, i32, i32) {
    %c0_i32 = arith.constant 0 : i32
    %c0_i32_0 = arith.constant 0 : i32
    %c0_i32_1 = arith.constant 0 : i32
    return %arg0, %c0_i32, %c0_i32_0 : i32, i32, i32
  }
}

</mosaic_0001>

<llo_original>
// kernel: tpu_custom_call.1
$region0: #{tpu_custom_call.1}
  #allocation0 [shape = 'u32[]', space=smem, size = 0x4, offset = 0x4, fixed_abs, tag = 'smem constant byte address 0x4 - core index']
  #allocation1 [shape = 'u32[72,128]{1,0:T(1,128)}', space=vmem, size = 0x9000, scoped, tag = 'internal scratch']
  %s0 = inlined_call_operand.hbm [shape: f32[2,4,16,16], index: 0, kind: input, shape index: {}]
  %s1 = inlined_call_operand.hbm [shape: f32[2,4,16,16], index: 1, kind: input, shape index: {}]
  %s2 = inlined_call_operand.hbm [shape: f32[2,8,128], index: 2, kind: output, shape index: {}]
  %s3 = sld [smem:[#allocation0]]
  $region49: #{tpu_custom_call.1} parent=0
    _
  %s5 = ssub.s32 1, %s3
  %s6 = scalar_select 0, %s5, %s3
  $region1: #{tpu_custom_call.1} parent=0
    #allocation2 [shape = 'u8[65536]{0}', space=vmem, size = 0x10000, scoped, tag = 'input window, operand 0']
    #allocation3 [shape = 's32[2]{0}', space=sflag, size = 0x8, scoped, tag = 'scoped memory for tpu_custom_call.1']
    #allocation4 [shape = 's32[2]{0}', space=sflag, size = 0x8, scoped, tag = 'scoped memory for tpu_custom_call.1']
    #allocation5 [shape = 'u8[65536]{0}', space=vmem, size = 0x10000, scoped, tag = 'input window, operand 1']
    #allocation6 [shape = 's32[2]{0}', space=sflag, size = 0x8, scoped, tag = 'scoped memory for tpu_custom_call.1']
    #allocation7 [shape = 'u8[8192]{0}', space=vmem, size = 0x2000, scoped, tag = 'output window, operand 0']
    %7 = vsyncpa [#allocation3], 0
    %s8 = scalar_lea.sflag [#allocation3], 1
    %9 = vsyncpa %s8, 0
    %10 = vsyncpa [#allocation6], 0
    %s11 = scalar_lea.sflag [#allocation6], 1
    %12 = vsyncpa %s11, 0
    %13 = vsyncpa [#allocation4], 0
    %s14 = scalar_lea.sflag [#allocation4], 1
    %15 = vsyncpa %s14, 0
    loop: start=0, step=1, limit=4
    $region2: #{tpu_custom_call.1} parent=1 // loop_pre_header
      _
    $region3: #{tpu_custom_call.1} parent=1 // loop_header
      %s17 = sphi 0, %s21
      %p18 = scmp.ge.s32.totalorder %s17, 4
      %s27 = sphi 0, %s29
      %s30 = sphi 0, %s27
      %s31 = sphi 0, %s30
      %s47 = sphi 0, %s31
      %s53 = sphi 0, %s55
      %s56 = sphi 0, %s53
      %s57 = sphi 0, %s56
      %s73 = sphi 0, %s57
      %s79 = sphi 0, %s81
      %s82 = sphi 0, %s79
      %s83 = sphi 0, %s82
      %s99 = sphi 0, %s83
    $region4: #{tpu_custom_call.1} parent=1 // loop_header_branch
      %20 = sbr.rel (%p18) target = $region8
    $region5: #{tpu_custom_call.1} parent=1 // loop_body
      %s22 = ssub.s32 %s17, 1
      %s23 = ssub.s32 %s17, 2
      %s24 = sadd.s32 %s17, 1
      %s25 = ssub.s32 %s17, %s24
      %p26 = scmp.eq.s32.totalorder %s25, 0
      %s28 = sadd.s32 %s27, 1
      %s29 = scalar_select %p26, %s27, %s28
      %p32 = pneg %p26
      %p33 = scmp.eq.s32.totalorder %s17, 1
      %p34 = por %p32, %p33
      %p35 = scmp.ne.s32.totalorder %s27, %s30
      %p36 = scmp.eq.s32.totalorder %s17, 0
      %p37 = por %p35, %p36
      %p38 = scmp.ne.s32.totalorder %s27, %s30
      %p39 = scmp.eq.s32.totalorder %s22, 1
      %p40 = por %p38, %p39
      %p41 = scmp.ne.s32.totalorder %s30, %s31
      %p42 = scmp.eq.s32.totalorder %s22, 0
      %p43 = por %p41, %p42
      %p44 = scmp.ne.s32.totalorder %s30, %s31
      %p45 = scmp.eq.s32.totalorder %s23, 1
      %p46 = por %p44, %p45
      %p48 = scmp.ne.s32.totalorder %s31, %s47
      %p49 = scmp.eq.s32.totalorder %s23, 0
      %p50 = por %p48, %p49
      %s51 = ssub.s32 %s17, %s24
      %p52 = scmp.eq.s32.totalorder %s51, 0
      %s54 = sadd.s32 %s53, 1
      %s55 = scalar_select %p52, %s53, %s54
      %p58 = pneg %p52
      %p59 = scmp.eq.s32.totalorder %s17, 1
      %p60 = por %p58, %p59
      %p61 = scmp.ne.s32.totalorder %s53, %s56
      %p62 = scmp.eq.s32.totalorder %s17, 0
      %p63 = por %p61, %p62
      %p64 = scmp.ne.s32.totalorder %s53, %s56
      %p65 = scmp.eq.s32.totalorder %s22, 1
      %p66 = por %p64, %p65
      %p67 = scmp.ne.s32.totalorder %s56, %s57
      %p68 = scmp.eq.s32.totalorder %s22, 0
      %p69 = por %p67, %p68
      %p70 = scmp.ne.s32.totalorder %s56, %s57
      %p71 = scmp.eq.s32.totalorder %s23, 1
      %p72 = por %p70, %p71
      %p74 = scmp.ne.s32.totalorder %s57, %s73
      %p75 = scmp.eq.s32.totalorder %s23, 0
      %p76 = por %p74, %p75
      %s77 = ssub.s32 %s17, %s24
      %p78 = scmp.eq.s32.totalorder %s77, 0
      %s80 = sadd.s32 %s79, 1
      %s81 = scalar_select %p78, %s79, %s80
      %p84 = pneg %p78
      %p85 = scmp.eq.s32.totalorder %s17, 1
      %p86 = por %p84, %p85
      %p87 = scmp.ne.s32.totalorder %s79, %s82
      %p88 = scmp.eq.s32.totalorder %s17, 0
      %p89 = por %p87, %p88
      %p90 = scmp.ne.s32.totalorder %s79, %s82
      %p91 = scmp.eq.s32.totalorder %s22, 1
      %p92 = por %p90, %p91
      %p93 = scmp.ne.s32.totalorder %s82, %s83
      %p94 = scmp.eq.s32.totalorder %s22, 0
      %p95 = por %p93, %p94
      %p96 = scmp.ne.s32.totalorder %s82, %s83
      %p97 = scmp.eq.s32.totalorder %s23, 1
      %p98 = por %p96, %p97
      %p100 = scmp.ne.s32.totalorder %s83, %s99
      %p101 = scmp.eq.s32.totalorder %s23, 0
      %p102 = por %p100, %p101
      %p103 = scmp.le.s32.totalorder 1, %s17
      %p104 = scmp.lt.s32.totalorder %s17, 3
      %p105 = pnand %p103, %p104
      %p106 = pneg %p105
      // Predicated region
      $region9: #{tpu_custom_call.1} parent=5 // pred_check
        _
      $region10: #{tpu_custom_call.1} parent=5 // pred_check_branch
        %108 = sbr.rel (%p105) target = $region12
      $region11: #{tpu_custom_call.1} parent=5 // pred_region
        %s109 = ssub.s32 %s17, 1
      $region12: #{tpu_custom_call.1} parent=5 // pred_fallthru
        _
      %p110 = scmp.lt.s32.totalorder %s17, 2
      // Predicated region
      $region13: #{tpu_custom_call.1} parent=5 // pred_check
        %p111 = pneg %p110
      $region14: #{tpu_custom_call.1} parent=5 // pred_check_branch
        %113 = sbr.rel (%p111) target = $region16
      $region15: #{tpu_custom_call.1} parent=5 // pred_region
        // Predicated region
        $region17: #{tpu_custom_call.1} parent=15 // pred_check
          %p114 = pneg %p37
        $region18: #{tpu_custom_call.1} parent=15 // pred_check_branch
          %116 = sbr.rel (%p114) target = $region20
        $region19: #{tpu_custom_call.1} parent=15 // pred_region
          %s117 = sand.u32 %s27, 1
          %s118 = scalar_lea.sflag [#allocation3], %s117
          %s119 = sand.u32 %s27, 1
          %s120 = smul.addr %s119, 64
          %s121 = scalar_lea.vmem [#allocation2], %s120
          %123 = vsyncadd %s118, 0
          %s124 = smul.addr %s17, 8
          %s125 = smul.addr %s124, 8
          %s126 = scalar_lea.hbm %s0, %s125
          %s127 = sshll.u32 %s126, 4
          %s128 = int_to_ptr.hbm [resolvable:$true] %s127
          %s129 = sshll.u32 %s121, 4
          %s130 = int_to_ptr.vmem [resolvable:$true] %s129
          %135 = dma.hbm_to_vmem [thread:$0]  %s128, 1024, %s130, %s118, 128, 128, 8
        $region20: #{tpu_custom_call.1} parent=15 // pred_fallthru
          _
        // Predicated region
        $region21: #{tpu_custom_call.1} parent=15 // pred_check
          %p136 = pneg %p63
        $region22: #{tpu_custom_call.1} parent=15 // pred_check_branch
          %138 = sbr.rel (%p136) target = $region24
        $region23: #{tpu_custom_call.1} parent=15 // pred_region
          %s139 = sand.u32 %s53, 1
          %s140 = scalar_lea.sflag [#allocation6], %s139
          %s141 = sand.u32 %s53, 1
          %s142 = smul.addr %s141, 64
          %s143 = scalar_lea.vmem [#allocation5], %s142
          %145 = vsyncadd %s140, 0
          %s146 = smul.addr %s17, 8
          %s147 = smul.addr %s146, 8
          %s148 = scalar_lea.hbm %s1, %s147
          %s149 = sshll.u32 %s148, 4
          %s150 = int_to_ptr.hbm [resolvable:$true] %s149
          %s151 = sshll.u32 %s143, 4
          %s152 = int_to_ptr.vmem [resolvable:$true] %s151
          %157 = dma.hbm_to_vmem [thread:$0]  %s150, 1024, %s152, %s140, 128, 128, 8
        $region24: #{tpu_custom_call.1} parent=15 // pred_fallthru
          _
      $region16: #{tpu_custom_call.1} parent=5 // pred_fallthru
        _
      %p158 = scmp.le.s32.totalorder 1, %s17
      %p159 = scmp.lt.s32.totalorder %s17, 3
      %p160 = pnand %p158, %p159
      %p161 = pneg %p160
      // Predicated region
      $region25: #{tpu_custom_call.1} parent=5 // pred_check
        _
      $region26: #{tpu_custom_call.1} parent=5 // pred_check_branch
        %163 = sbr.rel (%p160) target = $region28
      $region27: #{tpu_custom_call.1} parent=5 // pred_region
        %s164 = ssub.s32 %s17, 1
        %s165 = sand.u32 %s30, 1
        %s166 = scalar_lea.sflag [#allocation3], %s165
        %s167 = sand.u32 %s30, 1
        %s168 = smul.addr %s167, 64
        %s169 = scalar_lea.vmem [#allocation2], %s168
        // Predicated region
        $region29: #{tpu_custom_call.1} parent=27 // pred_check
          %p170 = pneg %p43
        $region30: #{tpu_custom_call.1} parent=27 // pred_check_branch
          %172 = sbr.rel (%p170) target = $region32
        $region31: #{tpu_custom_call.1} parent=27 // pred_region
          %174 = dma.done %s166, 1024
        $region32: #{tpu_custom_call.1} parent=27 // pred_fallthru
          _
        %s175 = sand.u32 %s56, 1
        %s176 = scalar_lea.sflag [#allocation6], %s175
        %s177 = sand.u32 %s56, 1
        %s178 = smul.addr %s177, 64
        %s179 = scalar_lea.vmem [#allocation5], %s178
        // Predicated region
        $region33: #{tpu_custom_call.1} parent=27 // pred_check
          %p180 = pneg %p69
        $region34: #{tpu_custom_call.1} parent=27 // pred_check_branch
          %182 = sbr.rel (%p180) target = $region36
        $region35: #{tpu_custom_call.1} parent=27 // pred_region
          %184 = dma.done %s176, 1024
        $region36: #{tpu_custom_call.1} parent=27 // pred_fallthru
          _
        %s185 = sand.u32 %s30, 1
        %s186 = scalar_lea.sflag [#allocation3], %s185
        %s187 = sand.u32 %s30, 1
        %s188 = smul.addr %s187, 64
        %s189 = scalar_lea.vmem [#allocation2], %s188
        %p190 = pneg %p43
        %p191 = pneg %p40
        %s192 = sand.u32 %s56, 1
        %s193 = scalar_lea.sflag [#allocation6], %s192
        %s194 = sand.u32 %s56, 1
        %s195 = smul.addr %s194, 64
        %s196 = scalar_lea.vmem [#allocation5], %s195
        %p197 = pneg %p69
        %p198 = pneg %p66
        %p199 = pneg %p95
        %p200 = pneg %p92
        %s201 = sand.u32 %s82, 1
        %s202 = scalar_lea.sflag [#allocation4], %s201
        %s203 = sand.u32 %s82, 1
        %s204 = smul.addr %s203, 8
        %s205 = scalar_lea.vmem [#allocation7], %s204
        %v206 = vld [vmem:[%s169] sm:$0xff]
        %v207 = vld [vmem:[%s169 + $0x8] sm:$0xff]
        %v208 = vld [vmem:[%s169 + $0x10] sm:$0xff]
        %v209 = vld [vmem:[%s169 + $0x18] sm:$0xff]
        %v210 = vld [vmem:[%s169 + $0x20] sm:$0xff]
        %v211 = vld [vmem:[%s169 + $0x28] sm:$0xff]
        %v212 = vld [vmem:[%s169 + $0x30] sm:$0xff]
        %v213 = vld [vmem:[%s169 + $0x38] sm:$0xff]
        %v214 = vld [vmem:[%s179] sm:$0xff]
        %v215 = vld [vmem:[%s179 + $0x8] sm:$0xff]
        %v216 = vld [vmem:[%s179 + $0x10] sm:$0xff]
        %v217 = vld [vmem:[%s179 + $0x18] sm:$0xff]
        %v218 = vld [vmem:[%s179 + $0x20] sm:$0xff]
        %v219 = vld [vmem:[%s179 + $0x28] sm:$0xff]
        %v220 = vld [vmem:[%s179 + $0x30] sm:$0xff]
        %v221 = vld [vmem:[%s179 + $0x38] sm:$0xff]
        %v222 = vand.u32 2147483647, %v206
        %v223 = vand.u32 2147483647, %v207
        %v224 = vand.u32 2147483647, %v208
        %v225 = vand.u32 2147483647, %v209
        %v226 = vand.u32 2147483647, %v210
        %v227 = vand.u32 2147483647, %v211
        %v228 = vand.u32 2147483647, %v212
        %v229 = vand.u32 2147483647, %v213
        %v230 = vsub.f32 0.0, %v222
        %v231 = vsub.f32 0.0, %v223
        %v232 = vsub.f32 0.0, %v224
        %v233 = vsub.f32 0.0, %v225
        %v234 = vsub.f32 0.0, %v226
        %v235 = vsub.f32 0.0, %v227
        %v236 = vsub.f32 0.0, %v228
        %v237 = vsub.f32 0.0, %v229
        %v238 = vmul.f32 %v230, 1.442695
        %v239 = vpow.pop %v238
        %v240 = vmul.f32 %v231, 1.442695
        %v241 = vpow.pop %v240
        %v242 = vmul.f32 %v232, 1.442695
        %v243 = vpow.pop %v242
        %v244 = vmul.f32 %v233, 1.442695
        %v245 = vpow.pop %v244
        %v246 = vmul.f32 %v234, 1.442695
        %v247 = vpow.pop %v246
        %v248 = vmul.f32 %v235, 1.442695
        %v249 = vpow.pop %v248
        %v250 = vmul.f32 %v236, 1.442695
        %v251 = vpow.pop %v250
        %v252 = vmul.f32 %v237, 1.442695
        %v253 = vpow.pop %v252
        %v254 = vmax.f32 %v206, 0.0
        %v255 = vmax.f32 %v207, 0.0
        %v256 = vmax.f32 %v208, 0.0
        %v257 = vmax.f32 %v209, 0.0
        %v258 = vmax.f32 %v210, 0.0
        %v259 = vmax.f32 %v211, 0.0
        %v260 = vmax.f32 %v212, 0.0
        %v261 = vmax.f32 %v213, 0.0
        %v262 = vmul.f32 %v206, %v214
        %v263 = vmul.f32 %v207, %v215
        %v264 = vmul.f32 %v208, %v216
        %v265 = vmul.f32 %v209, %v217
        %v266 = vmul.f32 %v210, %v218
        %v267 = vmul.f32 %v211, %v219
        %v268 = vmul.f32 %v212, %v220
        %v269 = vmul.f32 %v213, %v221
        %v270 = vsub.f32 %v254, %v262
        %v271 = vsub.f32 %v255, %v263
        %v272 = vsub.f32 %v256, %v264
        %v273 = vsub.f32 %v257, %v265
        %v274 = vsub.f32 %v258, %v266
        %v275 = vsub.f32 %v259, %v267
        %v276 = vsub.f32 %v260, %v268
        %v277 = vsub.f32 %v261, %v269
        %v278 = vadd.f32 %v239, 1.0
        %v279 = vadd.f32 %v241, 1.0
        %v280 = vadd.f32 %v243, 1.0
        %v281 = vadd.f32 %v245, 1.0
        %v282 = vadd.f32 %v247, 1.0
        %v283 = vadd.f32 %v249, 1.0
        %v284 = vadd.f32 %v251, 1.0
        %v285 = vadd.f32 %v253, 1.0
        %v286 = vlog2.pop %v278
        %v287 = vmul.f32 %v286, 0.6931472
        %v288 = vlog2.pop %v279
        %v289 = vmul.f32 %v288, 0.6931472
        %v290 = vlog2.pop %v280
        %v291 = vmul.f32 %v290, 0.6931472
        %v292 = vlog2.pop %v281
        %v293 = vmul.f32 %v292, 0.6931472
        %v294 = vlog2.pop %v282
        %v295 = vmul.f32 %v294, 0.6931472
        %v296 = vlog2.pop %v283
        %v297 = vmul.f32 %v296, 0.6931472
        %v298 = vlog2.pop %v284
        %v299 = vmul.f32 %v298, 0.6931472
        %v300 = vlog2.pop %v285
        %v301 = vmul.f32 %v300, 0.6931472
        %v302 = vadd.f32 %v270, %v287
        %v303 = vadd.f32 %v271, %v289
        %v304 = vadd.f32 %v272, %v291
        %v305 = vadd.f32 %v273, %v293
        %v306 = vadd.f32 %v274, %v295
        %v307 = vadd.f32 %v275, %v297
        %v308 = vadd.f32 %v276, %v299
        %v309 = vadd.f32 %v277, %v301
        %vm310 = vcmask 130048
        %v311 = vsel %vm310, %v302, 0.0
        %v312 = vsel %vm310, %v303, 0.0
        %v313 = vadd.f32 %v311, %v312
        %v314 = vsel %vm310, %v304, 0.0
        %v315 = vadd.f32 %v313, %v314
        %v316 = vsel %vm310, %v305, 0.0
        %v317 = vadd.f32 %v315, %v316
        %v318 = vsel %vm310, %v306, 0.0
        %v319 = vadd.f32 %v317, %v318
        %v320 = vsel %vm310, %v307, 0.0
        %v321 = vadd.f32 %v319, %v320
        %v322 = vsel %vm310, %v308, 0.0
        %v323 = vadd.f32 %v321, %v322
        %v324 = vsel %vm310, %v309, 0.0
        %v325 = vadd.f32 %v323, %v324
        %326 = vadd.xlane.f32.xlu0 %v325
        %v327 = vpop.xlane.xlu0 %326
        %v328 = vrot.slane %v327, 4
        %v329 = vadd.f32 %v327, %v328
        %v330 = vrot.slane %v329, 2
        %v331 = vadd.f32 %v329, %v330
        %v332 = vrot.slane %v331, 1
        %v333 = vadd.f32 %v331, %v332
        %s334 = vtos %v333
        %v335 = vrcp.pop %v278
        %v336 = vmul.f32 %v278, %v335
        %v337 = vsub.f32 1.0, %v336
        %v338 = vmul.f32 %v335, %v337
        %v339 = vadd.f32 %v335, %v338
        %vm340 = vweird.f32 %v278
        %vm341 = vweird.f32 %v335
        %vm342 = vmor %vm340, %vm341
        %v343 = vsel %vm342, %v335, %v339
        %v344 = vand.u32 2147483647, %v278
        %vm345 = vcmp.eq.f32.partialorder %v344, 8.507059e+37
        %v346 = vand.u32 %v278, 2147483648
        %v347 = vor.u32 1.1754944e-38, %v346
        %v348 = vsel %vm345, %v347, %v343
        %v349 = vmul.f32 1.0, %v348
        %v350 = vrcp.pop %v279
        %v351 = vmul.f32 %v279, %v350
        %v352 = vsub.f32 1.0, %v351
        %v353 = vmul.f32 %v350, %v352
        %v354 = vadd.f32 %v350, %v353
        %vm355 = vweird.f32 %v279
        %vm356 = vweird.f32 %v350
        %vm357 = vmor %vm355, %vm356
        %v358 = vsel %vm357, %v350, %v354
        %v359 = vand.u32 2147483647, %v279
        %vm360 = vcmp.eq.f32.partialorder %v359, 8.507059e+37
        %v361 = vand.u32 %v279, 2147483648
        %v362 = vor.u32 1.1754944e-38, %v361
        %v363 = vsel %vm360, %v362, %v358
        %v364 = vmul.f32 1.0, %v363
        %v365 = vrcp.pop %v280
        %v366 = vmul.f32 %v280, %v365
        %v367 = vsub.f32 1.0, %v366
        %v368 = vmul.f32 %v365, %v367
        %v369 = vadd.f32 %v365, %v368
        %vm370 = vweird.f32 %v280
        %vm371 = vweird.f32 %v365
        %vm372 = vmor %vm370, %vm371
        %v373 = vsel %vm372, %v365, %v369
        %v374 = vand.u32 2147483647, %v280
        %vm375 = vcmp.eq.f32.partialorder %v374, 8.507059e+37
        %v376 = vand.u32 %v280, 2147483648
        %v377 = vor.u32 1.1754944e-38, %v376
        %v378 = vsel %vm375, %v377, %v373
        %v379 = vmul.f32 1.0, %v378
        %v380 = vrcp.pop %v281
        %v381 = vmul.f32 %v281, %v380
        %v382 = vsub.f32 1.0, %v381
        %v383 = vmul.f32 %v380, %v382
        %v384 = vadd.f32 %v380, %v383
        %vm385 = vweird.f32 %v281
        %vm386 = vweird.f32 %v380
        %vm387 = vmor %vm385, %vm386
        %v388 = vsel %vm387, %v380, %v384
        %v389 = vand.u32 2147483647, %v281
        %vm390 = vcmp.eq.f32.partialorder %v389, 8.507059e+37
        %v391 = vand.u32 %v281, 2147483648
        %v392 = vor.u32 1.1754944e-38, %v391
        %v393 = vsel %vm390, %v392, %v388
        %v394 = vmul.f32 1.0, %v393
        %v395 = vrcp.pop %v282
        %v396 = vmul.f32 %v282, %v395
        %v397 = vsub.f32 1.0, %v396
        %v398 = vmul.f32 %v395, %v397
        %v399 = vadd.f32 %v395, %v398
        %vm400 = vweird.f32 %v282
        %vm401 = vweird.f32 %v395
        %vm402 = vmor %vm400, %vm401
        %v403 = vsel %vm402, %v395, %v399
        %v404 = vand.u32 2147483647, %v282
        %vm405 = vcmp.eq.f32.partialorder %v404, 8.507059e+37
        %v406 = vand.u32 %v282, 2147483648
        %v407 = vor.u32 1.1754944e-38, %v406
        %v408 = vsel %vm405, %v407, %v403
        %v409 = vmul.f32 1.0, %v408
        %v410 = vrcp.pop %v283
        %v411 = vmul.f32 %v283, %v410
        %v412 = vsub.f32 1.0, %v411
        %v413 = vmul.f32 %v410, %v412
        %v414 = vadd.f32 %v410, %v413
        %vm415 = vweird.f32 %v283
        %vm416 = vweird.f32 %v410
        %vm417 = vmor %vm415, %vm416
        %v418 = vsel %vm417, %v410, %v414
        %v419 = vand.u32 2147483647, %v283
        %vm420 = vcmp.eq.f32.partialorder %v419, 8.507059e+37
        %v421 = vand.u32 %v283, 2147483648
        %v422 = vor.u32 1.1754944e-38, %v421
        %v423 = vsel %vm420, %v422, %v418
        %v424 = vmul.f32 1.0, %v423
        %v425 = vrcp.pop %v284
        %v426 = vmul.f32 %v284, %v425
        %v427 = vsub.f32 1.0, %v426
        %v428 = vmul.f32 %v425, %v427
        %v429 = vadd.f32 %v425, %v428
        %vm430 = vweird.f32 %v284
        %vm431 = vweird.f32 %v425
        %vm432 = vmor %vm430, %vm431
        %v433 = vsel %vm432, %v425, %v429
        %v434 = vand.u32 2147483647, %v284
        %vm435 = vcmp.eq.f32.partialorder %v434, 8.507059e+37
        %v436 = vand.u32 %v284, 2147483648
        %v437 = vor.u32 1.1754944e-38, %v436
        %v438 = vsel %vm435, %v437, %v433
        %v439 = vmul.f32 1.0, %v438
        %v440 = vrcp.pop %v285
        %v441 = vmul.f32 %v285, %v440
        %v442 = vsub.f32 1.0, %v441
        %v443 = vmul.f32 %v440, %v442
        %v444 = vadd.f32 %v440, %v443
        %vm445 = vweird.f32 %v285
        %vm446 = vweird.f32 %v440
        %vm447 = vmor %vm445, %vm446
        %v448 = vsel %vm447, %v440, %v444
        %v449 = vand.u32 2147483647, %v285
        %vm450 = vcmp.eq.f32.partialorder %v449, 8.507059e+37
        %v451 = vand.u32 %v285, 2147483648
        %v452 = vor.u32 1.1754944e-38, %v451
        %v453 = vsel %vm450, %v452, %v448
        %v454 = vmul.f32 1.0, %v453
        %vm455 = vcmp.ge.f32.partialorder %v206, 0.0
        %vm456 = vcmp.ge.f32.partialorder %v207, 0.0
        %vm457 = vcmp.ge.f32.partialorder %v208, 0.0
        %vm458 = vcmp.ge.f32.partialorder %v209, 0.0
        %vm459 = vcmp.ge.f32.partialorder %v210, 0.0
        %vm460 = vcmp.ge.f32.partialorder %v211, 0.0
        %vm461 = vcmp.ge.f32.partialorder %v212, 0.0
        %vm462 = vcmp.ge.f32.partialorder %v213, 0.0
        %v463 = vmul.f32 %v239, %v349
        %v464 = vmul.f32 %v241, %v364
        %v465 = vmul.f32 %v243, %v379
        %v466 = vmul.f32 %v245, %v394
        %v467 = vmul.f32 %v247, %v409
        %v468 = vmul.f32 %v249, %v424
        %v469 = vmul.f32 %v251, %v439
        %v470 = vmul.f32 %v253, %v454
        %v471 = vsel %vm455, %v349, %v463
        %v472 = vsel %vm456, %v364, %v464
        %v473 = vsel %vm457, %v379, %v465
        %v474 = vsel %vm458, %v394, %v466
        %v475 = vsel %vm459, %v409, %v467
        %v476 = vsel %vm460, %v424, %v468
        %v477 = vsel %vm461, %v439, %v469
        %v478 = vsel %vm462, %v454, %v470
        %v479 = vmul.f32 %v471, %v214
        %v480 = vmul.f32 %v472, %v215
        %v481 = vmul.f32 %v473, %v216
        %v482 = vmul.f32 %v474, %v217
        %v483 = vmul.f32 %v475, %v218
        %v484 = vmul.f32 %v476, %v219
        %v485 = vmul.f32 %v477, %v220
        %v486 = vmul.f32 %v478, %v221
        %v487 = vsel %vm310, %v479, 0.0
        %v488 = vsel %vm310, %v480, 0.0
        %v489 = vadd.f32 %v487, %v488
        %v490 = vsel %vm310, %v481, 0.0
        %v491 = vadd.f32 %v489, %v490
        %v492 = vsel %vm310, %v482, 0.0
        %v493 = vadd.f32 %v491, %v492
        %v494 = vsel %vm310, %v483, 0.0
        %v495 = vadd.f32 %v493, %v494
        %v496 = vsel %vm310, %v484, 0.0
        %v497 = vadd.f32 %v495, %v496
        %v498 = vsel %vm310, %v485, 0.0
        %v499 = vadd.f32 %v497, %v498
        %v500 = vsel %vm310, %v486, 0.0
        %v501 = vadd.f32 %v499, %v500
        %502 = vadd.xlane.f32.xlu0 %v501
        %v503 = vpop.xlane.xlu0 %502
        %v504 = vrot.slane %v503, 4
        %v505 = vadd.f32 %v503, %v504
        %v506 = vrot.slane %v505, 2
        %v507 = vadd.f32 %v505, %v506
        %v508 = vrot.slane %v507, 1
        %v509 = vadd.f32 %v507, %v508
        %v510 = vsel %vm310, %v471, 0.0
        %v511 = vsel %vm310, %v472, 0.0
        %v512 = vadd.f32 %v510, %v511
        %v513 = vsel %vm310, %v473, 0.0
        %v514 = vadd.f32 %v512, %v513
        %v515 = vsel %vm310, %v474, 0.0
        %v516 = vadd.f32 %v514, %v515
        %v517 = vsel %vm310, %v475, 0.0
        %v518 = vadd.f32 %v516, %v517
        %v519 = vsel %vm310, %v476, 0.0
        %v520 = vadd.f32 %v518, %v519
        %v521 = vsel %vm310, %v477, 0.0
        %v522 = vadd.f32 %v520, %v521
        %v523 = vsel %vm310, %v478, 0.0
        %v524 = vadd.f32 %v522, %v523
        %525 = vadd.xlane.f32.xlu0 %v524
        %v526 = vpop.xlane.xlu0 %525
        %v527 = vrot.slane %v526, 4
        %v528 = vadd.f32 %v526, %v527
        %v529 = vrot.slane %v528, 2
        %v530 = vadd.f32 %v528, %v529
        %v531 = vrot.slane %v530, 1
        %v532 = vadd.f32 %v530, %v531
        %v533 = vsel %vm310, %v214, 0.0
        %v534 = vsel %vm310, %v215, 0.0
        %v535 = vadd.f32 %v533, %v534
        %v536 = vsel %vm310, %v216, 0.0
        %v537 = vadd.f32 %v535, %v536
        %v538 = vsel %vm310, %v217, 0.0
        %v539 = vadd.f32 %v537, %v538
        %v540 = vsel %vm310, %v218, 0.0
        %v541 = vadd.f32 %v539, %v540
        %v542 = vsel %vm310, %v219, 0.0
        %v543 = vadd.f32 %v541, %v542
        %v544 = vsel %vm310, %v220, 0.0
        %v545 = vadd.f32 %v543, %v544
        %v546 = vsel %vm310, %v221, 0.0
        %v547 = vadd.f32 %v545, %v546
        %548 = vadd.xlane.f32.xlu0 %v547
        %v549 = vpop.xlane.xlu0 %548
        %v550 = vrot.slane %v549, 4
        %v551 = vadd.f32 %v549, %v550
        %v552 = vrot.slane %v551, 2
        %v553 = vadd.f32 %v551, %v552
        %v554 = vrot.slane %v553, 1
        %v555 = vadd.f32 %v553, %v554
        %v556 = vadd.f32 %v532, %v555
        %v557 = vmul.f32 %v509, 2.0
        %v558 = vadd.f32 %v557, 1.0
        %v559 = vadd.f32 %v556, 1.0
        %v560 = vrcp.pop %v559
        %v561 = vmul.f32 %v559, %v560
        %v562 = vsub.f32 1.0, %v561
        %v563 = vmul.f32 %v560, %v562
        %v564 = vadd.f32 %v560, %v563
        %vm565 = vweird.f32 %v559
        %vm566 = vweird.f32 %v560
        %vm567 = vmor %vm565, %vm566
        %v568 = vsel %vm567, %v560, %v564
        %v569 = vand.u32 2147483647, %v559
        %vm570 = vcmp.eq.f32.partialorder %v569, 8.507059e+37
        %v571 = vand.u32 %v559, 2147483648
        %v572 = vor.u32 1.1754944e-38, %v571
        %v573 = vsel %vm570, %v572, %v568
        %v574 = vmul.f32 %v558, %v573
        %v575 = vsub.f32 1.0, %v574
        %v576 = vadd.f32 %v575, 0.0
        %s577 = vtos %v576
        %v578 = vlaneseq
        %v579 = vshrl.u32 %v578, 7
        %v580 = vadd.s32 %v579, 8
        %v581 = vlaneseq
        %v582 = vand.u32 %v581, 127
        %vm583 = vcmp.eq.s32.totalorder %v579, 0
        %vm584 = vcmp.eq.s32.totalorder %v580, 0
        %vm585 = vcmp.eq.s32.totalorder %v579, 15
        %vm586 = vcmp.eq.s32.totalorder %v580, 15
        %vm587 = vcmp.eq.s32.totalorder %v582, 0
        %vm588 = vcmp.eq.s32.totalorder %v582, 15
        %v589 = vrot.slane %v471, 7
        %v590 = vrot.slane %v473, 7
        %v591 = vrot.slane %v475, 7
        %v592 = vrot.slane %v477, 7
        %v593 = vrot.slane %v472, 7
        %v594 = vrot.slane %v474, 7
        %v595 = vrot.slane %v476, 7
        %v596 = vrot.slane %v478, 7
        %vm597 = vcmp.lt.s32.totalorder %v579, 1
        %v598 = vsel %vm597, %v589, %v593
        %v599 = vsel %vm597, %v590, %v594
        %v600 = vsel %vm597, %v591, %v595
        %v601 = vsel %vm597, %v592, %v596
        %v602 = vsel %vm597, %v593, %v589
        %v603 = vsel %vm597, %v594, %v590
        %v604 = vsel %vm597, %v595, %v591
        %v605 = vsel %vm597, %v596, %v592
        %v606 = vsel %vm583, 1, 0
        %v607 = vsel %vm584, 1, 0
        %vm608 = vcmp.eq.s32.totalorder %v606, 1
        %vm609 = vcmp.eq.s32.totalorder %v607, 1
        %v610 = vsel %vm608, %v471, %v602
        %v611 = vsel %vm609, %v472, %v598
        %v612 = vsel %vm608, %v473, %v603
        %v613 = vsel %vm609, %v474, %v599
        %v614 = vsel %vm608, %v475, %v604
        %v615 = vsel %vm609, %v476, %v600
        %v616 = vsel %vm608, %v477, %v605
        %v617 = vsel %vm609, %v478, %v601
        %v618 = vrot.slane %v471, 1
        %v619 = vrot.slane %v473, 1
        %v620 = vrot.slane %v475, 1
        %v621 = vrot.slane %v477, 1
        %v622 = vrot.slane %v472, 1
        %v623 = vrot.slane %v474, 1
        %v624 = vrot.slane %v476, 1
        %v625 = vrot.slane %v478, 1
        %vm626 = vcmp.lt.s32.totalorder %v579, 7
        %v627 = vsel %vm626, %v618, %v622
        %v628 = vsel %vm626, %v619, %v623
        %v629 = vsel %vm626, %v620, %v624
        %v630 = vsel %vm626, %v621, %v625
        %v631 = vsel %vm626, %v622, %v618
        %v632 = vsel %vm626, %v623, %v619
        %v633 = vsel %vm626, %v624, %v620
        %v634 = vsel %vm626, %v625, %v621
        %v635 = vsel %vm585, 1, 0
        %v636 = vsel %vm586, 1, 0
        %vm637 = vcmp.eq.s32.totalorder %v635, 1
        %vm638 = vcmp.eq.s32.totalorder %v636, 1
        %v639 = vsel %vm637, %v471, %v627
        %v640 = vsel %vm638, %v472, %v631
        %v641 = vsel %vm637, %v473, %v628
        %v642 = vsel %vm638, %v474, %v632
        %v643 = vsel %vm637, %v475, %v629
        %v644 = vsel %vm638, %v476, %v633
        %v645 = vsel %vm637, %v477, %v630
        %v646 = vsel %vm638, %v478, %v634
        %v647 = vmin.f32 %v610, %v639
        %v648 = vmin.f32 %v611, %v640
        %v649 = vmin.f32 %v612, %v641
        %v650 = vmin.f32 %v613, %v642
        %v651 = vmin.f32 %v614, %v643
        %v652 = vmin.f32 %v615, %v644
        %v653 = vmin.f32 %v616, %v645
        %v654 = vmin.f32 %v617, %v646
        %v655 = vmin.f32 %v471, %v647
        %v656 = vmin.f32 %v472, %v648
        %v657 = vmin.f32 %v473, %v649
        %v658 = vmin.f32 %v474, %v650
        %v659 = vmin.f32 %v475, %v651
        %v660 = vmin.f32 %v476, %v652
        %v661 = vmin.f32 %v477, %v653
        %v662 = vmin.f32 %v478, %v654
        %vm663 = vcmask 1047680
        %664 = vrot.lane.b32.xlu0 %v471, 16
        %v665 = vpop.permute.xlu0 %664
        %v666 = vsel %vm663, %v665, %v471
        %667 = vrot.lane.b32.xlu0 %v472, 16
        %v668 = vpop.permute.xlu0 %667
        %v669 = vsel %vm663, %v668, %v472
        %670 = vrot.lane.b32.xlu0 %v473, 16
        %v671 = vpop.permute.xlu0 %670
        %v672 = vsel %vm663, %v671, %v473
        %673 = vrot.lane.b32.xlu0 %v474, 16
        %v674 = vpop.permute.xlu0 %673
        %v675 = vsel %vm663, %v674, %v474
        %676 = vrot.lane.b32.xlu0 %v475, 16
        %v677 = vpop.permute.xlu0 %676
        %v678 = vsel %vm663, %v677, %v475
        %679 = vrot.lane.b32.xlu0 %v476, 16
        %v680 = vpop.permute.xlu0 %679
        %v681 = vsel %vm663, %v680, %v476
        %682 = vrot.lane.b32.xlu0 %v477, 16
        %v683 = vpop.permute.xlu0 %682
        %v684 = vsel %vm663, %v683, %v477
        %685 = vrot.lane.b32.xlu0 %v478, 16
        %v686 = vpop.permute.xlu0 %685
        %v687 = vsel %vm663, %v686, %v478
        %688 = vrot.lane.b32.xlu0 %v666, 16
        %v689 = vpop.permute.xlu0 %688
        %690 = vrot.lane.b32.xlu0 %v669, 16
        %v691 = vpop.permute.xlu0 %690
        %692 = vrot.lane.b32.xlu0 %v672, 16
        %v693 = vpop.permute.xlu0 %692
        %694 = vrot.lane.b32.xlu0 %v675, 16
        %v695 = vpop.permute.xlu0 %694
        %696 = vrot.lane.b32.xlu0 %v678, 16
        %v697 = vpop.permute.xlu0 %696
        %698 = vrot.lane.b32.xlu0 %v681, 16
        %v699 = vpop.permute.xlu0 %698
        %700 = vrot.lane.b32.xlu0 %v684, 16
        %v701 = vpop.permute.xlu0 %700
        %702 = vrot.lane.b32.xlu0 %v687, 16
        %v703 = vpop.permute.xlu0 %702
        %v704 = vsel %vm663, %v689, %v471
        %v705 = vsel %vm663, %v691, %v472
        %v706 = vsel %vm663, %v693, %v473
        %v707 = vsel %vm663, %v695, %v474
        %v708 = vsel %vm663, %v697, %v475
        %v709 = vsel %vm663, %v699, %v476
        %v710 = vsel %vm663, %v701, %v477
        %v711 = vsel %vm663, %v703, %v478
        %v712 = vsel %vm587, 1, 0
        %vm713 = vcmp.eq.s32.totalorder %v712, 1
        %722 = vrot.lane.b32.xlu0 %v704, 113
        %v723 = vpop.permute.xlu0 %722
        %724 = vrot.lane.b32.xlu0 %v705, 113
        %v725 = vpop.permute.xlu0 %724
        %726 = vrot.lane.b32.xlu0 %v706, 113
        %v727 = vpop.permute.xlu0 %726
        %728 = vrot.lane.b32.xlu0 %v707, 113
        %v729 = vpop.permute.xlu0 %728
        %730 = vrot.lane.b32.xlu0 %v708, 113
        %v731 = vpop.permute.xlu0 %730
        %732 = vrot.lane.b32.xlu0 %v709, 113
        %v733 = vpop.permute.xlu0 %732
        %734 = vrot.lane.b32.xlu0 %v710, 113
        %v735 = vpop.permute.xlu0 %734
        %736 = vrot.lane.b32.xlu0 %v711, 113
        %v737 = vpop.permute.xlu0 %736
        %v746 = vsel %vm713, %v471, %v723
        %v747 = vsel %vm713, %v472, %v725
        %v748 = vsel %vm713, %v473, %v727
        %v749 = vsel %vm713, %v474, %v729
        %v750 = vsel %vm713, %v475, %v731
        %v751 = vsel %vm713, %v476, %v733
        %v752 = vsel %vm713, %v477, %v735
        %v753 = vsel %vm713, %v478, %v737
        %v754 = vsel %vm588, 1, 0
        %vm755 = vcmp.eq.s32.totalorder %v754, 1
        %756 = vrot.lane.b32.xlu0 %v704, 127
        %v757 = vpop.permute.xlu0 %756
        %758 = vrot.lane.b32.xlu0 %v705, 127
        %v759 = vpop.permute.xlu0 %758
        %760 = vrot.lane.b32.xlu0 %v706, 127
        %v761 = vpop.permute.xlu0 %760
        %762 = vrot.lane.b32.xlu0 %v707, 127
        %v763 = vpop.permute.xlu0 %762
        %764 = vrot.lane.b32.xlu0 %v708, 127
        %v765 = vpop.permute.xlu0 %764
        %766 = vrot.lane.b32.xlu0 %v709, 127
        %v767 = vpop.permute.xlu0 %766
        %768 = vrot.lane.b32.xlu0 %v710, 127
        %v769 = vpop.permute.xlu0 %768
        %770 = vrot.lane.b32.xlu0 %v711, 127
        %v771 = vpop.permute.xlu0 %770
        %v780 = vsel %vm755, %v471, %v757
        %v781 = vsel %vm755, %v472, %v759
        %v782 = vsel %vm755, %v473, %v761
        %v783 = vsel %vm755, %v474, %v763
        %v784 = vsel %vm755, %v475, %v765
        %v785 = vsel %vm755, %v476, %v767
        %v786 = vsel %vm755, %v477, %v769
        %v787 = vsel %vm755, %v478, %v771
        %v788 = vmin.f32 %v746, %v780
        %v789 = vmin.f32 %v747, %v781
        %v790 = vmin.f32 %v748, %v782
        %v791 = vmin.f32 %v749, %v783
        %v792 = vmin.f32 %v750, %v784
        %v793 = vmin.f32 %v751, %v785
        %v794 = vmin.f32 %v752, %v786
        %v795 = vmin.f32 %v753, %v787
        %v796 = vmin.f32 %v471, %v788
        %v797 = vmin.f32 %v472, %v789
        %v798 = vmin.f32 %v473, %v790
        %v799 = vmin.f32 %v474, %v791
        %v800 = vmin.f32 %v475, %v792
        %v801 = vmin.f32 %v476, %v793
        %v802 = vmin.f32 %v477, %v794
        %v803 = vmin.f32 %v478, %v795
        %v804 = vmin.f32 %v655, %v796
        %v805 = vmin.f32 %v656, %v797
        %v806 = vmin.f32 %v657, %v798
        %v807 = vmin.f32 %v658, %v799
        %v808 = vmin.f32 %v659, %v800
        %v809 = vmin.f32 %v660, %v801
        %v810 = vmin.f32 %v661, %v802
        %v811 = vmin.f32 %v662, %v803
        %v812 = vrot.slane %v804, 7
        %v813 = vrot.slane %v806, 7
        %v814 = vrot.slane %v808, 7
        %v815 = vrot.slane %v810, 7
        %v816 = vrot.slane %v805, 7
        %v817 = vrot.slane %v807, 7
        %v818 = vrot.slane %v809, 7
        %v819 = vrot.slane %v811, 7
        %v820 = vsel %vm597, %v812, %v816
        %v821 = vsel %vm597, %v813, %v817
        %v822 = vsel %vm597, %v814, %v818
        %v823 = vsel %vm597, %v815, %v819
        %v824 = vsel %vm597, %v816, %v812
        %v825 = vsel %vm597, %v817, %v813
        %v826 = vsel %vm597, %v818, %v814
        %v827 = vsel %vm597, %v819, %v815
        %v828 = vsel %vm608, %v804, %v824
        %v829 = vsel %vm609, %v805, %v820
        %v830 = vsel %vm608, %v806, %v825
        %v831 = vsel %vm609, %v807, %v821
        %v832 = vsel %vm608, %v808, %v826
        %v833 = vsel %vm609, %v809, %v822
        %v834 = vsel %vm608, %v810, %v827
        %v835 = vsel %vm609, %v811, %v823
        %v836 = vrot.slane %v804, 1
        %v837 = vrot.slane %v806, 1
        %v838 = vrot.slane %v808, 1
        %v839 = vrot.slane %v810, 1
        %v840 = vrot.slane %v805, 1
        %v841 = vrot.slane %v807, 1
        %v842 = vrot.slane %v809, 1
        %v843 = vrot.slane %v811, 1
        %v844 = vsel %vm626, %v836, %v840
        %v845 = vsel %vm626, %v837, %v841
        %v846 = vsel %vm626, %v838, %v842
        %v847 = vsel %vm626, %v839, %v843
        %v848 = vsel %vm626, %v840, %v836
        %v849 = vsel %vm626, %v841, %v837
        %v850 = vsel %vm626, %v842, %v838
        %v851 = vsel %vm626, %v843, %v839
        %v852 = vsel %vm637, %v804, %v844
        %v853 = vsel %vm638, %v805, %v848
        %v854 = vsel %vm637, %v806, %v845
        %v855 = vsel %vm638, %v807, %v849
        %v856 = vsel %vm637, %v808, %v846
        %v857 = vsel %vm638, %v809, %v850
        %v858 = vsel %vm637, %v810, %v847
        %v859 = vsel %vm638, %v811, %v851
        %v860 = vmax.f32 %v828, %v852
        %v861 = vmax.f32 %v829, %v853
        %v862 = vmax.f32 %v830, %v854
        %v863 = vmax.f32 %v831, %v855
        %v864 = vmax.f32 %v832, %v856
        %v865 = vmax.f32 %v833, %v857
        %v866 = vmax.f32 %v834, %v858
        %v867 = vmax.f32 %v835, %v859
        %v868 = vmax.f32 %v804, %v860
        %v869 = vmax.f32 %v805, %v861
        %v870 = vmax.f32 %v806, %v862
        %v871 = vmax.f32 %v807, %v863
        %v872 = vmax.f32 %v808, %v864
        %v873 = vmax.f32 %v809, %v865
        %v874 = vmax.f32 %v810, %v866
        %v875 = vmax.f32 %v811, %v867
        %876 = vrot.lane.b32.xlu0 %v868, 16
        %v877 = vpop.permute.xlu0 %876
        %v878 = vsel %vm663, %v877, %v868
        %879 = vrot.lane.b32.xlu0 %v869, 16
        %v880 = vpop.permute.xlu0 %879
        %v881 = vsel %vm663, %v880, %v869
        %882 = vrot.lane.b32.xlu0 %v870, 16
        %v883 = vpop.permute.xlu0 %882
        %v884 = vsel %vm663, %v883, %v870
        %885 = vrot.lane.b32.xlu0 %v871, 16
        %v886 = vpop.permute.xlu0 %885
        %v887 = vsel %vm663, %v886, %v871
        %888 = vrot.lane.b32.xlu0 %v872, 16
        %v889 = vpop.permute.xlu0 %888
        %v890 = vsel %vm663, %v889, %v872
        %891 = vrot.lane.b32.xlu0 %v873, 16
        %v892 = vpop.permute.xlu0 %891
        %v893 = vsel %vm663, %v892, %v873
        %894 = vrot.lane.b32.xlu0 %v874, 16
        %v895 = vpop.permute.xlu0 %894
        %v896 = vsel %vm663, %v895, %v874
        %897 = vrot.lane.b32.xlu0 %v875, 16
        %v898 = vpop.permute.xlu0 %897
        %v899 = vsel %vm663, %v898, %v875
        %900 = vrot.lane.b32.xlu0 %v878, 16
        %v901 = vpop.permute.xlu0 %900
        %902 = vrot.lane.b32.xlu0 %v881, 16
        %v903 = vpop.permute.xlu0 %902
        %904 = vrot.lane.b32.xlu0 %v884, 16
        %v905 = vpop.permute.xlu0 %904
        %906 = vrot.lane.b32.xlu0 %v887, 16
        %v907 = vpop.permute.xlu0 %906
        %908 = vrot.lane.b32.xlu0 %v890, 16
        %v909 = vpop.permute.xlu0 %908
        %910 = vrot.lane.b32.xlu0 %v893, 16
        %v911 = vpop.permute.xlu0 %910
        %912 = vrot.lane.b32.xlu0 %v896, 16
        %v913 = vpop.permute.xlu0 %912
        %914 = vrot.lane.b32.xlu0 %v899, 16
        %v915 = vpop.permute.xlu0 %914
        %v916 = vsel %vm663, %v901, %v868
        %v917 = vsel %vm663, %v903, %v869
        %v918 = vsel %vm663, %v905, %v870
        %v919 = vsel %vm663, %v907, %v871
        %v920 = vsel %vm663, %v909, %v872
        %v921 = vsel %vm663, %v911, %v873
        %v922 = vsel %vm663, %v913, %v874
        %v923 = vsel %vm663, %v915, %v875
        %932 = vrot.lane.b32.xlu0 %v916, 113
        %v933 = vpop.permute.xlu0 %932
        %934 = vrot.lane.b32.xlu0 %v917, 113
        %v935 = vpop.permute.xlu0 %934
        %936 = vrot.lane.b32.xlu0 %v918, 113
        %v937 = vpop.permute.xlu0 %936
        %938 = vrot.lane.b32.xlu0 %v919, 113
        %v939 = vpop.permute.xlu0 %938
        %940 = vrot.lane.b32.xlu0 %v920, 113
        %v941 = vpop.permute.xlu0 %940
        %942 = vrot.lane.b32.xlu0 %v921, 113
        %v943 = vpop.permute.xlu0 %942
        %944 = vrot.lane.b32.xlu0 %v922, 113
        %v945 = vpop.permute.xlu0 %944
        %946 = vrot.lane.b32.xlu0 %v923, 113
        %v947 = vpop.permute.xlu0 %946
        %v956 = vsel %vm713, %v868, %v933
        %v957 = vsel %vm713, %v869, %v935
        %v958 = vsel %vm713, %v870, %v937
        %v959 = vsel %vm713, %v871, %v939
        %v960 = vsel %vm713, %v872, %v941
        %v961 = vsel %vm713, %v873, %v943
        %v962 = vsel %vm713, %v874, %v945
        %v963 = vsel %vm713, %v875, %v947
        %964 = vrot.lane.b32.xlu0 %v916, 127
        %v965 = vpop.permute.xlu0 %964
        %966 = vrot.lane.b32.xlu0 %v917, 127
        %v967 = vpop.permute.xlu0 %966
        %968 = vrot.lane.b32.xlu0 %v918, 127
        %v969 = vpop.permute.xlu0 %968
        %970 = vrot.lane.b32.xlu0 %v919, 127
        %v971 = vpop.permute.xlu0 %970
        %972 = vrot.lane.b32.xlu0 %v920, 127
        %v973 = vpop.permute.xlu0 %972
        %974 = vrot.lane.b32.xlu0 %v921, 127
        %v975 = vpop.permute.xlu0 %974
        %976 = vrot.lane.b32.xlu0 %v922, 127
        %v977 = vpop.permute.xlu0 %976
        %978 = vrot.lane.b32.xlu0 %v923, 127
        %v979 = vpop.permute.xlu0 %978
        %v988 = vsel %vm755, %v868, %v965
        %v989 = vsel %vm755, %v869, %v967
        %v990 = vsel %vm755, %v870, %v969
        %v991 = vsel %vm755, %v871, %v971
        %v992 = vsel %vm755, %v872, %v973
        %v993 = vsel %vm755, %v873, %v975
        %v994 = vsel %vm755, %v874, %v977
        %v995 = vsel %vm755, %v875, %v979
        %v996 = vmax.f32 %v956, %v988
        %v997 = vmax.f32 %v957, %v989
        %v998 = vmax.f32 %v958, %v990
        %v999 = vmax.f32 %v959, %v991
        %v1000 = vmax.f32 %v960, %v992
        %v1001 = vmax.f32 %v961, %v993
        %v1002 = vmax.f32 %v962, %v994
        %v1003 = vmax.f32 %v963, %v995
        %v1004 = vmax.f32 %v868, %v996
        %v1005 = vmax.f32 %v869, %v997
        %v1006 = vmax.f32 %v870, %v998
        %v1007 = vmax.f32 %v871, %v999
        %v1008 = vmax.f32 %v872, %v1000
        %v1009 = vmax.f32 %v873, %v1001
        %v1010 = vmax.f32 %v874, %v1002
        %v1011 = vmax.f32 %v875, %v1003
        %v1012 = vsub.f32 %v471, %v1004
        %v1013 = vsub.f32 %v472, %v1005
        %v1014 = vsub.f32 %v473, %v1006
        %v1015 = vsub.f32 %v474, %v1007
        %v1016 = vsub.f32 %v475, %v1008
        %v1017 = vsub.f32 %v476, %v1009
        %v1018 = vsub.f32 %v477, %v1010
        %v1019 = vsub.f32 %v478, %v1011
        %v1020 = vmax.f32 %v1012, 0.0
        %v1021 = vmax.f32 %v1013, 0.0
        %v1022 = vmax.f32 %v1014, 0.0
        %v1023 = vmax.f32 %v1015, 0.0
        %v1024 = vmax.f32 %v1016, 0.0
        %v1025 = vmax.f32 %v1017, 0.0
        %v1026 = vmax.f32 %v1018, 0.0
        %v1027 = vmax.f32 %v1019, 0.0
        %v1028 = vmin.f32 %v828, %v852
        %v1029 = vmin.f32 %v829, %v853
        %v1030 = vmin.f32 %v830, %v854
        %v1031 = vmin.f32 %v831, %v855
        %v1032 = vmin.f32 %v832, %v856
        %v1033 = vmin.f32 %v833, %v857
        %v1034 = vmin.f32 %v834, %v858
        %v1035 = vmin.f32 %v835, %v859
        %v1036 = vmin.f32 %v804, %v1028
        %v1037 = vmin.f32 %v805, %v1029
        %v1038 = vmin.f32 %v806, %v1030
        %v1039 = vmin.f32 %v807, %v1031
        %v1040 = vmin.f32 %v808, %v1032
        %v1041 = vmin.f32 %v809, %v1033
        %v1042 = vmin.f32 %v810, %v1034
        %v1043 = vmin.f32 %v811, %v1035
        %1044 = vrot.lane.b32.xlu0 %v804, 16
        %v1045 = vpop.permute.xlu0 %1044
        %v1046 = vsel %vm663, %v1045, %v804
        %1047 = vrot.lane.b32.xlu0 %v805, 16
        %v1048 = vpop.permute.xlu0 %1047
        %v1049 = vsel %vm663, %v1048, %v805
        %1050 = vrot.lane.b32.xlu0 %v806, 16
        %v1051 = vpop.permute.xlu0 %1050
        %v1052 = vsel %vm663, %v1051, %v806
        %1053 = vrot.lane.b32.xlu0 %v807, 16
        %v1054 = vpop.permute.xlu0 %1053
        %v1055 = vsel %vm663, %v1054, %v807
        %1056 = vrot.lane.b32.xlu0 %v808, 16
        %v1057 = vpop.permute.xlu0 %1056
        %v1058 = vsel %vm663, %v1057, %v808
        %1059 = vrot.lane.b32.xlu0 %v809, 16
        %v1060 = vpop.permute.xlu0 %1059
        %v1061 = vsel %vm663, %v1060, %v809
        %1062 = vrot.lane.b32.xlu0 %v810, 16
        %v1063 = vpop.permute.xlu0 %1062
        %v1064 = vsel %vm663, %v1063, %v810
        %1065 = vrot.lane.b32.xlu0 %v811, 16
        %v1066 = vpop.permute.xlu0 %1065
        %v1067 = vsel %vm663, %v1066, %v811
        %1068 = vrot.lane.b32.xlu0 %v1046, 16
        %v1069 = vpop.permute.xlu0 %1068
        %1070 = vrot.lane.b32.xlu0 %v1049, 16
        %v1071 = vpop.permute.xlu0 %1070
        %1072 = vrot.lane.b32.xlu0 %v1052, 16
        %v1073 = vpop.permute.xlu0 %1072
        %1074 = vrot.lane.b32.xlu0 %v1055, 16
        %v1075 = vpop.permute.xlu0 %1074
        %1076 = vrot.lane.b32.xlu0 %v1058, 16
        %v1077 = vpop.permute.xlu0 %1076
        %1078 = vrot.lane.b32.xlu0 %v1061, 16
        %v1079 = vpop.permute.xlu0 %1078
        %1080 = vrot.lane.b32.xlu0 %v1064, 16
        %v1081 = vpop.permute.xlu0 %1080
        %1082 = vrot.lane.b32.xlu0 %v1067, 16
        %v1083 = vpop.permute.xlu0 %1082
        %v1084 = vsel %vm663, %v1069, %v804
        %v1085 = vsel %vm663, %v1071, %v805
        %v1086 = vsel %vm663, %v1073, %v806
        %v1087 = vsel %vm663, %v1075, %v807
        %v1088 = vsel %vm663, %v1077, %v808
        %v1089 = vsel %vm663, %v1079, %v809
        %v1090 = vsel %vm663, %v1081, %v810
        %v1091 = vsel %vm663, %v1083, %v811
        %1100 = vrot.lane.b32.xlu0 %v1084, 113
        %v1101 = vpop.permute.xlu0 %1100
        %1102 = vrot.lane.b32.xlu0 %v1085, 113
        %v1103 = vpop.permute.xlu0 %1102
        %1104 = vrot.lane.b32.xlu0 %v1086, 113
        %v1105 = vpop.permute.xlu0 %1104
        %1106 = vrot.lane.b32.xlu0 %v1087, 113
        %v1107 = vpop.permute.xlu0 %1106
        %1108 = vrot.lane.b32.xlu0 %v1088, 113
        %v1109 = vpop.permute.xlu0 %1108
        %1110 = vrot.lane.b32.xlu0 %v1089, 113
        %v1111 = vpop.permute.xlu0 %1110
        %1112 = vrot.lane.b32.xlu0 %v1090, 113
        %v1113 = vpop.permute.xlu0 %1112
        %1114 = vrot.lane.b32.xlu0 %v1091, 113
        %v1115 = vpop.permute.xlu0 %1114
        %v1124 = vsel %vm713, %v804, %v1101
        %v1125 = vsel %vm713, %v805, %v1103
        %v1126 = vsel %vm713, %v806, %v1105
        %v1127 = vsel %vm713, %v807, %v1107
        %v1128 = vsel %vm713, %v808, %v1109
        %v1129 = vsel %vm713, %v809, %v1111
        %v1130 = vsel %vm713, %v810, %v1113
        %v1131 = vsel %vm713, %v811, %v1115
        %1132 = vrot.lane.b32.xlu0 %v1084, 127
        %v1133 = vpop.permute.xlu0 %1132
        %1134 = vrot.lane.b32.xlu0 %v1085, 127
        %v1135 = vpop.permute.xlu0 %1134
        %1136 = vrot.lane.b32.xlu0 %v1086, 127
        %v1137 = vpop.permute.xlu0 %1136
        %1138 = vrot.lane.b32.xlu0 %v1087, 127
        %v1139 = vpop.permute.xlu0 %1138
        %1140 = vrot.lane.b32.xlu0 %v1088, 127
        %v1141 = vpop.permute.xlu0 %1140
        %1142 = vrot.lane.b32.xlu0 %v1089, 127
        %v1143 = vpop.permute.xlu0 %1142
        %1144 = vrot.lane.b32.xlu0 %v1090, 127
        %v1145 = vpop.permute.xlu0 %1144
        %1146 = vrot.lane.b32.xlu0 %v1091, 127
        %v1147 = vpop.permute.xlu0 %1146
        %v1156 = vsel %vm755, %v804, %v1133
        %v1157 = vsel %vm755, %v805, %v1135
        %v1158 = vsel %vm755, %v806, %v1137
        %v1159 = vsel %vm755, %v807, %v1139
        %v1160 = vsel %vm755, %v808, %v1141
        %v1161 = vsel %vm755, %v809, %v1143
        %v1162 = vsel %vm755, %v810, %v1145
        %v1163 = vsel %vm755, %v811, %v1147
        %v1164 = vmin.f32 %v1124, %v1156
        %v1165 = vmin.f32 %v1125, %v1157
        %v1166 = vmin.f32 %v1126, %v1158
        %v1167 = vmin.f32 %v1127, %v1159
        %v1168 = vmin.f32 %v1128, %v1160
        %v1169 = vmin.f32 %v1129, %v1161
        %v1170 = vmin.f32 %v1130, %v1162
        %v1171 = vmin.f32 %v1131, %v1163
        %v1172 = vmin.f32 %v804, %v1164
        %v1173 = vmin.f32 %v805, %v1165
        %v1174 = vmin.f32 %v806, %v1166
        %v1175 = vmin.f32 %v807, %v1167
        %v1176 = vmin.f32 %v808, %v1168
        %v1177 = vmin.f32 %v809, %v1169
        %v1178 = vmin.f32 %v810, %v1170
        %v1179 = vmin.f32 %v811, %v1171
        %v1180 = vmin.f32 %v1036, %v1172
        %v1181 = vmin.f32 %v1037, %v1173
        %v1182 = vmin.f32 %v1038, %v1174
        %v1183 = vmin.f32 %v1039, %v1175
        %v1184 = vmin.f32 %v1040, %v1176
        %v1185 = vmin.f32 %v1041, %v1177
        %v1186 = vmin.f32 %v1042, %v1178
        %v1187 = vmin.f32 %v1043, %v1179
        %v1188 = vrot.slane %v1180, 7
        %v1189 = vrot.slane %v1182, 7
        %v1190 = vrot.slane %v1184, 7
        %v1191 = vrot.slane %v1186, 7
        %v1192 = vrot.slane %v1181, 7
        %v1193 = vrot.slane %v1183, 7
        %v1194 = vrot.slane %v1185, 7
        %v1195 = vrot.slane %v1187, 7
        %v1196 = vsel %vm597, %v1188, %v1192
        %v1197 = vsel %vm597, %v1189, %v1193
        %v1198 = vsel %vm597, %v1190, %v1194
        %v1199 = vsel %vm597, %v1191, %v1195
        %v1200 = vsel %vm597, %v1192, %v1188
        %v1201 = vsel %vm597, %v1193, %v1189
        %v1202 = vsel %vm597, %v1194, %v1190
        %v1203 = vsel %vm597, %v1195, %v1191
        %v1204 = vsel %vm608, %v1180, %v1200
        %v1205 = vsel %vm609, %v1181, %v1196
        %v1206 = vsel %vm608, %v1182, %v1201
        %v1207 = vsel %vm609, %v1183, %v1197
        %v1208 = vsel %vm608, %v1184, %v1202
        %v1209 = vsel %vm609, %v1185, %v1198
        %v1210 = vsel %vm608, %v1186, %v1203
        %v1211 = vsel %vm609, %v1187, %v1199
        %v1212 = vrot.slane %v1180, 1
        %v1213 = vrot.slane %v1182, 1
        %v1214 = vrot.slane %v1184, 1
        %v1215 = vrot.slane %v1186, 1
        %v1216 = vrot.slane %v1181, 1
        %v1217 = vrot.slane %v1183, 1
        %v1218 = vrot.slane %v1185, 1
        %v1219 = vrot.slane %v1187, 1
        %v1220 = vsel %vm626, %v1212, %v1216
        %v1221 = vsel %vm626, %v1213, %v1217
        %v1222 = vsel %vm626, %v1214, %v1218
        %v1223 = vsel %vm626, %v1215, %v1219
        %v1224 = vsel %vm626, %v1216, %v1212
        %v1225 = vsel %vm626, %v1217, %v1213
        %v1226 = vsel %vm626, %v1218, %v1214
        %v1227 = vsel %vm626, %v1219, %v1215
        %v1228 = vsel %vm637, %v1180, %v1220
        %v1229 = vsel %vm638, %v1181, %v1224
        %v1230 = vsel %vm637, %v1182, %v1221
        %v1231 = vsel %vm638, %v1183, %v1225
        %v1232 = vsel %vm637, %v1184, %v1222
        %v1233 = vsel %vm638, %v1185, %v1226
        %v1234 = vsel %vm637, %v1186, %v1223
        %v1235 = vsel %vm638, %v1187, %v1227
        %v1236 = vmax.f32 %v1204, %v1228
        %v1237 = vmax.f32 %v1205, %v1229
        %v1238 = vmax.f32 %v1206, %v1230
        %v1239 = vmax.f32 %v1207, %v1231
        %v1240 = vmax.f32 %v1208, %v1232
        %v1241 = vmax.f32 %v1209, %v1233
        %v1242 = vmax.f32 %v1210, %v1234
        %v1243 = vmax.f32 %v1211, %v1235
        %v1244 = vmax.f32 %v1180, %v1236
        %v1245 = vmax.f32 %v1181, %v1237
        %v1246 = vmax.f32 %v1182, %v1238
        %v1247 = vmax.f32 %v1183, %v1239
        %v1248 = vmax.f32 %v1184, %v1240
        %v1249 = vmax.f32 %v1185, %v1241
        %v1250 = vmax.f32 %v1186, %v1242
        %v1251 = vmax.f32 %v1187, %v1243
        %1252 = vrot.lane.b32.xlu0 %v1244, 16
        %v1253 = vpop.permute.xlu0 %1252
        %v1254 = vsel %vm663, %v1253, %v1244
        %1255 = vrot.lane.b32.xlu0 %v1245, 16
        %v1256 = vpop.permute.xlu0 %1255
        %v1257 = vsel %vm663, %v1256, %v1245
        %1258 = vrot.lane.b32.xlu0 %v1246, 16
        %v1259 = vpop.permute.xlu0 %1258
        %v1260 = vsel %vm663, %v1259, %v1246
        %1261 = vrot.lane.b32.xlu0 %v1247, 16
        %v1262 = vpop.permute.xlu0 %1261
        %v1263 = vsel %vm663, %v1262, %v1247
        %1264 = vrot.lane.b32.xlu0 %v1248, 16
        %v1265 = vpop.permute.xlu0 %1264
        %v1266 = vsel %vm663, %v1265, %v1248
        %1267 = vrot.lane.b32.xlu0 %v1249, 16
        %v1268 = vpop.permute.xlu0 %1267
        %v1269 = vsel %vm663, %v1268, %v1249
        %1270 = vrot.lane.b32.xlu0 %v1250, 16
        %v1271 = vpop.permute.xlu0 %1270
        %v1272 = vsel %vm663, %v1271, %v1250
        %1273 = vrot.lane.b32.xlu0 %v1251, 16
        %v1274 = vpop.permute.xlu0 %1273
        %v1275 = vsel %vm663, %v1274, %v1251
        %1276 = vrot.lane.b32.xlu0 %v1254, 16
        %v1277 = vpop.permute.xlu0 %1276
        %1278 = vrot.lane.b32.xlu0 %v1257, 16
        %v1279 = vpop.permute.xlu0 %1278
        %1280 = vrot.lane.b32.xlu0 %v1260, 16
        %v1281 = vpop.permute.xlu0 %1280
        %1282 = vrot.lane.b32.xlu0 %v1263, 16
        %v1283 = vpop.permute.xlu0 %1282
        %1284 = vrot.lane.b32.xlu0 %v1266, 16
        %v1285 = vpop.permute.xlu0 %1284
        %1286 = vrot.lane.b32.xlu0 %v1269, 16
        %v1287 = vpop.permute.xlu0 %1286
        %1288 = vrot.lane.b32.xlu0 %v1272, 16
        %v1289 = vpop.permute.xlu0 %1288
        %1290 = vrot.lane.b32.xlu0 %v1275, 16
        %v1291 = vpop.permute.xlu0 %1290
        %v1292 = vsel %vm663, %v1277, %v1244
        %v1293 = vsel %vm663, %v1279, %v1245
        %v1294 = vsel %vm663, %v1281, %v1246
        %v1295 = vsel %vm663, %v1283, %v1247
        %v1296 = vsel %vm663, %v1285, %v1248
        %v1297 = vsel %vm663, %v1287, %v1249
        %v1298 = vsel %vm663, %v1289, %v1250
        %v1299 = vsel %vm663, %v1291, %v1251
        %1308 = vrot.lane.b32.xlu0 %v1292, 113
        %v1309 = vpop.permute.xlu0 %1308
        %1310 = vrot.lane.b32.xlu0 %v1293, 113
        %v1311 = vpop.permute.xlu0 %1310
        %1312 = vrot.lane.b32.xlu0 %v1294, 113
        %v1313 = vpop.permute.xlu0 %1312
        %1314 = vrot.lane.b32.xlu0 %v1295, 113
        %v1315 = vpop.permute.xlu0 %1314
        %1316 = vrot.lane.b32.xlu0 %v1296, 113
        %v1317 = vpop.permute.xlu0 %1316
        %1318 = vrot.lane.b32.xlu0 %v1297, 113
        %v1319 = vpop.permute.xlu0 %1318
        %1320 = vrot.lane.b32.xlu0 %v1298, 113
        %v1321 = vpop.permute.xlu0 %1320
        %1322 = vrot.lane.b32.xlu0 %v1299, 113
        %v1323 = vpop.permute.xlu0 %1322
        %v1332 = vsel %vm713, %v1244, %v1309
        %v1333 = vsel %vm713, %v1245, %v1311
        %v1334 = vsel %vm713, %v1246, %v1313
        %v1335 = vsel %vm713, %v1247, %v1315
        %v1336 = vsel %vm713, %v1248, %v1317
        %v1337 = vsel %vm713, %v1249, %v1319
        %v1338 = vsel %vm713, %v1250, %v1321
        %v1339 = vsel %vm713, %v1251, %v1323
        %1340 = vrot.lane.b32.xlu0 %v1292, 127
        %v1341 = vpop.permute.xlu0 %1340
        %1342 = vrot.lane.b32.xlu0 %v1293, 127
        %v1343 = vpop.permute.xlu0 %1342
        %1344 = vrot.lane.b32.xlu0 %v1294, 127
        %v1345 = vpop.permute.xlu0 %1344
        %1346 = vrot.lane.b32.xlu0 %v1295, 127
        %v1347 = vpop.permute.xlu0 %1346
        %1348 = vrot.lane.b32.xlu0 %v1296, 127
        %v1349 = vpop.permute.xlu0 %1348
        %1350 = vrot.lane.b32.xlu0 %v1297, 127
        %v1351 = vpop.permute.xlu0 %1350
        %1352 = vrot.lane.b32.xlu0 %v1298, 127
        %v1353 = vpop.permute.xlu0 %1352
        %1354 = vrot.lane.b32.xlu0 %v1299, 127
        %v1355 = vpop.permute.xlu0 %1354
        %v1364 = vsel %vm755, %v1244, %v1341
        %v1365 = vsel %vm755, %v1245, %v1343
        %v1366 = vsel %vm755, %v1246, %v1345
        %v1367 = vsel %vm755, %v1247, %v1347
        %v1368 = vsel %vm755, %v1248, %v1349
        %v1369 = vsel %vm755, %v1249, %v1351
        %v1370 = vsel %vm755, %v1250, %v1353
        %v1371 = vsel %vm755, %v1251, %v1355
        %v1372 = vmax.f32 %v1332, %v1364
        %v1373 = vmax.f32 %v1333, %v1365
        %v1374 = vmax.f32 %v1334, %v1366
        %v1375 = vmax.f32 %v1335, %v1367
        %v1376 = vmax.f32 %v1336, %v1368
        %v1377 = vmax.f32 %v1337, %v1369
        %v1378 = vmax.f32 %v1338, %v1370
        %v1379 = vmax.f32 %v1339, %v1371
        %v1380 = vmax.f32 %v1244, %v1372
        %v1381 = vmax.f32 %v1245, %v1373
        %v1382 = vmax.f32 %v1246, %v1374
        %v1383 = vmax.f32 %v1247, %v1375
        %v1384 = vmax.f32 %v1248, %v1376
        %v1385 = vmax.f32 %v1249, %v1377
        %v1386 = vmax.f32 %v1250, %v1378
        %v1387 = vmax.f32 %v1251, %v1379
        %v1388 = vsub.f32 %v804, %v1380
        %v1389 = vsub.f32 %v805, %v1381
        %v1390 = vsub.f32 %v806, %v1382
        %v1391 = vsub.f32 %v807, %v1383
        %v1392 = vsub.f32 %v808, %v1384
        %v1393 = vsub.f32 %v809, %v1385
        %v1394 = vsub.f32 %v810, %v1386
        %v1395 = vsub.f32 %v811, %v1387
        %v1396 = vmax.f32 %v1388, 0.0
        %v1397 = vmax.f32 %v1389, 0.0
        %v1398 = vmax.f32 %v1390, 0.0
        %v1399 = vmax.f32 %v1391, 0.0
        %v1400 = vmax.f32 %v1392, 0.0
        %v1401 = vmax.f32 %v1393, 0.0
        %v1402 = vmax.f32 %v1394, 0.0
        %v1403 = vmax.f32 %v1395, 0.0
        %v1404 = vadd.f32 %v1020, %v1396
        %v1405 = vadd.f32 %v1021, %v1397
        %v1406 = vadd.f32 %v1022, %v1398
        %v1407 = vadd.f32 %v1023, %v1399
        %v1408 = vadd.f32 %v1024, %v1400
        %v1409 = vadd.f32 %v1025, %v1401
        %v1410 = vadd.f32 %v1026, %v1402
        %v1411 = vadd.f32 %v1027, %v1403
        %v1412 = vmul.f32 %v1020, %v1396
        %v1413 = vmul.f32 %v1021, %v1397
        %v1414 = vmul.f32 %v1022, %v1398
        %v1415 = vmul.f32 %v1023, %v1399
        %v1416 = vmul.f32 %v1024, %v1400
        %v1417 = vmul.f32 %v1025, %v1401
        %v1418 = vmul.f32 %v1026, %v1402
        %v1419 = vmul.f32 %v1027, %v1403
        %v1420 = vsub.f32 %v1404, %v1412
        %v1421 = vsub.f32 %v1405, %v1413
        %v1422 = vsub.f32 %v1406, %v1414
        %v1423 = vsub.f32 %v1407, %v1415
        %v1424 = vsub.f32 %v1408, %v1416
        %v1425 = vsub.f32 %v1409, %v1417
        %v1426 = vsub.f32 %v1410, %v1418
        %v1427 = vsub.f32 %v1411, %v1419
        %v1428 = vmin.f32 %v1204, %v1228
        %v1429 = vmin.f32 %v1205, %v1229
        %v1430 = vmin.f32 %v1206, %v1230
        %v1431 = vmin.f32 %v1207, %v1231
        %v1432 = vmin.f32 %v1208, %v1232
        %v1433 = vmin.f32 %v1209, %v1233
        %v1434 = vmin.f32 %v1210, %v1234
        %v1435 = vmin.f32 %v1211, %v1235
        %v1436 = vmin.f32 %v1180, %v1428
        %v1437 = vmin.f32 %v1181, %v1429
        %v1438 = vmin.f32 %v1182, %v1430
        %v1439 = vmin.f32 %v1183, %v1431
        %v1440 = vmin.f32 %v1184, %v1432
        %v1441 = vmin.f32 %v1185, %v1433
        %v1442 = vmin.f32 %v1186, %v1434
        %v1443 = vmin.f32 %v1187, %v1435
        %1444 = vrot.lane.b32.xlu0 %v1180, 16
        %v1445 = vpop.permute.xlu0 %1444
        %v1446 = vsel %vm663, %v1445, %v1180
        %1447 = vrot.lane.b32.xlu0 %v1181, 16
        %v1448 = vpop.permute.xlu0 %1447
        %v1449 = vsel %vm663, %v1448, %v1181
        %1450 = vrot.lane.b32.xlu0 %v1182, 16
        %v1451 = vpop.permute.xlu0 %1450
        %v1452 = vsel %vm663, %v1451, %v1182
        %1453 = vrot.lane.b32.xlu0 %v1183, 16
        %v1454 = vpop.permute.xlu0 %1453
        %v1455 = vsel %vm663, %v1454, %v1183
        %1456 = vrot.lane.b32.xlu0 %v1184, 16
        %v1457 = vpop.permute.xlu0 %1456
        %v1458 = vsel %vm663, %v1457, %v1184
        %1459 = vrot.lane.b32.xlu0 %v1185, 16
        %v1460 = vpop.permute.xlu0 %1459
        %v1461 = vsel %vm663, %v1460, %v1185
        %1462 = vrot.lane.b32.xlu0 %v1186, 16
        %v1463 = vpop.permute.xlu0 %1462
        %v1464 = vsel %vm663, %v1463, %v1186
        %1465 = vrot.lane.b32.xlu0 %v1187, 16
        %v1466 = vpop.permute.xlu0 %1465
        %v1467 = vsel %vm663, %v1466, %v1187
        %1468 = vrot.lane.b32.xlu0 %v1446, 16
        %v1469 = vpop.permute.xlu0 %1468
        %1470 = vrot.lane.b32.xlu0 %v1449, 16
        %v1471 = vpop.permute.xlu0 %1470
        %1472 = vrot.lane.b32.xlu0 %v1452, 16
        %v1473 = vpop.permute.xlu0 %1472
        %1474 = vrot.lane.b32.xlu0 %v1455, 16
        %v1475 = vpop.permute.xlu0 %1474
        %1476 = vrot.lane.b32.xlu0 %v1458, 16
        %v1477 = vpop.permute.xlu0 %1476
        %1478 = vrot.lane.b32.xlu0 %v1461, 16
        %v1479 = vpop.permute.xlu0 %1478
        %1480 = vrot.lane.b32.xlu0 %v1464, 16
        %v1481 = vpop.permute.xlu0 %1480
        %1482 = vrot.lane.b32.xlu0 %v1467, 16
        %v1483 = vpop.permute.xlu0 %1482
        %v1484 = vsel %vm663, %v1469, %v1180
        %v1485 = vsel %vm663, %v1471, %v1181
        %v1486 = vsel %vm663, %v1473, %v1182
        %v1487 = vsel %vm663, %v1475, %v1183
        %v1488 = vsel %vm663, %v1477, %v1184
        %v1489 = vsel %vm663, %v1479, %v1185
        %v1490 = vsel %vm663, %v1481, %v1186
        %v1491 = vsel %vm663, %v1483, %v1187
        %1500 = vrot.lane.b32.xlu0 %v1484, 113
        %v1501 = vpop.permute.xlu0 %1500
        %1502 = vrot.lane.b32.xlu0 %v1485, 113
        %v1503 = vpop.permute.xlu0 %1502
        %1504 = vrot.lane.b32.xlu0 %v1486, 113
        %v1505 = vpop.permute.xlu0 %1504
        %1506 = vrot.lane.b32.xlu0 %v1487, 113
        %v1507 = vpop.permute.xlu0 %1506
        %1508 = vrot.lane.b32.xlu0 %v1488, 113
        %v1509 = vpop.permute.xlu0 %1508
        %1510 = vrot.lane.b32.xlu0 %v1489, 113
        %v1511 = vpop.permute.xlu0 %1510
        %1512 = vrot.lane.b32.xlu0 %v1490, 113
        %v1513 = vpop.permute.xlu0 %1512
        %1514 = vrot.lane.b32.xlu0 %v1491, 113
        %v1515 = vpop.permute.xlu0 %1514
        %v1524 = vsel %vm713, %v1180, %v1501
        %v1525 = vsel %vm713, %v1181, %v1503
        %v1526 = vsel %vm713, %v1182, %v1505
        %v1527 = vsel %vm713, %v1183, %v1507
        %v1528 = vsel %vm713, %v1184, %v1509
        %v1529 = vsel %vm713, %v1185, %v1511
        %v1530 = vsel %vm713, %v1186, %v1513
        %v1531 = vsel %vm713, %v1187, %v1515
        %1532 = vrot.lane.b32.xlu0 %v1484, 127
        %v1533 = vpop.permute.xlu0 %1532
        %1534 = vrot.lane.b32.xlu0 %v1485, 127
        %v1535 = vpop.permute.xlu0 %1534
        %1536 = vrot.lane.b32.xlu0 %v1486, 127
        %v1537 = vpop.permute.xlu0 %1536
        %1538 = vrot.lane.b32.xlu0 %v1487, 127
        %v1539 = vpop.permute.xlu0 %1538
        %1540 = vrot.lane.b32.xlu0 %v1488, 127
        %v1541 = vpop.permute.xlu0 %1540
        %1542 = vrot.lane.b32.xlu0 %v1489, 127
        %v1543 = vpop.permute.xlu0 %1542
        %1544 = vrot.lane.b32.xlu0 %v1490, 127
        %v1545 = vpop.permute.xlu0 %1544
        %1546 = vrot.lane.b32.xlu0 %v1491, 127
        %v1547 = vpop.permute.xlu0 %1546
        %v1556 = vsel %vm755, %v1180, %v1533
        %v1557 = vsel %vm755, %v1181, %v1535
        %v1558 = vsel %vm755, %v1182, %v1537
        %v1559 = vsel %vm755, %v1183, %v1539
        %v1560 = vsel %vm755, %v1184, %v1541
        %v1561 = vsel %vm755, %v1185, %v1543
        %v1562 = vsel %vm755, %v1186, %v1545
        %v1563 = vsel %vm755, %v1187, %v1547
        %v1564 = vmin.f32 %v1524, %v1556
        %v1565 = vmin.f32 %v1525, %v1557
        %v1566 = vmin.f32 %v1526, %v1558
        %v1567 = vmin.f32 %v1527, %v1559
        %v1568 = vmin.f32 %v1528, %v1560
        %v1569 = vmin.f32 %v1529, %v1561
        %v1570 = vmin.f32 %v1530, %v1562
        %v1571 = vmin.f32 %v1531, %v1563
        %v1572 = vmin.f32 %v1180, %v1564
        %v1573 = vmin.f32 %v1181, %v1565
        %v1574 = vmin.f32 %v1182, %v1566
        %v1575 = vmin.f32 %v1183, %v1567
        %v1576 = vmin.f32 %v1184, %v1568
        %v1577 = vmin.f32 %v1185, %v1569
        %v1578 = vmin.f32 %v1186, %v1570
        %v1579 = vmin.f32 %v1187, %v1571
        %v1580 = vmin.f32 %v1436, %v1572
        %v1581 = vmin.f32 %v1437, %v1573
        %v1582 = vmin.f32 %v1438, %v1574
        %v1583 = vmin.f32 %v1439, %v1575
        %v1584 = vmin.f32 %v1440, %v1576
        %v1585 = vmin.f32 %v1441, %v1577
        %v1586 = vmin.f32 %v1442, %v1578
        %v1587 = vmin.f32 %v1443, %v1579
        %v1588 = vrot.slane %v1580, 7
        %v1589 = vrot.slane %v1582, 7
        %v1590 = vrot.slane %v1584, 7
        %v1591 = vrot.slane %v1586, 7
        %v1592 = vrot.slane %v1581, 7
        %v1593 = vrot.slane %v1583, 7
        %v1594 = vrot.slane %v1585, 7
        %v1595 = vrot.slane %v1587, 7
        %v1596 = vsel %vm597, %v1588, %v1592
        %v1597 = vsel %vm597, %v1589, %v1593
        %v1598 = vsel %vm597, %v1590, %v1594
        %v1599 = vsel %vm597, %v1591, %v1595
        %v1600 = vsel %vm597, %v1592, %v1588
        %v1601 = vsel %vm597, %v1593, %v1589
        %v1602 = vsel %vm597, %v1594, %v1590
        %v1603 = vsel %vm597, %v1595, %v1591
        %v1604 = vsel %vm608, %v1580, %v1600
        %v1605 = vsel %vm609, %v1581, %v1596
        %v1606 = vsel %vm608, %v1582, %v1601
        %v1607 = vsel %vm609, %v1583, %v1597
        %v1608 = vsel %vm608, %v1584, %v1602
        %v1609 = vsel %vm609, %v1585, %v1598
        %v1610 = vsel %vm608, %v1586, %v1603
        %v1611 = vsel %vm609, %v1587, %v1599
        %v1612 = vrot.slane %v1580, 1
        %v1613 = vrot.slane %v1582, 1
        %v1614 = vrot.slane %v1584, 1
        %v1615 = vrot.slane %v1586, 1
        %v1616 = vrot.slane %v1581, 1
        %v1617 = vrot.slane %v1583, 1
        %v1618 = vrot.slane %v1585, 1
        %v1619 = vrot.slane %v1587, 1
        %v1620 = vsel %vm626, %v1612, %v1616
        %v1621 = vsel %vm626, %v1613, %v1617
        %v1622 = vsel %vm626, %v1614, %v1618
        %v1623 = vsel %vm626, %v1615, %v1619
        %v1624 = vsel %vm626, %v1616, %v1612
        %v1625 = vsel %vm626, %v1617, %v1613
        %v1626 = vsel %vm626, %v1618, %v1614
        %v1627 = vsel %vm626, %v1619, %v1615
        %v1628 = vsel %vm637, %v1580, %v1620
        %v1629 = vsel %vm638, %v1581, %v1624
        %v1630 = vsel %vm637, %v1582, %v1621
        %v1631 = vsel %vm638, %v1583, %v1625
        %v1632 = vsel %vm637, %v1584, %v1622
        %v1633 = vsel %vm638, %v1585, %v1626
        %v1634 = vsel %vm637, %v1586, %v1623
        %v1635 = vsel %vm638, %v1587, %v1627
        %v1636 = vmax.f32 %v1604, %v1628
        %v1637 = vmax.f32 %v1605, %v1629
        %v1638 = vmax.f32 %v1606, %v1630
        %v1639 = vmax.f32 %v1607, %v1631
        %v1640 = vmax.f32 %v1608, %v1632
        %v1641 = vmax.f32 %v1609, %v1633
        %v1642 = vmax.f32 %v1610, %v1634
        %v1643 = vmax.f32 %v1611, %v1635
        %v1644 = vmax.f32 %v1580, %v1636
        %v1645 = vmax.f32 %v1581, %v1637
        %v1646 = vmax.f32 %v1582, %v1638
        %v1647 = vmax.f32 %v1583, %v1639
        %v1648 = vmax.f32 %v1584, %v1640
        %v1649 = vmax.f32 %v1585, %v1641
        %v1650 = vmax.f32 %v1586, %v1642
        %v1651 = vmax.f32 %v1587, %v1643
        %1652 = vrot.lane.b32.xlu0 %v1644, 16
        %v1653 = vpop.permute.xlu0 %1652
        %v1654 = vsel %vm663, %v1653, %v1644
        %1655 = vrot.lane.b32.xlu0 %v1645, 16
        %v1656 = vpop.permute.xlu0 %1655
        %v1657 = vsel %vm663, %v1656, %v1645
        %1658 = vrot.lane.b32.xlu0 %v1646, 16
        %v1659 = vpop.permute.xlu0 %1658
        %v1660 = vsel %vm663, %v1659, %v1646
        %1661 = vrot.lane.b32.xlu0 %v1647, 16
        %v1662 = vpop.permute.xlu0 %1661
        %v1663 = vsel %vm663, %v1662, %v1647
        %1664 = vrot.lane.b32.xlu0 %v1648, 16
        %v1665 = vpop.permute.xlu0 %1664
        %v1666 = vsel %vm663, %v1665, %v1648
        %1667 = vrot.lane.b32.xlu0 %v1649, 16
        %v1668 = vpop.permute.xlu0 %1667
        %v1669 = vsel %vm663, %v1668, %v1649
        %1670 = vrot.lane.b32.xlu0 %v1650, 16
        %v1671 = vpop.permute.xlu0 %1670
        %v1672 = vsel %vm663, %v1671, %v1650
        %1673 = vrot.lane.b32.xlu0 %v1651, 16
        %v1674 = vpop.permute.xlu0 %1673
        %v1675 = vsel %vm663, %v1674, %v1651
        %1676 = vrot.lane.b32.xlu0 %v1654, 16
        %v1677 = vpop.permute.xlu0 %1676
        %1678 = vrot.lane.b32.xlu0 %v1657, 16
        %v1679 = vpop.permute.xlu0 %1678
        %1680 = vrot.lane.b32.xlu0 %v1660, 16
        %v1681 = vpop.permute.xlu0 %1680
        %1682 = vrot.lane.b32.xlu0 %v1663, 16
        %v1683 = vpop.permute.xlu0 %1682
        %1684 = vrot.lane.b32.xlu0 %v1666, 16
        %v1685 = vpop.permute.xlu0 %1684
        %1686 = vrot.lane.b32.xlu0 %v1669, 16
        %v1687 = vpop.permute.xlu0 %1686
        %1688 = vrot.lane.b32.xlu0 %v1672, 16
        %v1689 = vpop.permute.xlu0 %1688
        %1690 = vrot.lane.b32.xlu0 %v1675, 16
        %v1691 = vpop.permute.xlu0 %1690
        %v1692 = vsel %vm663, %v1677, %v1644
        %v1693 = vsel %vm663, %v1679, %v1645
        %v1694 = vsel %vm663, %v1681, %v1646
        %v1695 = vsel %vm663, %v1683, %v1647
        %v1696 = vsel %vm663, %v1685, %v1648
        %v1697 = vsel %vm663, %v1687, %v1649
        %v1698 = vsel %vm663, %v1689, %v1650
        %v1699 = vsel %vm663, %v1691, %v1651
        %1708 = vrot.lane.b32.xlu0 %v1692, 113
        %v1709 = vpop.permute.xlu0 %1708
        %1710 = vrot.lane.b32.xlu0 %v1693, 113
        %v1711 = vpop.permute.xlu0 %1710
        %1712 = vrot.lane.b32.xlu0 %v1694, 113
        %v1713 = vpop.permute.xlu0 %1712
        %1714 = vrot.lane.b32.xlu0 %v1695, 113
        %v1715 = vpop.permute.xlu0 %1714
        %1716 = vrot.lane.b32.xlu0 %v1696, 113
        %v1717 = vpop.permute.xlu0 %1716
        %1718 = vrot.lane.b32.xlu0 %v1697, 113
        %v1719 = vpop.permute.xlu0 %1718
        %1720 = vrot.lane.b32.xlu0 %v1698, 113
        %v1721 = vpop.permute.xlu0 %1720
        %1722 = vrot.lane.b32.xlu0 %v1699, 113
        %v1723 = vpop.permute.xlu0 %1722
        %v1732 = vsel %vm713, %v1644, %v1709
        %v1733 = vsel %vm713, %v1645, %v1711
        %v1734 = vsel %vm713, %v1646, %v1713
        %v1735 = vsel %vm713, %v1647, %v1715
        %v1736 = vsel %vm713, %v1648, %v1717
        %v1737 = vsel %vm713, %v1649, %v1719
        %v1738 = vsel %vm713, %v1650, %v1721
        %v1739 = vsel %vm713, %v1651, %v1723
        %1740 = vrot.lane.b32.xlu0 %v1692, 127
        %v1741 = vpop.permute.xlu0 %1740
        %1742 = vrot.lane.b32.xlu0 %v1693, 127
        %v1743 = vpop.permute.xlu0 %1742
        %1744 = vrot.lane.b32.xlu0 %v1694, 127
        %v1745 = vpop.permute.xlu0 %1744
        %1746 = vrot.lane.b32.xlu0 %v1695, 127
        %v1747 = vpop.permute.xlu0 %1746
        %1748 = vrot.lane.b32.xlu0 %v1696, 127
        %v1749 = vpop.permute.xlu0 %1748
        %1750 = vrot.lane.b32.xlu0 %v1697, 127
        %v1751 = vpop.permute.xlu0 %1750
        %1752 = vrot.lane.b32.xlu0 %v1698, 127
        %v1753 = vpop.permute.xlu0 %1752
        %1754 = vrot.lane.b32.xlu0 %v1699, 127
        %v1755 = vpop.permute.xlu0 %1754
        %v1764 = vsel %vm755, %v1644, %v1741
        %v1765 = vsel %vm755, %v1645, %v1743
        %v1766 = vsel %vm755, %v1646, %v1745
        %v1767 = vsel %vm755, %v1647, %v1747
        %v1768 = vsel %vm755, %v1648, %v1749
        %v1769 = vsel %vm755, %v1649, %v1751
        %v1770 = vsel %vm755, %v1650, %v1753
        %v1771 = vsel %vm755, %v1651, %v1755
        %v1772 = vmax.f32 %v1732, %v1764
        %v1773 = vmax.f32 %v1733, %v1765
        %v1774 = vmax.f32 %v1734, %v1766
        %v1775 = vmax.f32 %v1735, %v1767
        %v1776 = vmax.f32 %v1736, %v1768
        %v1777 = vmax.f32 %v1737, %v1769
        %v1778 = vmax.f32 %v1738, %v1770
        %v1779 = vmax.f32 %v1739, %v1771
        %v1780 = vmax.f32 %v1644, %v1772
        %v1781 = vmax.f32 %v1645, %v1773
        %v1782 = vmax.f32 %v1646, %v1774
        %v1783 = vmax.f32 %v1647, %v1775
        %v1784 = vmax.f32 %v1648, %v1776
        %v1785 = vmax.f32 %v1649, %v1777
        %v1786 = vmax.f32 %v1650, %v1778
        %v1787 = vmax.f32 %v1651, %v1779
        %v1788 = vsub.f32 %v1180, %v1780
        %v1789 = vsub.f32 %v1181, %v1781
        %v1790 = vsub.f32 %v1182, %v1782
        %v1791 = vsub.f32 %v1183, %v1783
        %v1792 = vsub.f32 %v1184, %v1784
        %v1793 = vsub.f32 %v1185, %v1785
        %v1794 = vsub.f32 %v1186, %v1786
        %v1795 = vsub.f32 %v1187, %v1787
        %v1796 = vmax.f32 %v1788, 0.0
        %v1797 = vmax.f32 %v1789, 0.0
        %v1798 = vmax.f32 %v1790, 0.0
        %v1799 = vmax.f32 %v1791, 0.0
        %v1800 = vmax.f32 %v1792, 0.0
        %v1801 = vmax.f32 %v1793, 0.0
        %v1802 = vmax.f32 %v1794, 0.0
        %v1803 = vmax.f32 %v1795, 0.0
        %v1804 = vadd.f32 %v1420, %v1796
        %v1805 = vadd.f32 %v1421, %v1797
        %v1806 = vadd.f32 %v1422, %v1798
        %v1807 = vadd.f32 %v1423, %v1799
        %v1808 = vadd.f32 %v1424, %v1800
        %v1809 = vadd.f32 %v1425, %v1801
        %v1810 = vadd.f32 %v1426, %v1802
        %v1811 = vadd.f32 %v1427, %v1803
        %v1812 = vmul.f32 %v1420, %v1796
        %v1813 = vmul.f32 %v1421, %v1797
        %v1814 = vmul.f32 %v1422, %v1798
        %v1815 = vmul.f32 %v1423, %v1799
        %v1816 = vmul.f32 %v1424, %v1800
        %v1817 = vmul.f32 %v1425, %v1801
        %v1818 = vmul.f32 %v1426, %v1802
        %v1819 = vmul.f32 %v1427, %v1803
        %v1820 = vsub.f32 %v1804, %v1812
        %v1821 = vsub.f32 %v1805, %v1813
        %v1822 = vsub.f32 %v1806, %v1814
        %v1823 = vsub.f32 %v1807, %v1815
        %v1824 = vsub.f32 %v1808, %v1816
        %v1825 = vsub.f32 %v1809, %v1817
        %v1826 = vsub.f32 %v1810, %v1818
        %v1827 = vsub.f32 %v1811, %v1819
        %v1828 = vmin.f32 %v1604, %v1628
        %v1829 = vmin.f32 %v1605, %v1629
        %v1830 = vmin.f32 %v1606, %v1630
        %v1831 = vmin.f32 %v1607, %v1631
        %v1832 = vmin.f32 %v1608, %v1632
        %v1833 = vmin.f32 %v1609, %v1633
        %v1834 = vmin.f32 %v1610, %v1634
        %v1835 = vmin.f32 %v1611, %v1635
        %v1836 = vmin.f32 %v1580, %v1828
        %v1837 = vmin.f32 %v1581, %v1829
        %v1838 = vmin.f32 %v1582, %v1830
        %v1839 = vmin.f32 %v1583, %v1831
        %v1840 = vmin.f32 %v1584, %v1832
        %v1841 = vmin.f32 %v1585, %v1833
        %v1842 = vmin.f32 %v1586, %v1834
        %v1843 = vmin.f32 %v1587, %v1835
        %1844 = vrot.lane.b32.xlu0 %v1580, 16
        %v1845 = vpop.permute.xlu0 %1844
        %v1846 = vsel %vm663, %v1845, %v1580
        %1847 = vrot.lane.b32.xlu0 %v1581, 16
        %v1848 = vpop.permute.xlu0 %1847
        %v1849 = vsel %vm663, %v1848, %v1581
        %1850 = vrot.lane.b32.xlu0 %v1582, 16
        %v1851 = vpop.permute.xlu0 %1850
        %v1852 = vsel %vm663, %v1851, %v1582
        %1853 = vrot.lane.b32.xlu0 %v1583, 16
        %v1854 = vpop.permute.xlu0 %1853
        %v1855 = vsel %vm663, %v1854, %v1583
        %1856 = vrot.lane.b32.xlu0 %v1584, 16
        %v1857 = vpop.permute.xlu0 %1856
        %v1858 = vsel %vm663, %v1857, %v1584
        %1859 = vrot.lane.b32.xlu0 %v1585, 16
        %v1860 = vpop.permute.xlu0 %1859
        %v1861 = vsel %vm663, %v1860, %v1585
        %1862 = vrot.lane.b32.xlu0 %v1586, 16
        %v1863 = vpop.permute.xlu0 %1862
        %v1864 = vsel %vm663, %v1863, %v1586
        %1865 = vrot.lane.b32.xlu0 %v1587, 16
        %v1866 = vpop.permute.xlu0 %1865
        %v1867 = vsel %vm663, %v1866, %v1587
        %1868 = vrot.lane.b32.xlu0 %v1846, 16
        %v1869 = vpop.permute.xlu0 %1868
        %1870 = vrot.lane.b32.xlu0 %v1849, 16
        %v1871 = vpop.permute.xlu0 %1870
        %1872 = vrot.lane.b32.xlu0 %v1852, 16
        %v1873 = vpop.permute.xlu0 %1872
        %1874 = vrot.lane.b32.xlu0 %v1855, 16
        %v1875 = vpop.permute.xlu0 %1874
        %1876 = vrot.lane.b32.xlu0 %v1858, 16
        %v1877 = vpop.permute.xlu0 %1876
        %1878 = vrot.lane.b32.xlu0 %v1861, 16
        %v1879 = vpop.permute.xlu0 %1878
        %1880 = vrot.lane.b32.xlu0 %v1864, 16
        %v1881 = vpop.permute.xlu0 %1880
        %1882 = vrot.lane.b32.xlu0 %v1867, 16
        %v1883 = vpop.permute.xlu0 %1882
        %v1884 = vsel %vm663, %v1869, %v1580
        %v1885 = vsel %vm663, %v1871, %v1581
        %v1886 = vsel %vm663, %v1873, %v1582
        %v1887 = vsel %vm663, %v1875, %v1583
        %v1888 = vsel %vm663, %v1877, %v1584
        %v1889 = vsel %vm663, %v1879, %v1585
        %v1890 = vsel %vm663, %v1881, %v1586
        %v1891 = vsel %vm663, %v1883, %v1587
        %1900 = vrot.lane.b32.xlu0 %v1884, 113
        %v1901 = vpop.permute.xlu0 %1900
        %1902 = vrot.lane.b32.xlu0 %v1885, 113
        %v1903 = vpop.permute.xlu0 %1902
        %1904 = vrot.lane.b32.xlu0 %v1886, 113
        %v1905 = vpop.permute.xlu0 %1904
        %1906 = vrot.lane.b32.xlu0 %v1887, 113
        %v1907 = vpop.permute.xlu0 %1906
        %1908 = vrot.lane.b32.xlu0 %v1888, 113
        %v1909 = vpop.permute.xlu0 %1908
        %1910 = vrot.lane.b32.xlu0 %v1889, 113
        %v1911 = vpop.permute.xlu0 %1910
        %1912 = vrot.lane.b32.xlu0 %v1890, 113
        %v1913 = vpop.permute.xlu0 %1912
        %1914 = vrot.lane.b32.xlu0 %v1891, 113
        %v1915 = vpop.permute.xlu0 %1914
        %v1924 = vsel %vm713, %v1580, %v1901
        %v1925 = vsel %vm713, %v1581, %v1903
        %v1926 = vsel %vm713, %v1582, %v1905
        %v1927 = vsel %vm713, %v1583, %v1907
        %v1928 = vsel %vm713, %v1584, %v1909
        %v1929 = vsel %vm713, %v1585, %v1911
        %v1930 = vsel %vm713, %v1586, %v1913
        %v1931 = vsel %vm713, %v1587, %v1915
        %1932 = vrot.lane.b32.xlu0 %v1884, 127
        %v1933 = vpop.permute.xlu0 %1932
        %1934 = vrot.lane.b32.xlu0 %v1885, 127
        %v1935 = vpop.permute.xlu0 %1934
        %1936 = vrot.lane.b32.xlu0 %v1886, 127
        %v1937 = vpop.permute.xlu0 %1936
        %1938 = vrot.lane.b32.xlu0 %v1887, 127
        %v1939 = vpop.permute.xlu0 %1938
        %1940 = vrot.lane.b32.xlu0 %v1888, 127
        %v1941 = vpop.permute.xlu0 %1940
        %1942 = vrot.lane.b32.xlu0 %v1889, 127
        %v1943 = vpop.permute.xlu0 %1942
        %1944 = vrot.lane.b32.xlu0 %v1890, 127
        %v1945 = vpop.permute.xlu0 %1944
        %1946 = vrot.lane.b32.xlu0 %v1891, 127
        %v1947 = vpop.permute.xlu0 %1946
        %v1956 = vsel %vm755, %v1580, %v1933
        %v1957 = vsel %vm755, %v1581, %v1935
        %v1958 = vsel %vm755, %v1582, %v1937
        %v1959 = vsel %vm755, %v1583, %v1939
        %v1960 = vsel %vm755, %v1584, %v1941
        %v1961 = vsel %vm755, %v1585, %v1943
        %v1962 = vsel %vm755, %v1586, %v1945
        %v1963 = vsel %vm755, %v1587, %v1947
        %v1964 = vmin.f32 %v1924, %v1956
        %v1965 = vmin.f32 %v1925, %v1957
        %v1966 = vmin.f32 %v1926, %v1958
        %v1967 = vmin.f32 %v1927, %v1959
        %v1968 = vmin.f32 %v1928, %v1960
        %v1969 = vmin.f32 %v1929, %v1961
        %v1970 = vmin.f32 %v1930, %v1962
        %v1971 = vmin.f32 %v1931, %v1963
        %v1972 = vmin.f32 %v1580, %v1964
        %v1973 = vmin.f32 %v1581, %v1965
        %v1974 = vmin.f32 %v1582, %v1966
        %v1975 = vmin.f32 %v1583, %v1967
        %v1976 = vmin.f32 %v1584, %v1968
        %v1977 = vmin.f32 %v1585, %v1969
        %v1978 = vmin.f32 %v1586, %v1970
        %v1979 = vmin.f32 %v1587, %v1971
        %v1980 = vmin.f32 %v1836, %v1972
        %v1981 = vmin.f32 %v1837, %v1973
        %v1982 = vmin.f32 %v1838, %v1974
        %v1983 = vmin.f32 %v1839, %v1975
        %v1984 = vmin.f32 %v1840, %v1976
        %v1985 = vmin.f32 %v1841, %v1977
        %v1986 = vmin.f32 %v1842, %v1978
        %v1987 = vmin.f32 %v1843, %v1979
        %v1988 = vrot.slane %v1980, 7
        %v1989 = vrot.slane %v1982, 7
        %v1990 = vrot.slane %v1984, 7
        %v1991 = vrot.slane %v1986, 7
        %v1992 = vrot.slane %v1981, 7
        %v1993 = vrot.slane %v1983, 7
        %v1994 = vrot.slane %v1985, 7
        %v1995 = vrot.slane %v1987, 7
        %v1996 = vsel %vm597, %v1988, %v1992
        %v1997 = vsel %vm597, %v1989, %v1993
        %v1998 = vsel %vm597, %v1990, %v1994
        %v1999 = vsel %vm597, %v1991, %v1995
        %v2000 = vsel %vm597, %v1992, %v1988
        %v2001 = vsel %vm597, %v1993, %v1989
        %v2002 = vsel %vm597, %v1994, %v1990
        %v2003 = vsel %vm597, %v1995, %v1991
        %v2004 = vsel %vm608, %v1980, %v2000
        %v2005 = vsel %vm609, %v1981, %v1996
        %v2006 = vsel %vm608, %v1982, %v2001
        %v2007 = vsel %vm609, %v1983, %v1997
        %v2008 = vsel %vm608, %v1984, %v2002
        %v2009 = vsel %vm609, %v1985, %v1998
        %v2010 = vsel %vm608, %v1986, %v2003
        %v2011 = vsel %vm609, %v1987, %v1999
        %v2012 = vrot.slane %v1980, 1
        %v2013 = vrot.slane %v1982, 1
        %v2014 = vrot.slane %v1984, 1
        %v2015 = vrot.slane %v1986, 1
        %v2016 = vrot.slane %v1981, 1
        %v2017 = vrot.slane %v1983, 1
        %v2018 = vrot.slane %v1985, 1
        %v2019 = vrot.slane %v1987, 1
        %v2020 = vsel %vm626, %v2012, %v2016
        %v2021 = vsel %vm626, %v2013, %v2017
        %v2022 = vsel %vm626, %v2014, %v2018
        %v2023 = vsel %vm626, %v2015, %v2019
        %v2024 = vsel %vm626, %v2016, %v2012
        %v2025 = vsel %vm626, %v2017, %v2013
        %v2026 = vsel %vm626, %v2018, %v2014
        %v2027 = vsel %vm626, %v2019, %v2015
        %v2028 = vsel %vm637, %v1980, %v2020
        %v2029 = vsel %vm638, %v1981, %v2024
        %v2030 = vsel %vm637, %v1982, %v2021
        %v2031 = vsel %vm638, %v1983, %v2025
        %v2032 = vsel %vm637, %v1984, %v2022
        %v2033 = vsel %vm638, %v1985, %v2026
        %v2034 = vsel %vm637, %v1986, %v2023
        %v2035 = vsel %vm638, %v1987, %v2027
        %v2036 = vmax.f32 %v2004, %v2028
        %v2037 = vmax.f32 %v2005, %v2029
        %v2038 = vmax.f32 %v2006, %v2030
        %v2039 = vmax.f32 %v2007, %v2031
        %v2040 = vmax.f32 %v2008, %v2032
        %v2041 = vmax.f32 %v2009, %v2033
        %v2042 = vmax.f32 %v2010, %v2034
        %v2043 = vmax.f32 %v2011, %v2035
        %v2044 = vmax.f32 %v1980, %v2036
        %v2045 = vmax.f32 %v1981, %v2037
        %v2046 = vmax.f32 %v1982, %v2038
        %v2047 = vmax.f32 %v1983, %v2039
        %v2048 = vmax.f32 %v1984, %v2040
        %v2049 = vmax.f32 %v1985, %v2041
        %v2050 = vmax.f32 %v1986, %v2042
        %v2051 = vmax.f32 %v1987, %v2043
        %2052 = vrot.lane.b32.xlu0 %v2044, 16
        %v2053 = vpop.permute.xlu0 %2052
        %v2054 = vsel %vm663, %v2053, %v2044
        %2055 = vrot.lane.b32.xlu0 %v2045, 16
        %v2056 = vpop.permute.xlu0 %2055
        %v2057 = vsel %vm663, %v2056, %v2045
        %2058 = vrot.lane.b32.xlu0 %v2046, 16
        %v2059 = vpop.permute.xlu0 %2058
        %v2060 = vsel %vm663, %v2059, %v2046
        %2061 = vrot.lane.b32.xlu0 %v2047, 16
        %v2062 = vpop.permute.xlu0 %2061
        %v2063 = vsel %vm663, %v2062, %v2047
        %2064 = vrot.lane.b32.xlu0 %v2048, 16
        %v2065 = vpop.permute.xlu0 %2064
        %v2066 = vsel %vm663, %v2065, %v2048
        %2067 = vrot.lane.b32.xlu0 %v2049, 16
        %v2068 = vpop.permute.xlu0 %2067
        %v2069 = vsel %vm663, %v2068, %v2049
        %2070 = vrot.lane.b32.xlu0 %v2050, 16
        %v2071 = vpop.permute.xlu0 %2070
        %v2072 = vsel %vm663, %v2071, %v2050
        %2073 = vrot.lane.b32.xlu0 %v2051, 16
        %v2074 = vpop.permute.xlu0 %2073
        %v2075 = vsel %vm663, %v2074, %v2051
        %2076 = vrot.lane.b32.xlu0 %v2054, 16
        %v2077 = vpop.permute.xlu0 %2076
        %2078 = vrot.lane.b32.xlu0 %v2057, 16
        %v2079 = vpop.permute.xlu0 %2078
        %2080 = vrot.lane.b32.xlu0 %v2060, 16
        %v2081 = vpop.permute.xlu0 %2080
        %2082 = vrot.lane.b32.xlu0 %v2063, 16
        %v2083 = vpop.permute.xlu0 %2082
        %2084 = vrot.lane.b32.xlu0 %v2066, 16
        %v2085 = vpop.permute.xlu0 %2084
        %2086 = vrot.lane.b32.xlu0 %v2069, 16
        %v2087 = vpop.permute.xlu0 %2086
        %2088 = vrot.lane.b32.xlu0 %v2072, 16
        %v2089 = vpop.permute.xlu0 %2088
        %2090 = vrot.lane.b32.xlu0 %v2075, 16
        %v2091 = vpop.permute.xlu0 %2090
        %v2092 = vsel %vm663, %v2077, %v2044
        %v2093 = vsel %vm663, %v2079, %v2045
        %v2094 = vsel %vm663, %v2081, %v2046
        %v2095 = vsel %vm663, %v2083, %v2047
        %v2096 = vsel %vm663, %v2085, %v2048
        %v2097 = vsel %vm663, %v2087, %v2049
        %v2098 = vsel %vm663, %v2089, %v2050
        %v2099 = vsel %vm663, %v2091, %v2051
        %2108 = vrot.lane.b32.xlu0 %v2092, 113
        %v2109 = vpop.permute.xlu0 %2108
        %2110 = vrot.lane.b32.xlu0 %v2093, 113
        %v2111 = vpop.permute.xlu0 %2110
        %2112 = vrot.lane.b32.xlu0 %v2094, 113
        %v2113 = vpop.permute.xlu0 %2112
        %2114 = vrot.lane.b32.xlu0 %v2095, 113
        %v2115 = vpop.permute.xlu0 %2114
        %2116 = vrot.lane.b32.xlu0 %v2096, 113
        %v2117 = vpop.permute.xlu0 %2116
        %2118 = vrot.lane.b32.xlu0 %v2097, 113
        %v2119 = vpop.permute.xlu0 %2118
        %2120 = vrot.lane.b32.xlu0 %v2098, 113
        %v2121 = vpop.permute.xlu0 %2120
        %2122 = vrot.lane.b32.xlu0 %v2099, 113
        %v2123 = vpop.permute.xlu0 %2122
        %v2132 = vsel %vm713, %v2044, %v2109
        %v2133 = vsel %vm713, %v2045, %v2111
        %v2134 = vsel %vm713, %v2046, %v2113
        %v2135 = vsel %vm713, %v2047, %v2115
        %v2136 = vsel %vm713, %v2048, %v2117
        %v2137 = vsel %vm713, %v2049, %v2119
        %v2138 = vsel %vm713, %v2050, %v2121
        %v2139 = vsel %vm713, %v2051, %v2123
        %2140 = vrot.lane.b32.xlu0 %v2092, 127
        %v2141 = vpop.permute.xlu0 %2140
        %2142 = vrot.lane.b32.xlu0 %v2093, 127
        %v2143 = vpop.permute.xlu0 %2142
        %2144 = vrot.lane.b32.xlu0 %v2094, 127
        %v2145 = vpop.permute.xlu0 %2144
        %2146 = vrot.lane.b32.xlu0 %v2095, 127
        %v2147 = vpop.permute.xlu0 %2146
        %2148 = vrot.lane.b32.xlu0 %v2096, 127
        %v2149 = vpop.permute.xlu0 %2148
        %2150 = vrot.lane.b32.xlu0 %v2097, 127
        %v2151 = vpop.permute.xlu0 %2150
        %2152 = vrot.lane.b32.xlu0 %v2098, 127
        %v2153 = vpop.permute.xlu0 %2152
        %2154 = vrot.lane.b32.xlu0 %v2099, 127
        %v2155 = vpop.permute.xlu0 %2154
        %v2164 = vsel %vm755, %v2044, %v2141
        %v2165 = vsel %vm755, %v2045, %v2143
        %v2166 = vsel %vm755, %v2046, %v2145
        %v2167 = vsel %vm755, %v2047, %v2147
        %v2168 = vsel %vm755, %v2048, %v2149
        %v2169 = vsel %vm755, %v2049, %v2151
        %v2170 = vsel %vm755, %v2050, %v2153
        %v2171 = vsel %vm755, %v2051, %v2155
        %v2172 = vmax.f32 %v2132, %v2164
        %v2173 = vmax.f32 %v2133, %v2165
        %v2174 = vmax.f32 %v2134, %v2166
        %v2175 = vmax.f32 %v2135, %v2167
        %v2176 = vmax.f32 %v2136, %v2168
        %v2177 = vmax.f32 %v2137, %v2169
        %v2178 = vmax.f32 %v2138, %v2170
        %v2179 = vmax.f32 %v2139, %v2171
        %v2180 = vmax.f32 %v2044, %v2172
        %v2181 = vmax.f32 %v2045, %v2173
        %v2182 = vmax.f32 %v2046, %v2174
        %v2183 = vmax.f32 %v2047, %v2175
        %v2184 = vmax.f32 %v2048, %v2176
        %v2185 = vmax.f32 %v2049, %v2177
        %v2186 = vmax.f32 %v2050, %v2178
        %v2187 = vmax.f32 %v2051, %v2179
        %v2188 = vsub.f32 %v1580, %v2180
        %v2189 = vsub.f32 %v1581, %v2181
        %v2190 = vsub.f32 %v1582, %v2182
        %v2191 = vsub.f32 %v1583, %v2183
        %v2192 = vsub.f32 %v1584, %v2184
        %v2193 = vsub.f32 %v1585, %v2185
        %v2194 = vsub.f32 %v1586, %v2186
        %v2195 = vsub.f32 %v1587, %v2187
        %v2196 = vmax.f32 %v2188, 0.0
        %v2197 = vmax.f32 %v2189, 0.0
        %v2198 = vmax.f32 %v2190, 0.0
        %v2199 = vmax.f32 %v2191, 0.0
        %v2200 = vmax.f32 %v2192, 0.0
        %v2201 = vmax.f32 %v2193, 0.0
        %v2202 = vmax.f32 %v2194, 0.0
        %v2203 = vmax.f32 %v2195, 0.0
        %v2204 = vadd.f32 %v1820, %v2196
        %v2205 = vadd.f32 %v1821, %v2197
        %v2206 = vadd.f32 %v1822, %v2198
        %v2207 = vadd.f32 %v1823, %v2199
        %v2208 = vadd.f32 %v1824, %v2200
        %v2209 = vadd.f32 %v1825, %v2201
        %v2210 = vadd.f32 %v1826, %v2202
        %v2211 = vadd.f32 %v1827, %v2203
        %v2212 = vmul.f32 %v1820, %v2196
        %v2213 = vmul.f32 %v1821, %v2197
        %v2214 = vmul.f32 %v1822, %v2198
        %v2215 = vmul.f32 %v1823, %v2199
        %v2216 = vmul.f32 %v1824, %v2200
        %v2217 = vmul.f32 %v1825, %v2201
        %v2218 = vmul.f32 %v1826, %v2202
        %v2219 = vmul.f32 %v1827, %v2203
        %v2220 = vsub.f32 %v2204, %v2212
        %v2221 = vsub.f32 %v2205, %v2213
        %v2222 = vsub.f32 %v2206, %v2214
        %v2223 = vsub.f32 %v2207, %v2215
        %v2224 = vsub.f32 %v2208, %v2216
        %v2225 = vsub.f32 %v2209, %v2217
        %v2226 = vsub.f32 %v2210, %v2218
        %v2227 = vsub.f32 %v2211, %v2219
        %v2228 = vrot.slane %v214, 7
        %v2229 = vrot.slane %v216, 7
        %v2230 = vrot.slane %v218, 7
        %v2231 = vrot.slane %v220, 7
        %v2232 = vrot.slane %v215, 7
        %v2233 = vrot.slane %v217, 7
        %v2234 = vrot.slane %v219, 7
        %v2235 = vrot.slane %v221, 7
        %v2236 = vsel %vm597, %v2228, %v2232
        %v2237 = vsel %vm597, %v2229, %v2233
        %v2238 = vsel %vm597, %v2230, %v2234
        %v2239 = vsel %vm597, %v2231, %v2235
        %v2240 = vsel %vm597, %v2232, %v2228
        %v2241 = vsel %vm597, %v2233, %v2229
        %v2242 = vsel %vm597, %v2234, %v2230
        %v2243 = vsel %vm597, %v2235, %v2231
        %v2244 = vsel %vm608, %v214, %v2240
        %v2245 = vsel %vm609, %v215, %v2236
        %v2246 = vsel %vm608, %v216, %v2241
        %v2247 = vsel %vm609, %v217, %v2237
        %v2248 = vsel %vm608, %v218, %v2242
        %v2249 = vsel %vm609, %v219, %v2238
        %v2250 = vsel %vm608, %v220, %v2243
        %v2251 = vsel %vm609, %v221, %v2239
        %v2252 = vrot.slane %v214, 1
        %v2253 = vrot.slane %v216, 1
        %v2254 = vrot.slane %v218, 1
        %v2255 = vrot.slane %v220, 1
        %v2256 = vrot.slane %v215, 1
        %v2257 = vrot.slane %v217, 1
        %v2258 = vrot.slane %v219, 1
        %v2259 = vrot.slane %v221, 1
        %v2260 = vsel %vm626, %v2252, %v2256
        %v2261 = vsel %vm626, %v2253, %v2257
        %v2262 = vsel %vm626, %v2254, %v2258
        %v2263 = vsel %vm626, %v2255, %v2259
        %v2264 = vsel %vm626, %v2256, %v2252
        %v2265 = vsel %vm626, %v2257, %v2253
        %v2266 = vsel %vm626, %v2258, %v2254
        %v2267 = vsel %vm626, %v2259, %v2255
        %v2268 = vsel %vm637, %v214, %v2260
        %v2269 = vsel %vm638, %v215, %v2264
        %v2270 = vsel %vm637, %v216, %v2261
        %v2271 = vsel %vm638, %v217, %v2265
        %v2272 = vsel %vm637, %v218, %v2262
        %v2273 = vsel %vm638, %v219, %v2266
        %v2274 = vsel %vm637, %v220, %v2263
        %v2275 = vsel %vm638, %v221, %v2267
        %v2276 = vmin.f32 %v2244, %v2268
        %v2277 = vmin.f32 %v2245, %v2269
        %v2278 = vmin.f32 %v2246, %v2270
        %v2279 = vmin.f32 %v2247, %v2271
        %v2280 = vmin.f32 %v2248, %v2272
        %v2281 = vmin.f32 %v2249, %v2273
        %v2282 = vmin.f32 %v2250, %v2274
        %v2283 = vmin.f32 %v2251, %v2275
        %v2284 = vmin.f32 %v214, %v2276
        %v2285 = vmin.f32 %v215, %v2277
        %v2286 = vmin.f32 %v216, %v2278
        %v2287 = vmin.f32 %v217, %v2279
        %v2288 = vmin.f32 %v218, %v2280
        %v2289 = vmin.f32 %v219, %v2281
        %v2290 = vmin.f32 %v220, %v2282
        %v2291 = vmin.f32 %v221, %v2283
        %2292 = vrot.lane.b32.xlu0 %v214, 16
        %v2293 = vpop.permute.xlu0 %2292
        %v2294 = vsel %vm663, %v2293, %v214
        %2295 = vrot.lane.b32.xlu0 %v215, 16
        %v2296 = vpop.permute.xlu0 %2295
        %v2297 = vsel %vm663, %v2296, %v215
        %2298 = vrot.lane.b32.xlu0 %v216, 16
        %v2299 = vpop.permute.xlu0 %2298
        %v2300 = vsel %vm663, %v2299, %v216
        %2301 = vrot.lane.b32.xlu0 %v217, 16
        %v2302 = vpop.permute.xlu0 %2301
        %v2303 = vsel %vm663, %v2302, %v217
        %2304 = vrot.lane.b32.xlu0 %v218, 16
        %v2305 = vpop.permute.xlu0 %2304
        %v2306 = vsel %vm663, %v2305, %v218
        %2307 = vrot.lane.b32.xlu0 %v219, 16
        %v2308 = vpop.permute.xlu0 %2307
        %v2309 = vsel %vm663, %v2308, %v219
        %2310 = vrot.lane.b32.xlu0 %v220, 16
        %v2311 = vpop.permute.xlu0 %2310
        %v2312 = vsel %vm663, %v2311, %v220
        %2313 = vrot.lane.b32.xlu0 %v221, 16
        %v2314 = vpop.permute.xlu0 %2313
        %v2315 = vsel %vm663, %v2314, %v221
        %2316 = vrot.lane.b32.xlu0 %v2294, 16
        %v2317 = vpop.permute.xlu0 %2316
        %2318 = vrot.lane.b32.xlu0 %v2297, 16
        %v2319 = vpop.permute.xlu0 %2318
        %2320 = vrot.lane.b32.xlu0 %v2300, 16
        %v2321 = vpop.permute.xlu0 %2320
        %2322 = vrot.lane.b32.xlu0 %v2303, 16
        %v2323 = vpop.permute.xlu0 %2322
        %2324 = vrot.lane.b32.xlu0 %v2306, 16
        %v2325 = vpop.permute.xlu0 %2324
        %2326 = vrot.lane.b32.xlu0 %v2309, 16
        %v2327 = vpop.permute.xlu0 %2326
        %2328 = vrot.lane.b32.xlu0 %v2312, 16
        %v2329 = vpop.permute.xlu0 %2328
        %2330 = vrot.lane.b32.xlu0 %v2315, 16
        %v2331 = vpop.permute.xlu0 %2330
        %v2332 = vsel %vm663, %v2317, %v214
        %v2333 = vsel %vm663, %v2319, %v215
        %v2334 = vsel %vm663, %v2321, %v216
        %v2335 = vsel %vm663, %v2323, %v217
        %v2336 = vsel %vm663, %v2325, %v218
        %v2337 = vsel %vm663, %v2327, %v219
        %v2338 = vsel %vm663, %v2329, %v220
        %v2339 = vsel %vm663, %v2331, %v221
        %2348 = vrot.lane.b32.xlu0 %v2332, 113
        %v2349 = vpop.permute.xlu0 %2348
        %2350 = vrot.lane.b32.xlu0 %v2333, 113
        %v2351 = vpop.permute.xlu0 %2350
        %2352 = vrot.lane.b32.xlu0 %v2334, 113
        %v2353 = vpop.permute.xlu0 %2352
        %2354 = vrot.lane.b32.xlu0 %v2335, 113
        %v2355 = vpop.permute.xlu0 %2354
        %2356 = vrot.lane.b32.xlu0 %v2336, 113
        %v2357 = vpop.permute.xlu0 %2356
        %2358 = vrot.lane.b32.xlu0 %v2337, 113
        %v2359 = vpop.permute.xlu0 %2358
        %2360 = vrot.lane.b32.xlu0 %v2338, 113
        %v2361 = vpop.permute.xlu0 %2360
        %2362 = vrot.lane.b32.xlu0 %v2339, 113
        %v2363 = vpop.permute.xlu0 %2362
        %v2372 = vsel %vm713, %v214, %v2349
        %v2373 = vsel %vm713, %v215, %v2351
        %v2374 = vsel %vm713, %v216, %v2353
        %v2375 = vsel %vm713, %v217, %v2355
        %v2376 = vsel %vm713, %v218, %v2357
        %v2377 = vsel %vm713, %v219, %v2359
        %v2378 = vsel %vm713, %v220, %v2361
        %v2379 = vsel %vm713, %v221, %v2363
        %2380 = vrot.lane.b32.xlu0 %v2332, 127
        %v2381 = vpop.permute.xlu0 %2380
        %2382 = vrot.lane.b32.xlu0 %v2333, 127
        %v2383 = vpop.permute.xlu0 %2382
        %2384 = vrot.lane.b32.xlu0 %v2334, 127
        %v2385 = vpop.permute.xlu0 %2384
        %2386 = vrot.lane.b32.xlu0 %v2335, 127
        %v2387 = vpop.permute.xlu0 %2386
        %2388 = vrot.lane.b32.xlu0 %v2336, 127
        %v2389 = vpop.permute.xlu0 %2388
        %2390 = vrot.lane.b32.xlu0 %v2337, 127
        %v2391 = vpop.permute.xlu0 %2390
        %2392 = vrot.lane.b32.xlu0 %v2338, 127
        %v2393 = vpop.permute.xlu0 %2392
        %2394 = vrot.lane.b32.xlu0 %v2339, 127
        %v2395 = vpop.permute.xlu0 %2394
        %v2404 = vsel %vm755, %v214, %v2381
        %v2405 = vsel %vm755, %v215, %v2383
        %v2406 = vsel %vm755, %v216, %v2385
        %v2407 = vsel %vm755, %v217, %v2387
        %v2408 = vsel %vm755, %v218, %v2389
        %v2409 = vsel %vm755, %v219, %v2391
        %v2410 = vsel %vm755, %v220, %v2393
        %v2411 = vsel %vm755, %v221, %v2395
        %v2412 = vmin.f32 %v2372, %v2404
        %v2413 = vmin.f32 %v2373, %v2405
        %v2414 = vmin.f32 %v2374, %v2406
        %v2415 = vmin.f32 %v2375, %v2407
        %v2416 = vmin.f32 %v2376, %v2408
        %v2417 = vmin.f32 %v2377, %v2409
        %v2418 = vmin.f32 %v2378, %v2410
        %v2419 = vmin.f32 %v2379, %v2411
        %v2420 = vmin.f32 %v214, %v2412
        %v2421 = vmin.f32 %v215, %v2413
        %v2422 = vmin.f32 %v216, %v2414
        %v2423 = vmin.f32 %v217, %v2415
        %v2424 = vmin.f32 %v218, %v2416
        %v2425 = vmin.f32 %v219, %v2417
        %v2426 = vmin.f32 %v220, %v2418
        %v2427 = vmin.f32 %v221, %v2419
        %v2428 = vmin.f32 %v2284, %v2420
        %v2429 = vmin.f32 %v2285, %v2421
        %v2430 = vmin.f32 %v2286, %v2422
        %v2431 = vmin.f32 %v2287, %v2423
        %v2432 = vmin.f32 %v2288, %v2424
        %v2433 = vmin.f32 %v2289, %v2425
        %v2434 = vmin.f32 %v2290, %v2426
        %v2435 = vmin.f32 %v2291, %v2427
        %v2436 = vrot.slane %v2428, 7
        %v2437 = vrot.slane %v2430, 7
        %v2438 = vrot.slane %v2432, 7
        %v2439 = vrot.slane %v2434, 7
        %v2440 = vrot.slane %v2429, 7
        %v2441 = vrot.slane %v2431, 7
        %v2442 = vrot.slane %v2433, 7
        %v2443 = vrot.slane %v2435, 7
        %v2444 = vsel %vm597, %v2436, %v2440
        %v2445 = vsel %vm597, %v2437, %v2441
        %v2446 = vsel %vm597, %v2438, %v2442
        %v2447 = vsel %vm597, %v2439, %v2443
        %v2448 = vsel %vm597, %v2440, %v2436
        %v2449 = vsel %vm597, %v2441, %v2437
        %v2450 = vsel %vm597, %v2442, %v2438
        %v2451 = vsel %vm597, %v2443, %v2439
        %v2452 = vsel %vm608, %v2428, %v2448
        %v2453 = vsel %vm609, %v2429, %v2444
        %v2454 = vsel %vm608, %v2430, %v2449
        %v2455 = vsel %vm609, %v2431, %v2445
        %v2456 = vsel %vm608, %v2432, %v2450
        %v2457 = vsel %vm609, %v2433, %v2446
        %v2458 = vsel %vm608, %v2434, %v2451
        %v2459 = vsel %vm609, %v2435, %v2447
        %v2460 = vrot.slane %v2428, 1
        %v2461 = vrot.slane %v2430, 1
        %v2462 = vrot.slane %v2432, 1
        %v2463 = vrot.slane %v2434, 1
        %v2464 = vrot.slane %v2429, 1
        %v2465 = vrot.slane %v2431, 1
        %v2466 = vrot.slane %v2433, 1
        %v2467 = vrot.slane %v2435, 1
        %v2468 = vsel %vm626, %v2460, %v2464
        %v2469 = vsel %vm626, %v2461, %v2465
        %v2470 = vsel %vm626, %v2462, %v2466
        %v2471 = vsel %vm626, %v2463, %v2467
        %v2472 = vsel %vm626, %v2464, %v2460
        %v2473 = vsel %vm626, %v2465, %v2461
        %v2474 = vsel %vm626, %v2466, %v2462
        %v2475 = vsel %vm626, %v2467, %v2463
        %v2476 = vsel %vm637, %v2428, %v2468
        %v2477 = vsel %vm638, %v2429, %v2472
        %v2478 = vsel %vm637, %v2430, %v2469
        %v2479 = vsel %vm638, %v2431, %v2473
        %v2480 = vsel %vm637, %v2432, %v2470
        %v2481 = vsel %vm638, %v2433, %v2474
        %v2482 = vsel %vm637, %v2434, %v2471
        %v2483 = vsel %vm638, %v2435, %v2475
        %v2484 = vmax.f32 %v2452, %v2476
        %v2485 = vmax.f32 %v2453, %v2477
        %v2486 = vmax.f32 %v2454, %v2478
        %v2487 = vmax.f32 %v2455, %v2479
        %v2488 = vmax.f32 %v2456, %v2480
        %v2489 = vmax.f32 %v2457, %v2481
        %v2490 = vmax.f32 %v2458, %v2482
        %v2491 = vmax.f32 %v2459, %v2483
        %v2492 = vmax.f32 %v2428, %v2484
        %v2493 = vmax.f32 %v2429, %v2485
        %v2494 = vmax.f32 %v2430, %v2486
        %v2495 = vmax.f32 %v2431, %v2487
        %v2496 = vmax.f32 %v2432, %v2488
        %v2497 = vmax.f32 %v2433, %v2489
        %v2498 = vmax.f32 %v2434, %v2490
        %v2499 = vmax.f32 %v2435, %v2491
        %2500 = vrot.lane.b32.xlu0 %v2492, 16
        %v2501 = vpop.permute.xlu0 %2500
        %v2502 = vsel %vm663, %v2501, %v2492
        %2503 = vrot.lane.b32.xlu0 %v2493, 16
        %v2504 = vpop.permute.xlu0 %2503
        %v2505 = vsel %vm663, %v2504, %v2493
        %2506 = vrot.lane.b32.xlu0 %v2494, 16
        %v2507 = vpop.permute.xlu0 %2506
        %v2508 = vsel %vm663, %v2507, %v2494
        %2509 = vrot.lane.b32.xlu0 %v2495, 16
        %v2510 = vpop.permute.xlu0 %2509
        %v2511 = vsel %vm663, %v2510, %v2495
        %2512 = vrot.lane.b32.xlu0 %v2496, 16
        %v2513 = vpop.permute.xlu0 %2512
        %v2514 = vsel %vm663, %v2513, %v2496
        %2515 = vrot.lane.b32.xlu0 %v2497, 16
        %v2516 = vpop.permute.xlu0 %2515
        %v2517 = vsel %vm663, %v2516, %v2497
        %2518 = vrot.lane.b32.xlu0 %v2498, 16
        %v2519 = vpop.permute.xlu0 %2518
        %v2520 = vsel %vm663, %v2519, %v2498
        %2521 = vrot.lane.b32.xlu0 %v2499, 16
        %v2522 = vpop.permute.xlu0 %2521
        %v2523 = vsel %vm663, %v2522, %v2499
        %2524 = vrot.lane.b32.xlu0 %v2502, 16
        %v2525 = vpop.permute.xlu0 %2524
        %2526 = vrot.lane.b32.xlu0 %v2505, 16
        %v2527 = vpop.permute.xlu0 %2526
        %2528 = vrot.lane.b32.xlu0 %v2508, 16
        %v2529 = vpop.permute.xlu0 %2528
        %2530 = vrot.lane.b32.xlu0 %v2511, 16
        %v2531 = vpop.permute.xlu0 %2530
        %2532 = vrot.lane.b32.xlu0 %v2514, 16
        %v2533 = vpop.permute.xlu0 %2532
        %2534 = vrot.lane.b32.xlu0 %v2517, 16
        %v2535 = vpop.permute.xlu0 %2534
        %2536 = vrot.lane.b32.xlu0 %v2520, 16
        %v2537 = vpop.permute.xlu0 %2536
        %2538 = vrot.lane.b32.xlu0 %v2523, 16
        %v2539 = vpop.permute.xlu0 %2538
        %v2540 = vsel %vm663, %v2525, %v2492
        %v2541 = vsel %vm663, %v2527, %v2493
        %v2542 = vsel %vm663, %v2529, %v2494
        %v2543 = vsel %vm663, %v2531, %v2495
        %v2544 = vsel %vm663, %v2533, %v2496
        %v2545 = vsel %vm663, %v2535, %v2497
        %v2546 = vsel %vm663, %v2537, %v2498
        %v2547 = vsel %vm663, %v2539, %v2499
        %2556 = vrot.lane.b32.xlu0 %v2540, 113
        %v2557 = vpop.permute.xlu0 %2556
        %2558 = vrot.lane.b32.xlu0 %v2541, 113
        %v2559 = vpop.permute.xlu0 %2558
        %2560 = vrot.lane.b32.xlu0 %v2542, 113
        %v2561 = vpop.permute.xlu0 %2560
        %2562 = vrot.lane.b32.xlu0 %v2543, 113
        %v2563 = vpop.permute.xlu0 %2562
        %2564 = vrot.lane.b32.xlu0 %v2544, 113
        %v2565 = vpop.permute.xlu0 %2564
        %2566 = vrot.lane.b32.xlu0 %v2545, 113
        %v2567 = vpop.permute.xlu0 %2566
        %2568 = vrot.lane.b32.xlu0 %v2546, 113
        %v2569 = vpop.permute.xlu0 %2568
        %2570 = vrot.lane.b32.xlu0 %v2547, 113
        %v2571 = vpop.permute.xlu0 %2570
        %v2580 = vsel %vm713, %v2492, %v2557
        %v2581 = vsel %vm713, %v2493, %v2559
        %v2582 = vsel %vm713, %v2494, %v2561
        %v2583 = vsel %vm713, %v2495, %v2563
        %v2584 = vsel %vm713, %v2496, %v2565
        %v2585 = vsel %vm713, %v2497, %v2567
        %v2586 = vsel %vm713, %v2498, %v2569
        %v2587 = vsel %vm713, %v2499, %v2571
        %2588 = vrot.lane.b32.xlu0 %v2540, 127
        %v2589 = vpop.permute.xlu0 %2588
        %2590 = vrot.lane.b32.xlu0 %v2541, 127
        %v2591 = vpop.permute.xlu0 %2590
        %2592 = vrot.lane.b32.xlu0 %v2542, 127
        %v2593 = vpop.permute.xlu0 %2592
        %2594 = vrot.lane.b32.xlu0 %v2543, 127
        %v2595 = vpop.permute.xlu0 %2594
        %2596 = vrot.lane.b32.xlu0 %v2544, 127
        %v2597 = vpop.permute.xlu0 %2596
        %2598 = vrot.lane.b32.xlu0 %v2545, 127
        %v2599 = vpop.permute.xlu0 %2598
        %2600 = vrot.lane.b32.xlu0 %v2546, 127
        %v2601 = vpop.permute.xlu0 %2600
        %2602 = vrot.lane.b32.xlu0 %v2547, 127
        %v2603 = vpop.permute.xlu0 %2602
        %v2612 = vsel %vm755, %v2492, %v2589
        %v2613 = vsel %vm755, %v2493, %v2591
        %v2614 = vsel %vm755, %v2494, %v2593
        %v2615 = vsel %vm755, %v2495, %v2595
        %v2616 = vsel %vm755, %v2496, %v2597
        %v2617 = vsel %vm755, %v2497, %v2599
        %v2618 = vsel %vm755, %v2498, %v2601
        %v2619 = vsel %vm755, %v2499, %v2603
        %v2620 = vmax.f32 %v2580, %v2612
        %v2621 = vmax.f32 %v2581, %v2613
        %v2622 = vmax.f32 %v2582, %v2614
        %v2623 = vmax.f32 %v2583, %v2615
        %v2624 = vmax.f32 %v2584, %v2616
        %v2625 = vmax.f32 %v2585, %v2617
        %v2626 = vmax.f32 %v2586, %v2618
        %v2627 = vmax.f32 %v2587, %v2619
        %v2628 = vmax.f32 %v2492, %v2620
        %v2629 = vmax.f32 %v2493, %v2621
        %v2630 = vmax.f32 %v2494, %v2622
        %v2631 = vmax.f32 %v2495, %v2623
        %v2632 = vmax.f32 %v2496, %v2624
        %v2633 = vmax.f32 %v2497, %v2625
        %v2634 = vmax.f32 %v2498, %v2626
        %v2635 = vmax.f32 %v2499, %v2627
        %v2636 = vsub.f32 %v214, %v2628
        %v2637 = vsub.f32 %v215, %v2629
        %v2638 = vsub.f32 %v216, %v2630
        %v2639 = vsub.f32 %v217, %v2631
        %v2640 = vsub.f32 %v218, %v2632
        %v2641 = vsub.f32 %v219, %v2633
        %v2642 = vsub.f32 %v220, %v2634
        %v2643 = vsub.f32 %v221, %v2635
        %v2644 = vmax.f32 %v2636, 0.0
        %v2645 = vmax.f32 %v2637, 0.0
        %v2646 = vmax.f32 %v2638, 0.0
        %v2647 = vmax.f32 %v2639, 0.0
        %v2648 = vmax.f32 %v2640, 0.0
        %v2649 = vmax.f32 %v2641, 0.0
        %v2650 = vmax.f32 %v2642, 0.0
        %v2651 = vmax.f32 %v2643, 0.0
        %v2652 = vmin.f32 %v2452, %v2476
        %v2653 = vmin.f32 %v2453, %v2477
        %v2654 = vmin.f32 %v2454, %v2478
        %v2655 = vmin.f32 %v2455, %v2479
        %v2656 = vmin.f32 %v2456, %v2480
        %v2657 = vmin.f32 %v2457, %v2481
        %v2658 = vmin.f32 %v2458, %v2482
        %v2659 = vmin.f32 %v2459, %v2483
        %v2660 = vmin.f32 %v2428, %v2652
        %v2661 = vmin.f32 %v2429, %v2653
        %v2662 = vmin.f32 %v2430, %v2654
        %v2663 = vmin.f32 %v2431, %v2655
        %v2664 = vmin.f32 %v2432, %v2656
        %v2665 = vmin.f32 %v2433, %v2657
        %v2666 = vmin.f32 %v2434, %v2658
        %v2667 = vmin.f32 %v2435, %v2659
        %2668 = vrot.lane.b32.xlu0 %v2428, 16
        %v2669 = vpop.permute.xlu0 %2668
        %v2670 = vsel %vm663, %v2669, %v2428
        %2671 = vrot.lane.b32.xlu0 %v2429, 16
        %v2672 = vpop.permute.xlu0 %2671
        %v2673 = vsel %vm663, %v2672, %v2429
        %2674 = vrot.lane.b32.xlu0 %v2430, 16
        %v2675 = vpop.permute.xlu0 %2674
        %v2676 = vsel %vm663, %v2675, %v2430
        %2677 = vrot.lane.b32.xlu0 %v2431, 16
        %v2678 = vpop.permute.xlu0 %2677
        %v2679 = vsel %vm663, %v2678, %v2431
        %2680 = vrot.lane.b32.xlu0 %v2432, 16
        %v2681 = vpop.permute.xlu0 %2680
        %v2682 = vsel %vm663, %v2681, %v2432
        %2683 = vrot.lane.b32.xlu0 %v2433, 16
        %v2684 = vpop.permute.xlu0 %2683
        %v2685 = vsel %vm663, %v2684, %v2433
        %2686 = vrot.lane.b32.xlu0 %v2434, 16
        %v2687 = vpop.permute.xlu0 %2686
        %v2688 = vsel %vm663, %v2687, %v2434
        %2689 = vrot.lane.b32.xlu0 %v2435, 16
        %v2690 = vpop.permute.xlu0 %2689
        %v2691 = vsel %vm663, %v2690, %v2435
        %2692 = vrot.lane.b32.xlu0 %v2670, 16
        %v2693 = vpop.permute.xlu0 %2692
        %2694 = vrot.lane.b32.xlu0 %v2673, 16
        %v2695 = vpop.permute.xlu0 %2694
        %2696 = vrot.lane.b32.xlu0 %v2676, 16
        %v2697 = vpop.permute.xlu0 %2696
        %2698 = vrot.lane.b32.xlu0 %v2679, 16
        %v2699 = vpop.permute.xlu0 %2698
        %2700 = vrot.lane.b32.xlu0 %v2682, 16
        %v2701 = vpop.permute.xlu0 %2700
        %2702 = vrot.lane.b32.xlu0 %v2685, 16
        %v2703 = vpop.permute.xlu0 %2702
        %2704 = vrot.lane.b32.xlu0 %v2688, 16
        %v2705 = vpop.permute.xlu0 %2704
        %2706 = vrot.lane.b32.xlu0 %v2691, 16
        %v2707 = vpop.permute.xlu0 %2706
        %v2708 = vsel %vm663, %v2693, %v2428
        %v2709 = vsel %vm663, %v2695, %v2429
        %v2710 = vsel %vm663, %v2697, %v2430
        %v2711 = vsel %vm663, %v2699, %v2431
        %v2712 = vsel %vm663, %v2701, %v2432
        %v2713 = vsel %vm663, %v2703, %v2433
        %v2714 = vsel %vm663, %v2705, %v2434
        %v2715 = vsel %vm663, %v2707, %v2435
        %2724 = vrot.lane.b32.xlu0 %v2708, 113
        %v2725 = vpop.permute.xlu0 %2724
        %2726 = vrot.lane.b32.xlu0 %v2709, 113
        %v2727 = vpop.permute.xlu0 %2726
        %2728 = vrot.lane.b32.xlu0 %v2710, 113
        %v2729 = vpop.permute.xlu0 %2728
        %2730 = vrot.lane.b32.xlu0 %v2711, 113
        %v2731 = vpop.permute.xlu0 %2730
        %2732 = vrot.lane.b32.xlu0 %v2712, 113
        %v2733 = vpop.permute.xlu0 %2732
        %2734 = vrot.lane.b32.xlu0 %v2713, 113
        %v2735 = vpop.permute.xlu0 %2734
        %2736 = vrot.lane.b32.xlu0 %v2714, 113
        %v2737 = vpop.permute.xlu0 %2736
        %2738 = vrot.lane.b32.xlu0 %v2715, 113
        %v2739 = vpop.permute.xlu0 %2738
        %v2748 = vsel %vm713, %v2428, %v2725
        %v2749 = vsel %vm713, %v2429, %v2727
        %v2750 = vsel %vm713, %v2430, %v2729
        %v2751 = vsel %vm713, %v2431, %v2731
        %v2752 = vsel %vm713, %v2432, %v2733
        %v2753 = vsel %vm713, %v2433, %v2735
        %v2754 = vsel %vm713, %v2434, %v2737
        %v2755 = vsel %vm713, %v2435, %v2739
        %2756 = vrot.lane.b32.xlu0 %v2708, 127
        %v2757 = vpop.permute.xlu0 %2756
        %2758 = vrot.lane.b32.xlu0 %v2709, 127
        %v2759 = vpop.permute.xlu0 %2758
        %2760 = vrot.lane.b32.xlu0 %v2710, 127
        %v2761 = vpop.permute.xlu0 %2760
        %2762 = vrot.lane.b32.xlu0 %v2711, 127
        %v2763 = vpop.permute.xlu0 %2762
        %2764 = vrot.lane.b32.xlu0 %v2712, 127
        %v2765 = vpop.permute.xlu0 %2764
        %2766 = vrot.lane.b32.xlu0 %v2713, 127
        %v2767 = vpop.permute.xlu0 %2766
        %2768 = vrot.lane.b32.xlu0 %v2714, 127
        %v2769 = vpop.permute.xlu0 %2768
        %2770 = vrot.lane.b32.xlu0 %v2715, 127
        %v2771 = vpop.permute.xlu0 %2770
        %v2780 = vsel %vm755, %v2428, %v2757
        %v2781 = vsel %vm755, %v2429, %v2759
        %v2782 = vsel %vm755, %v2430, %v2761
        %v2783 = vsel %vm755, %v2431, %v2763
        %v2784 = vsel %vm755, %v2432, %v2765
        %v2785 = vsel %vm755, %v2433, %v2767
        %v2786 = vsel %vm755, %v2434, %v2769
        %v2787 = vsel %vm755, %v2435, %v2771
        %v2788 = vmin.f32 %v2748, %v2780
        %v2789 = vmin.f32 %v2749, %v2781
        %v2790 = vmin.f32 %v2750, %v2782
        %v2791 = vmin.f32 %v2751, %v2783
        %v2792 = vmin.f32 %v2752, %v2784
        %v2793 = vmin.f32 %v2753, %v2785
        %v2794 = vmin.f32 %v2754, %v2786
        %v2795 = vmin.f32 %v2755, %v2787
        %v2796 = vmin.f32 %v2428, %v2788
        %v2797 = vmin.f32 %v2429, %v2789
        %v2798 = vmin.f32 %v2430, %v2790
        %v2799 = vmin.f32 %v2431, %v2791
        %v2800 = vmin.f32 %v2432, %v2792
        %v2801 = vmin.f32 %v2433, %v2793
        %v2802 = vmin.f32 %v2434, %v2794
        %v2803 = vmin.f32 %v2435, %v2795
        %v2804 = vmin.f32 %v2660, %v2796
        %v2805 = vmin.f32 %v2661, %v2797
        %v2806 = vmin.f32 %v2662, %v2798
        %v2807 = vmin.f32 %v2663, %v2799
        %v2808 = vmin.f32 %v2664, %v2800
        %v2809 = vmin.f32 %v2665, %v2801
        %v2810 = vmin.f32 %v2666, %v2802
        %v2811 = vmin.f32 %v2667, %v2803
        %v2812 = vrot.slane %v2804, 7
        %v2813 = vrot.slane %v2806, 7
        %v2814 = vrot.slane %v2808, 7
        %v2815 = vrot.slane %v2810, 7
        %v2816 = vrot.slane %v2805, 7
        %v2817 = vrot.slane %v2807, 7
        %v2818 = vrot.slane %v2809, 7
        %v2819 = vrot.slane %v2811, 7
        %v2820 = vsel %vm597, %v2812, %v2816
        %v2821 = vsel %vm597, %v2813, %v2817
        %v2822 = vsel %vm597, %v2814, %v2818
        %v2823 = vsel %vm597, %v2815, %v2819
        %v2824 = vsel %vm597, %v2816, %v2812
        %v2825 = vsel %vm597, %v2817, %v2813
        %v2826 = vsel %vm597, %v2818, %v2814
        %v2827 = vsel %vm597, %v2819, %v2815
        %v2828 = vsel %vm608, %v2804, %v2824
        %v2829 = vsel %vm609, %v2805, %v2820
        %v2830 = vsel %vm608, %v2806, %v2825
        %v2831 = vsel %vm609, %v2807, %v2821
        %v2832 = vsel %vm608, %v2808, %v2826
        %v2833 = vsel %vm609, %v2809, %v2822
        %v2834 = vsel %vm608, %v2810, %v2827
        %v2835 = vsel %vm609, %v2811, %v2823
        %v2836 = vrot.slane %v2804, 1
        %v2837 = vrot.slane %v2806, 1
        %v2838 = vrot.slane %v2808, 1
        %v2839 = vrot.slane %v2810, 1
        %v2840 = vrot.slane %v2805, 1
        %v2841 = vrot.slane %v2807, 1
        %v2842 = vrot.slane %v2809, 1
        %v2843 = vrot.slane %v2811, 1
        %v2844 = vsel %vm626, %v2836, %v2840
        %v2845 = vsel %vm626, %v2837, %v2841
        %v2846 = vsel %vm626, %v2838, %v2842
        %v2847 = vsel %vm626, %v2839, %v2843
        %v2848 = vsel %vm626, %v2840, %v2836
        %v2849 = vsel %vm626, %v2841, %v2837
        %v2850 = vsel %vm626, %v2842, %v2838
        %v2851 = vsel %vm626, %v2843, %v2839
        %v2852 = vsel %vm637, %v2804, %v2844
        %v2853 = vsel %vm638, %v2805, %v2848
        %v2854 = vsel %vm637, %v2806, %v2845
        %v2855 = vsel %vm638, %v2807, %v2849
        %v2856 = vsel %vm637, %v2808, %v2846
        %v2857 = vsel %vm638, %v2809, %v2850
        %v2858 = vsel %vm637, %v2810, %v2847
        %v2859 = vsel %vm638, %v2811, %v2851
        %v2860 = vmax.f32 %v2828, %v2852
        %v2861 = vmax.f32 %v2829, %v2853
        %v2862 = vmax.f32 %v2830, %v2854
        %v2863 = vmax.f32 %v2831, %v2855
        %v2864 = vmax.f32 %v2832, %v2856
        %v2865 = vmax.f32 %v2833, %v2857
        %v2866 = vmax.f32 %v2834, %v2858
        %v2867 = vmax.f32 %v2835, %v2859
        %v2868 = vmax.f32 %v2804, %v2860
        %v2869 = vmax.f32 %v2805, %v2861
        %v2870 = vmax.f32 %v2806, %v2862
        %v2871 = vmax.f32 %v2807, %v2863
        %v2872 = vmax.f32 %v2808, %v2864
        %v2873 = vmax.f32 %v2809, %v2865
        %v2874 = vmax.f32 %v2810, %v2866
        %v2875 = vmax.f32 %v2811, %v2867
        %2876 = vrot.lane.b32.xlu0 %v2868, 16
        %v2877 = vpop.permute.xlu0 %2876
        %v2878 = vsel %vm663, %v2877, %v2868
        %2879 = vrot.lane.b32.xlu0 %v2869, 16
        %v2880 = vpop.permute.xlu0 %2879
        %v2881 = vsel %vm663, %v2880, %v2869
        %2882 = vrot.lane.b32.xlu0 %v2870, 16
        %v2883 = vpop.permute.xlu0 %2882
        %v2884 = vsel %vm663, %v2883, %v2870
        %2885 = vrot.lane.b32.xlu0 %v2871, 16
        %v2886 = vpop.permute.xlu0 %2885
        %v2887 = vsel %vm663, %v2886, %v2871
        %2888 = vrot.lane.b32.xlu0 %v2872, 16
        %v2889 = vpop.permute.xlu0 %2888
        %v2890 = vsel %vm663, %v2889, %v2872
        %2891 = vrot.lane.b32.xlu0 %v2873, 16
        %v2892 = vpop.permute.xlu0 %2891
        %v2893 = vsel %vm663, %v2892, %v2873
        %2894 = vrot.lane.b32.xlu0 %v2874, 16
        %v2895 = vpop.permute.xlu0 %2894
        %v2896 = vsel %vm663, %v2895, %v2874
        %2897 = vrot.lane.b32.xlu0 %v2875, 16
        %v2898 = vpop.permute.xlu0 %2897
        %v2899 = vsel %vm663, %v2898, %v2875
        %2900 = vrot.lane.b32.xlu0 %v2878, 16
        %v2901 = vpop.permute.xlu0 %2900
        %2902 = vrot.lane.b32.xlu0 %v2881, 16
        %v2903 = vpop.permute.xlu0 %2902
        %2904 = vrot.lane.b32.xlu0 %v2884, 16
        %v2905 = vpop.permute.xlu0 %2904
        %2906 = vrot.lane.b32.xlu0 %v2887, 16
        %v2907 = vpop.permute.xlu0 %2906
        %2908 = vrot.lane.b32.xlu0 %v2890, 16
        %v2909 = vpop.permute.xlu0 %2908
        %2910 = vrot.lane.b32.xlu0 %v2893, 16
        %v2911 = vpop.permute.xlu0 %2910
        %2912 = vrot.lane.b32.xlu0 %v2896, 16
        %v2913 = vpop.permute.xlu0 %2912
        %2914 = vrot.lane.b32.xlu0 %v2899, 16
        %v2915 = vpop.permute.xlu0 %2914
        %v2916 = vsel %vm663, %v2901, %v2868
        %v2917 = vsel %vm663, %v2903, %v2869
        %v2918 = vsel %vm663, %v2905, %v2870
        %v2919 = vsel %vm663, %v2907, %v2871
        %v2920 = vsel %vm663, %v2909, %v2872
        %v2921 = vsel %vm663, %v2911, %v2873
        %v2922 = vsel %vm663, %v2913, %v2874
        %v2923 = vsel %vm663, %v2915, %v2875
        %2932 = vrot.lane.b32.xlu0 %v2916, 113
        %v2933 = vpop.permute.xlu0 %2932
        %2934 = vrot.lane.b32.xlu0 %v2917, 113
        %v2935 = vpop.permute.xlu0 %2934
        %2936 = vrot.lane.b32.xlu0 %v2918, 113
        %v2937 = vpop.permute.xlu0 %2936
        %2938 = vrot.lane.b32.xlu0 %v2919, 113
        %v2939 = vpop.permute.xlu0 %2938
        %2940 = vrot.lane.b32.xlu0 %v2920, 113
        %v2941 = vpop.permute.xlu0 %2940
        %2942 = vrot.lane.b32.xlu0 %v2921, 113
        %v2943 = vpop.permute.xlu0 %2942
        %2944 = vrot.lane.b32.xlu0 %v2922, 113
        %v2945 = vpop.permute.xlu0 %2944
        %2946 = vrot.lane.b32.xlu0 %v2923, 113
        %v2947 = vpop.permute.xlu0 %2946
        %v2956 = vsel %vm713, %v2868, %v2933
        %v2957 = vsel %vm713, %v2869, %v2935
        %v2958 = vsel %vm713, %v2870, %v2937
        %v2959 = vsel %vm713, %v2871, %v2939
        %v2960 = vsel %vm713, %v2872, %v2941
        %v2961 = vsel %vm713, %v2873, %v2943
        %v2962 = vsel %vm713, %v2874, %v2945
        %v2963 = vsel %vm713, %v2875, %v2947
        %2964 = vrot.lane.b32.xlu0 %v2916, 127
        %v2965 = vpop.permute.xlu0 %2964
        %2966 = vrot.lane.b32.xlu0 %v2917, 127
        %v2967 = vpop.permute.xlu0 %2966
        %2968 = vrot.lane.b32.xlu0 %v2918, 127
        %v2969 = vpop.permute.xlu0 %2968
        %2970 = vrot.lane.b32.xlu0 %v2919, 127
        %v2971 = vpop.permute.xlu0 %2970
        %2972 = vrot.lane.b32.xlu0 %v2920, 127
        %v2973 = vpop.permute.xlu0 %2972
        %2974 = vrot.lane.b32.xlu0 %v2921, 127
        %v2975 = vpop.permute.xlu0 %2974
        %2976 = vrot.lane.b32.xlu0 %v2922, 127
        %v2977 = vpop.permute.xlu0 %2976
        %2978 = vrot.lane.b32.xlu0 %v2923, 127
        %v2979 = vpop.permute.xlu0 %2978
        %v2988 = vsel %vm755, %v2868, %v2965
        %v2989 = vsel %vm755, %v2869, %v2967
        %v2990 = vsel %vm755, %v2870, %v2969
        %v2991 = vsel %vm755, %v2871, %v2971
        %v2992 = vsel %vm755, %v2872, %v2973
        %v2993 = vsel %vm755, %v2873, %v2975
        %v2994 = vsel %vm755, %v2874, %v2977
        %v2995 = vsel %vm755, %v2875, %v2979
        %v2996 = vmax.f32 %v2956, %v2988
        %v2997 = vmax.f32 %v2957, %v2989
        %v2998 = vmax.f32 %v2958, %v2990
        %v2999 = vmax.f32 %v2959, %v2991
        %v3000 = vmax.f32 %v2960, %v2992
        %v3001 = vmax.f32 %v2961, %v2993
        %v3002 = vmax.f32 %v2962, %v2994
        %v3003 = vmax.f32 %v2963, %v2995
        %v3004 = vmax.f32 %v2868, %v2996
        %v3005 = vmax.f32 %v2869, %v2997
        %v3006 = vmax.f32 %v2870, %v2998
        %v3007 = vmax.f32 %v2871, %v2999
        %v3008 = vmax.f32 %v2872, %v3000
        %v3009 = vmax.f32 %v2873, %v3001
        %v3010 = vmax.f32 %v2874, %v3002
        %v3011 = vmax.f32 %v2875, %v3003
        %v3012 = vsub.f32 %v2428, %v3004
        %v3013 = vsub.f32 %v2429, %v3005
        %v3014 = vsub.f32 %v2430, %v3006
        %v3015 = vsub.f32 %v2431, %v3007
        %v3016 = vsub.f32 %v2432, %v3008
        %v3017 = vsub.f32 %v2433, %v3009
        %v3018 = vsub.f32 %v2434, %v3010
        %v3019 = vsub.f32 %v2435, %v3011
        %v3020 = vmax.f32 %v3012, 0.0
        %v3021 = vmax.f32 %v3013, 0.0
        %v3022 = vmax.f32 %v3014, 0.0
        %v3023 = vmax.f32 %v3015, 0.0
        %v3024 = vmax.f32 %v3016, 0.0
        %v3025 = vmax.f32 %v3017, 0.0
        %v3026 = vmax.f32 %v3018, 0.0
        %v3027 = vmax.f32 %v3019, 0.0
        %v3028 = vadd.f32 %v2644, %v3020
        %v3029 = vadd.f32 %v2645, %v3021
        %v3030 = vadd.f32 %v2646, %v3022
        %v3031 = vadd.f32 %v2647, %v3023
        %v3032 = vadd.f32 %v2648, %v3024
        %v3033 = vadd.f32 %v2649, %v3025
        %v3034 = vadd.f32 %v2650, %v3026
        %v3035 = vadd.f32 %v2651, %v3027
        %v3036 = vmul.f32 %v2644, %v3020
        %v3037 = vmul.f32 %v2645, %v3021
        %v3038 = vmul.f32 %v2646, %v3022
        %v3039 = vmul.f32 %v2647, %v3023
        %v3040 = vmul.f32 %v2648, %v3024
        %v3041 = vmul.f32 %v2649, %v3025
        %v3042 = vmul.f32 %v2650, %v3026
        %v3043 = vmul.f32 %v2651, %v3027
        %v3044 = vsub.f32 %v3028, %v3036
        %v3045 = vsub.f32 %v3029, %v3037
        %v3046 = vsub.f32 %v3030, %v3038
        %v3047 = vsub.f32 %v3031, %v3039
        %v3048 = vsub.f32 %v3032, %v3040
        %v3049 = vsub.f32 %v3033, %v3041
        %v3050 = vsub.f32 %v3034, %v3042
        %v3051 = vsub.f32 %v3035, %v3043
        %v3052 = vmin.f32 %v2828, %v2852
        %v3053 = vmin.f32 %v2829, %v2853
        %v3054 = vmin.f32 %v2830, %v2854
        %v3055 = vmin.f32 %v2831, %v2855
        %v3056 = vmin.f32 %v2832, %v2856
        %v3057 = vmin.f32 %v2833, %v2857
        %v3058 = vmin.f32 %v2834, %v2858
        %v3059 = vmin.f32 %v2835, %v2859
        %v3060 = vmin.f32 %v2804, %v3052
        %v3061 = vmin.f32 %v2805, %v3053
        %v3062 = vmin.f32 %v2806, %v3054
        %v3063 = vmin.f32 %v2807, %v3055
        %v3064 = vmin.f32 %v2808, %v3056
        %v3065 = vmin.f32 %v2809, %v3057
        %v3066 = vmin.f32 %v2810, %v3058
        %v3067 = vmin.f32 %v2811, %v3059
        %3068 = vrot.lane.b32.xlu0 %v2804, 16
        %v3069 = vpop.permute.xlu0 %3068
        %v3070 = vsel %vm663, %v3069, %v2804
        %3071 = vrot.lane.b32.xlu0 %v2805, 16
        %v3072 = vpop.permute.xlu0 %3071
        %v3073 = vsel %vm663, %v3072, %v2805
        %3074 = vrot.lane.b32.xlu0 %v2806, 16
        %v3075 = vpop.permute.xlu0 %3074
        %v3076 = vsel %vm663, %v3075, %v2806
        %3077 = vrot.lane.b32.xlu0 %v2807, 16
        %v3078 = vpop.permute.xlu0 %3077
        %v3079 = vsel %vm663, %v3078, %v2807
        %3080 = vrot.lane.b32.xlu0 %v2808, 16
        %v3081 = vpop.permute.xlu0 %3080
        %v3082 = vsel %vm663, %v3081, %v2808
        %3083 = vrot.lane.b32.xlu0 %v2809, 16
        %v3084 = vpop.permute.xlu0 %3083
        %v3085 = vsel %vm663, %v3084, %v2809
        %3086 = vrot.lane.b32.xlu0 %v2810, 16
        %v3087 = vpop.permute.xlu0 %3086
        %v3088 = vsel %vm663, %v3087, %v2810
        %3089 = vrot.lane.b32.xlu0 %v2811, 16
        %v3090 = vpop.permute.xlu0 %3089
        %v3091 = vsel %vm663, %v3090, %v2811
        %3092 = vrot.lane.b32.xlu0 %v3070, 16
        %v3093 = vpop.permute.xlu0 %3092
        %3094 = vrot.lane.b32.xlu0 %v3073, 16
        %v3095 = vpop.permute.xlu0 %3094
        %3096 = vrot.lane.b32.xlu0 %v3076, 16
        %v3097 = vpop.permute.xlu0 %3096
        %3098 = vrot.lane.b32.xlu0 %v3079, 16
        %v3099 = vpop.permute.xlu0 %3098
        %3100 = vrot.lane.b32.xlu0 %v3082, 16
        %v3101 = vpop.permute.xlu0 %3100
        %3102 = vrot.lane.b32.xlu0 %v3085, 16
        %v3103 = vpop.permute.xlu0 %3102
        %3104 = vrot.lane.b32.xlu0 %v3088, 16
        %v3105 = vpop.permute.xlu0 %3104
        %3106 = vrot.lane.b32.xlu0 %v3091, 16
        %v3107 = vpop.permute.xlu0 %3106
        %v3108 = vsel %vm663, %v3093, %v2804
        %v3109 = vsel %vm663, %v3095, %v2805
        %v3110 = vsel %vm663, %v3097, %v2806
        %v3111 = vsel %vm663, %v3099, %v2807
        %v3112 = vsel %vm663, %v3101, %v2808
        %v3113 = vsel %vm663, %v3103, %v2809
        %v3114 = vsel %vm663, %v3105, %v2810
        %v3115 = vsel %vm663, %v3107, %v2811
        %3124 = vrot.lane.b32.xlu0 %v3108, 113
        %v3125 = vpop.permute.xlu0 %3124
        %3126 = vrot.lane.b32.xlu0 %v3109, 113
        %v3127 = vpop.permute.xlu0 %3126
        %3128 = vrot.lane.b32.xlu0 %v3110, 113
        %v3129 = vpop.permute.xlu0 %3128
        %3130 = vrot.lane.b32.xlu0 %v3111, 113
        %v3131 = vpop.permute.xlu0 %3130
        %3132 = vrot.lane.b32.xlu0 %v3112, 113
        %v3133 = vpop.permute.xlu0 %3132
        %3134 = vrot.lane.b32.xlu0 %v3113, 113
        %v3135 = vpop.permute.xlu0 %3134
        %3136 = vrot.lane.b32.xlu0 %v3114, 113
        %v3137 = vpop.permute.xlu0 %3136
        %3138 = vrot.lane.b32.xlu0 %v3115, 113
        %v3139 = vpop.permute.xlu0 %3138
        %v3148 = vsel %vm713, %v2804, %v3125
        %v3149 = vsel %vm713, %v2805, %v3127
        %v3150 = vsel %vm713, %v2806, %v3129
        %v3151 = vsel %vm713, %v2807, %v3131
        %v3152 = vsel %vm713, %v2808, %v3133
        %v3153 = vsel %vm713, %v2809, %v3135
        %v3154 = vsel %vm713, %v2810, %v3137
        %v3155 = vsel %vm713, %v2811, %v3139
        %3156 = vrot.lane.b32.xlu0 %v3108, 127
        %v3157 = vpop.permute.xlu0 %3156
        %3158 = vrot.lane.b32.xlu0 %v3109, 127
        %v3159 = vpop.permute.xlu0 %3158
        %3160 = vrot.lane.b32.xlu0 %v3110, 127
        %v3161 = vpop.permute.xlu0 %3160
        %3162 = vrot.lane.b32.xlu0 %v3111, 127
        %v3163 = vpop.permute.xlu0 %3162
        %3164 = vrot.lane.b32.xlu0 %v3112, 127
        %v3165 = vpop.permute.xlu0 %3164
        %3166 = vrot.lane.b32.xlu0 %v3113, 127
        %v3167 = vpop.permute.xlu0 %3166
        %3168 = vrot.lane.b32.xlu0 %v3114, 127
        %v3169 = vpop.permute.xlu0 %3168
        %3170 = vrot.lane.b32.xlu0 %v3115, 127
        %v3171 = vpop.permute.xlu0 %3170
        %v3180 = vsel %vm755, %v2804, %v3157
        %v3181 = vsel %vm755, %v2805, %v3159
        %v3182 = vsel %vm755, %v2806, %v3161
        %v3183 = vsel %vm755, %v2807, %v3163
        %v3184 = vsel %vm755, %v2808, %v3165
        %v3185 = vsel %vm755, %v2809, %v3167
        %v3186 = vsel %vm755, %v2810, %v3169
        %v3187 = vsel %vm755, %v2811, %v3171
        %v3188 = vmin.f32 %v3148, %v3180
        %v3189 = vmin.f32 %v3149, %v3181
        %v3190 = vmin.f32 %v3150, %v3182
        %v3191 = vmin.f32 %v3151, %v3183
        %v3192 = vmin.f32 %v3152, %v3184
        %v3193 = vmin.f32 %v3153, %v3185
        %v3194 = vmin.f32 %v3154, %v3186
        %v3195 = vmin.f32 %v3155, %v3187
        %v3196 = vmin.f32 %v2804, %v3188
        %v3197 = vmin.f32 %v2805, %v3189
        %v3198 = vmin.f32 %v2806, %v3190
        %v3199 = vmin.f32 %v2807, %v3191
        %v3200 = vmin.f32 %v2808, %v3192
        %v3201 = vmin.f32 %v2809, %v3193
        %v3202 = vmin.f32 %v2810, %v3194
        %v3203 = vmin.f32 %v2811, %v3195
        %v3204 = vmin.f32 %v3060, %v3196
        %v3205 = vmin.f32 %v3061, %v3197
        %v3206 = vmin.f32 %v3062, %v3198
        %v3207 = vmin.f32 %v3063, %v3199
        %v3208 = vmin.f32 %v3064, %v3200
        %v3209 = vmin.f32 %v3065, %v3201
        %v3210 = vmin.f32 %v3066, %v3202
        %v3211 = vmin.f32 %v3067, %v3203
        %v3212 = vrot.slane %v3204, 7
        %v3213 = vrot.slane %v3206, 7
        %v3214 = vrot.slane %v3208, 7
        %v3215 = vrot.slane %v3210, 7
        %v3216 = vrot.slane %v3205, 7
        %v3217 = vrot.slane %v3207, 7
        %v3218 = vrot.slane %v3209, 7
        %v3219 = vrot.slane %v3211, 7
        %v3220 = vsel %vm597, %v3212, %v3216
        %v3221 = vsel %vm597, %v3213, %v3217
        %v3222 = vsel %vm597, %v3214, %v3218
        %v3223 = vsel %vm597, %v3215, %v3219
        %v3224 = vsel %vm597, %v3216, %v3212
        %v3225 = vsel %vm597, %v3217, %v3213
        %v3226 = vsel %vm597, %v3218, %v3214
        %v3227 = vsel %vm597, %v3219, %v3215
        %v3228 = vsel %vm608, %v3204, %v3224
        %v3229 = vsel %vm609, %v3205, %v3220
        %v3230 = vsel %vm608, %v3206, %v3225
        %v3231 = vsel %vm609, %v3207, %v3221
        %v3232 = vsel %vm608, %v3208, %v3226
        %v3233 = vsel %vm609, %v3209, %v3222
        %v3234 = vsel %vm608, %v3210, %v3227
        %v3235 = vsel %vm609, %v3211, %v3223
        %v3236 = vrot.slane %v3204, 1
        %v3237 = vrot.slane %v3206, 1
        %v3238 = vrot.slane %v3208, 1
        %v3239 = vrot.slane %v3210, 1
        %v3240 = vrot.slane %v3205, 1
        %v3241 = vrot.slane %v3207, 1
        %v3242 = vrot.slane %v3209, 1
        %v3243 = vrot.slane %v3211, 1
        %v3244 = vsel %vm626, %v3236, %v3240
        %v3245 = vsel %vm626, %v3237, %v3241
        %v3246 = vsel %vm626, %v3238, %v3242
        %v3247 = vsel %vm626, %v3239, %v3243
        %v3248 = vsel %vm626, %v3240, %v3236
        %v3249 = vsel %vm626, %v3241, %v3237
        %v3250 = vsel %vm626, %v3242, %v3238
        %v3251 = vsel %vm626, %v3243, %v3239
        %v3252 = vsel %vm637, %v3204, %v3244
        %v3253 = vsel %vm638, %v3205, %v3248
        %v3254 = vsel %vm637, %v3206, %v3245
        %v3255 = vsel %vm638, %v3207, %v3249
        %v3256 = vsel %vm637, %v3208, %v3246
        %v3257 = vsel %vm638, %v3209, %v3250
        %v3258 = vsel %vm637, %v3210, %v3247
        %v3259 = vsel %vm638, %v3211, %v3251
        %v3260 = vmax.f32 %v3228, %v3252
        %v3261 = vmax.f32 %v3229, %v3253
        %v3262 = vmax.f32 %v3230, %v3254
        %v3263 = vmax.f32 %v3231, %v3255
        %v3264 = vmax.f32 %v3232, %v3256
        %v3265 = vmax.f32 %v3233, %v3257
        %v3266 = vmax.f32 %v3234, %v3258
        %v3267 = vmax.f32 %v3235, %v3259
        %v3268 = vmax.f32 %v3204, %v3260
        %v3269 = vmax.f32 %v3205, %v3261
        %v3270 = vmax.f32 %v3206, %v3262
        %v3271 = vmax.f32 %v3207, %v3263
        %v3272 = vmax.f32 %v3208, %v3264
        %v3273 = vmax.f32 %v3209, %v3265
        %v3274 = vmax.f32 %v3210, %v3266
        %v3275 = vmax.f32 %v3211, %v3267
        %3276 = vrot.lane.b32.xlu0 %v3268, 16
        %v3277 = vpop.permute.xlu0 %3276
        %v3278 = vsel %vm663, %v3277, %v3268
        %3279 = vrot.lane.b32.xlu0 %v3269, 16
        %v3280 = vpop.permute.xlu0 %3279
        %v3281 = vsel %vm663, %v3280, %v3269
        %3282 = vrot.lane.b32.xlu0 %v3270, 16
        %v3283 = vpop.permute.xlu0 %3282
        %v3284 = vsel %vm663, %v3283, %v3270
        %3285 = vrot.lane.b32.xlu0 %v3271, 16
        %v3286 = vpop.permute.xlu0 %3285
        %v3287 = vsel %vm663, %v3286, %v3271
        %3288 = vrot.lane.b32.xlu0 %v3272, 16
        %v3289 = vpop.permute.xlu0 %3288
        %v3290 = vsel %vm663, %v3289, %v3272
        %3291 = vrot.lane.b32.xlu0 %v3273, 16
        %v3292 = vpop.permute.xlu0 %3291
        %v3293 = vsel %vm663, %v3292, %v3273
        %3294 = vrot.lane.b32.xlu0 %v3274, 16
        %v3295 = vpop.permute.xlu0 %3294
        %v3296 = vsel %vm663, %v3295, %v3274
        %3297 = vrot.lane.b32.xlu0 %v3275, 16
        %v3298 = vpop.permute.xlu0 %3297
        %v3299 = vsel %vm663, %v3298, %v3275
        %3300 = vrot.lane.b32.xlu0 %v3278, 16
        %v3301 = vpop.permute.xlu0 %3300
        %3302 = vrot.lane.b32.xlu0 %v3281, 16
        %v3303 = vpop.permute.xlu0 %3302
        %3304 = vrot.lane.b32.xlu0 %v3284, 16
        %v3305 = vpop.permute.xlu0 %3304
        %3306 = vrot.lane.b32.xlu0 %v3287, 16
        %v3307 = vpop.permute.xlu0 %3306
        %3308 = vrot.lane.b32.xlu0 %v3290, 16
        %v3309 = vpop.permute.xlu0 %3308
        %3310 = vrot.lane.b32.xlu0 %v3293, 16
        %v3311 = vpop.permute.xlu0 %3310
        %3312 = vrot.lane.b32.xlu0 %v3296, 16
        %v3313 = vpop.permute.xlu0 %3312
        %3314 = vrot.lane.b32.xlu0 %v3299, 16
        %v3315 = vpop.permute.xlu0 %3314
        %v3316 = vsel %vm663, %v3301, %v3268
        %v3317 = vsel %vm663, %v3303, %v3269
        %v3318 = vsel %vm663, %v3305, %v3270
        %v3319 = vsel %vm663, %v3307, %v3271
        %v3320 = vsel %vm663, %v3309, %v3272
        %v3321 = vsel %vm663, %v3311, %v3273
        %v3322 = vsel %vm663, %v3313, %v3274
        %v3323 = vsel %vm663, %v3315, %v3275
        %3332 = vrot.lane.b32.xlu0 %v3316, 113
        %v3333 = vpop.permute.xlu0 %3332
        %3334 = vrot.lane.b32.xlu0 %v3317, 113
        %v3335 = vpop.permute.xlu0 %3334
        %3336 = vrot.lane.b32.xlu0 %v3318, 113
        %v3337 = vpop.permute.xlu0 %3336
        %3338 = vrot.lane.b32.xlu0 %v3319, 113
        %v3339 = vpop.permute.xlu0 %3338
        %3340 = vrot.lane.b32.xlu0 %v3320, 113
        %v3341 = vpop.permute.xlu0 %3340
        %3342 = vrot.lane.b32.xlu0 %v3321, 113
        %v3343 = vpop.permute.xlu0 %3342
        %3344 = vrot.lane.b32.xlu0 %v3322, 113
        %v3345 = vpop.permute.xlu0 %3344
        %3346 = vrot.lane.b32.xlu0 %v3323, 113
        %v3347 = vpop.permute.xlu0 %3346
        %v3356 = vsel %vm713, %v3268, %v3333
        %v3357 = vsel %vm713, %v3269, %v3335
        %v3358 = vsel %vm713, %v3270, %v3337
        %v3359 = vsel %vm713, %v3271, %v3339
        %v3360 = vsel %vm713, %v3272, %v3341
        %v3361 = vsel %vm713, %v3273, %v3343
        %v3362 = vsel %vm713, %v3274, %v3345
        %v3363 = vsel %vm713, %v3275, %v3347
        %3364 = vrot.lane.b32.xlu0 %v3316, 127
        %v3365 = vpop.permute.xlu0 %3364
        %3366 = vrot.lane.b32.xlu0 %v3317, 127
        %v3367 = vpop.permute.xlu0 %3366
        %3368 = vrot.lane.b32.xlu0 %v3318, 127
        %v3369 = vpop.permute.xlu0 %3368
        %3370 = vrot.lane.b32.xlu0 %v3319, 127
        %v3371 = vpop.permute.xlu0 %3370
        %3372 = vrot.lane.b32.xlu0 %v3320, 127
        %v3373 = vpop.permute.xlu0 %3372
        %3374 = vrot.lane.b32.xlu0 %v3321, 127
        %v3375 = vpop.permute.xlu0 %3374
        %3376 = vrot.lane.b32.xlu0 %v3322, 127
        %v3377 = vpop.permute.xlu0 %3376
        %3378 = vrot.lane.b32.xlu0 %v3323, 127
        %v3379 = vpop.permute.xlu0 %3378
        %v3388 = vsel %vm755, %v3268, %v3365
        %v3389 = vsel %vm755, %v3269, %v3367
        %v3390 = vsel %vm755, %v3270, %v3369
        %v3391 = vsel %vm755, %v3271, %v3371
        %v3392 = vsel %vm755, %v3272, %v3373
        %v3393 = vsel %vm755, %v3273, %v3375
        %v3394 = vsel %vm755, %v3274, %v3377
        %v3395 = vsel %vm755, %v3275, %v3379
        %v3396 = vmax.f32 %v3356, %v3388
        %v3397 = vmax.f32 %v3357, %v3389
        %v3398 = vmax.f32 %v3358, %v3390
        %v3399 = vmax.f32 %v3359, %v3391
        %v3400 = vmax.f32 %v3360, %v3392
        %v3401 = vmax.f32 %v3361, %v3393
        %v3402 = vmax.f32 %v3362, %v3394
        %v3403 = vmax.f32 %v3363, %v3395
        %v3404 = vmax.f32 %v3268, %v3396
        %v3405 = vmax.f32 %v3269, %v3397
        %v3406 = vmax.f32 %v3270, %v3398
        %v3407 = vmax.f32 %v3271, %v3399
        %v3408 = vmax.f32 %v3272, %v3400
        %v3409 = vmax.f32 %v3273, %v3401
        %v3410 = vmax.f32 %v3274, %v3402
        %v3411 = vmax.f32 %v3275, %v3403
        %v3412 = vsub.f32 %v2804, %v3404
        %v3413 = vsub.f32 %v2805, %v3405
        %v3414 = vsub.f32 %v2806, %v3406
        %v3415 = vsub.f32 %v2807, %v3407
        %v3416 = vsub.f32 %v2808, %v3408
        %v3417 = vsub.f32 %v2809, %v3409
        %v3418 = vsub.f32 %v2810, %v3410
        %v3419 = vsub.f32 %v2811, %v3411
        %v3420 = vmax.f32 %v3412, 0.0
        %v3421 = vmax.f32 %v3413, 0.0
        %v3422 = vmax.f32 %v3414, 0.0
        %v3423 = vmax.f32 %v3415, 0.0
        %v3424 = vmax.f32 %v3416, 0.0
        %v3425 = vmax.f32 %v3417, 0.0
        %v3426 = vmax.f32 %v3418, 0.0
        %v3427 = vmax.f32 %v3419, 0.0
        %v3428 = vadd.f32 %v3044, %v3420
        %v3429 = vadd.f32 %v3045, %v3421
        %v3430 = vadd.f32 %v3046, %v3422
        %v3431 = vadd.f32 %v3047, %v3423
        %v3432 = vadd.f32 %v3048, %v3424
        %v3433 = vadd.f32 %v3049, %v3425
        %v3434 = vadd.f32 %v3050, %v3426
        %v3435 = vadd.f32 %v3051, %v3427
        %v3436 = vmul.f32 %v3044, %v3420
        %v3437 = vmul.f32 %v3045, %v3421
        %v3438 = vmul.f32 %v3046, %v3422
        %v3439 = vmul.f32 %v3047, %v3423
        %v3440 = vmul.f32 %v3048, %v3424
        %v3441 = vmul.f32 %v3049, %v3425
        %v3442 = vmul.f32 %v3050, %v3426
        %v3443 = vmul.f32 %v3051, %v3427
        %v3444 = vsub.f32 %v3428, %v3436
        %v3445 = vsub.f32 %v3429, %v3437
        %v3446 = vsub.f32 %v3430, %v3438
        %v3447 = vsub.f32 %v3431, %v3439
        %v3448 = vsub.f32 %v3432, %v3440
        %v3449 = vsub.f32 %v3433, %v3441
        %v3450 = vsub.f32 %v3434, %v3442
        %v3451 = vsub.f32 %v3435, %v3443
        %v3452 = vmin.f32 %v3228, %v3252
        %v3453 = vmin.f32 %v3229, %v3253
        %v3454 = vmin.f32 %v3230, %v3254
        %v3455 = vmin.f32 %v3231, %v3255
        %v3456 = vmin.f32 %v3232, %v3256
        %v3457 = vmin.f32 %v3233, %v3257
        %v3458 = vmin.f32 %v3234, %v3258
        %v3459 = vmin.f32 %v3235, %v3259
        %v3460 = vmin.f32 %v3204, %v3452
        %v3461 = vmin.f32 %v3205, %v3453
        %v3462 = vmin.f32 %v3206, %v3454
        %v3463 = vmin.f32 %v3207, %v3455
        %v3464 = vmin.f32 %v3208, %v3456
        %v3465 = vmin.f32 %v3209, %v3457
        %v3466 = vmin.f32 %v3210, %v3458
        %v3467 = vmin.f32 %v3211, %v3459
        %3468 = vrot.lane.b32.xlu0 %v3204, 16
        %v3469 = vpop.permute.xlu0 %3468
        %v3470 = vsel %vm663, %v3469, %v3204
        %3471 = vrot.lane.b32.xlu0 %v3205, 16
        %v3472 = vpop.permute.xlu0 %3471
        %v3473 = vsel %vm663, %v3472, %v3205
        %3474 = vrot.lane.b32.xlu0 %v3206, 16
        %v3475 = vpop.permute.xlu0 %3474
        %v3476 = vsel %vm663, %v3475, %v3206
        %3477 = vrot.lane.b32.xlu0 %v3207, 16
        %v3478 = vpop.permute.xlu0 %3477
        %v3479 = vsel %vm663, %v3478, %v3207
        %3480 = vrot.lane.b32.xlu0 %v3208, 16
        %v3481 = vpop.permute.xlu0 %3480
        %v3482 = vsel %vm663, %v3481, %v3208
        %3483 = vrot.lane.b32.xlu0 %v3209, 16
        %v3484 = vpop.permute.xlu0 %3483
        %v3485 = vsel %vm663, %v3484, %v3209
        %3486 = vrot.lane.b32.xlu0 %v3210, 16
        %v3487 = vpop.permute.xlu0 %3486
        %v3488 = vsel %vm663, %v3487, %v3210
        %3489 = vrot.lane.b32.xlu0 %v3211, 16
        %v3490 = vpop.permute.xlu0 %3489
        %v3491 = vsel %vm663, %v3490, %v3211
        %3492 = vrot.lane.b32.xlu0 %v3470, 16
        %v3493 = vpop.permute.xlu0 %3492
        %3494 = vrot.lane.b32.xlu0 %v3473, 16
        %v3495 = vpop.permute.xlu0 %3494
        %3496 = vrot.lane.b32.xlu0 %v3476, 16
        %v3497 = vpop.permute.xlu0 %3496
        %3498 = vrot.lane.b32.xlu0 %v3479, 16
        %v3499 = vpop.permute.xlu0 %3498
        %3500 = vrot.lane.b32.xlu0 %v3482, 16
        %v3501 = vpop.permute.xlu0 %3500
        %3502 = vrot.lane.b32.xlu0 %v3485, 16
        %v3503 = vpop.permute.xlu0 %3502
        %3504 = vrot.lane.b32.xlu0 %v3488, 16
        %v3505 = vpop.permute.xlu0 %3504
        %3506 = vrot.lane.b32.xlu0 %v3491, 16
        %v3507 = vpop.permute.xlu0 %3506
        %v3508 = vsel %vm663, %v3493, %v3204
        %v3509 = vsel %vm663, %v3495, %v3205
        %v3510 = vsel %vm663, %v3497, %v3206
        %v3511 = vsel %vm663, %v3499, %v3207
        %v3512 = vsel %vm663, %v3501, %v3208
        %v3513 = vsel %vm663, %v3503, %v3209
        %v3514 = vsel %vm663, %v3505, %v3210
        %v3515 = vsel %vm663, %v3507, %v3211
        %3524 = vrot.lane.b32.xlu0 %v3508, 113
        %v3525 = vpop.permute.xlu0 %3524
        %3526 = vrot.lane.b32.xlu0 %v3509, 113
        %v3527 = vpop.permute.xlu0 %3526
        %3528 = vrot.lane.b32.xlu0 %v3510, 113
        %v3529 = vpop.permute.xlu0 %3528
        %3530 = vrot.lane.b32.xlu0 %v3511, 113
        %v3531 = vpop.permute.xlu0 %3530
        %3532 = vrot.lane.b32.xlu0 %v3512, 113
        %v3533 = vpop.permute.xlu0 %3532
        %3534 = vrot.lane.b32.xlu0 %v3513, 113
        %v3535 = vpop.permute.xlu0 %3534
        %3536 = vrot.lane.b32.xlu0 %v3514, 113
        %v3537 = vpop.permute.xlu0 %3536
        %3538 = vrot.lane.b32.xlu0 %v3515, 113
        %v3539 = vpop.permute.xlu0 %3538
        %v3548 = vsel %vm713, %v3204, %v3525
        %v3549 = vsel %vm713, %v3205, %v3527
        %v3550 = vsel %vm713, %v3206, %v3529
        %v3551 = vsel %vm713, %v3207, %v3531
        %v3552 = vsel %vm713, %v3208, %v3533
        %v3553 = vsel %vm713, %v3209, %v3535
        %v3554 = vsel %vm713, %v3210, %v3537
        %v3555 = vsel %vm713, %v3211, %v3539
        %3556 = vrot.lane.b32.xlu0 %v3508, 127
        %v3557 = vpop.permute.xlu0 %3556
        %3558 = vrot.lane.b32.xlu0 %v3509, 127
        %v3559 = vpop.permute.xlu0 %3558
        %3560 = vrot.lane.b32.xlu0 %v3510, 127
        %v3561 = vpop.permute.xlu0 %3560
        %3562 = vrot.lane.b32.xlu0 %v3511, 127
        %v3563 = vpop.permute.xlu0 %3562
        %3564 = vrot.lane.b32.xlu0 %v3512, 127
        %v3565 = vpop.permute.xlu0 %3564
        %3566 = vrot.lane.b32.xlu0 %v3513, 127
        %v3567 = vpop.permute.xlu0 %3566
        %3568 = vrot.lane.b32.xlu0 %v3514, 127
        %v3569 = vpop.permute.xlu0 %3568
        %3570 = vrot.lane.b32.xlu0 %v3515, 127
        %v3571 = vpop.permute.xlu0 %3570
        %v3580 = vsel %vm755, %v3204, %v3557
        %v3581 = vsel %vm755, %v3205, %v3559
        %v3582 = vsel %vm755, %v3206, %v3561
        %v3583 = vsel %vm755, %v3207, %v3563
        %v3584 = vsel %vm755, %v3208, %v3565
        %v3585 = vsel %vm755, %v3209, %v3567
        %v3586 = vsel %vm755, %v3210, %v3569
        %v3587 = vsel %vm755, %v3211, %v3571
        %v3588 = vmin.f32 %v3548, %v3580
        %v3589 = vmin.f32 %v3549, %v3581
        %v3590 = vmin.f32 %v3550, %v3582
        %v3591 = vmin.f32 %v3551, %v3583
        %v3592 = vmin.f32 %v3552, %v3584
        %v3593 = vmin.f32 %v3553, %v3585
        %v3594 = vmin.f32 %v3554, %v3586
        %v3595 = vmin.f32 %v3555, %v3587
        %v3596 = vmin.f32 %v3204, %v3588
        %v3597 = vmin.f32 %v3205, %v3589
        %v3598 = vmin.f32 %v3206, %v3590
        %v3599 = vmin.f32 %v3207, %v3591
        %v3600 = vmin.f32 %v3208, %v3592
        %v3601 = vmin.f32 %v3209, %v3593
        %v3602 = vmin.f32 %v3210, %v3594
        %v3603 = vmin.f32 %v3211, %v3595
        %v3604 = vmin.f32 %v3460, %v3596
        %v3605 = vmin.f32 %v3461, %v3597
        %v3606 = vmin.f32 %v3462, %v3598
        %v3607 = vmin.f32 %v3463, %v3599
        %v3608 = vmin.f32 %v3464, %v3600
        %v3609 = vmin.f32 %v3465, %v3601
        %v3610 = vmin.f32 %v3466, %v3602
        %v3611 = vmin.f32 %v3467, %v3603
        %v3612 = vrot.slane %v3604, 7
        %v3613 = vrot.slane %v3606, 7
        %v3614 = vrot.slane %v3608, 7
        %v3615 = vrot.slane %v3610, 7
        %v3616 = vrot.slane %v3605, 7
        %v3617 = vrot.slane %v3607, 7
        %v3618 = vrot.slane %v3609, 7
        %v3619 = vrot.slane %v3611, 7
        %v3620 = vsel %vm597, %v3612, %v3616
        %v3621 = vsel %vm597, %v3613, %v3617
        %v3622 = vsel %vm597, %v3614, %v3618
        %v3623 = vsel %vm597, %v3615, %v3619
        %v3624 = vsel %vm597, %v3616, %v3612
        %v3625 = vsel %vm597, %v3617, %v3613
        %v3626 = vsel %vm597, %v3618, %v3614
        %v3627 = vsel %vm597, %v3619, %v3615
        %v3628 = vsel %vm608, %v3604, %v3624
        %v3629 = vsel %vm609, %v3605, %v3620
        %v3630 = vsel %vm608, %v3606, %v3625
        %v3631 = vsel %vm609, %v3607, %v3621
        %v3632 = vsel %vm608, %v3608, %v3626
        %v3633 = vsel %vm609, %v3609, %v3622
        %v3634 = vsel %vm608, %v3610, %v3627
        %v3635 = vsel %vm609, %v3611, %v3623
        %v3636 = vrot.slane %v3604, 1
        %v3637 = vrot.slane %v3606, 1
        %v3638 = vrot.slane %v3608, 1
        %v3639 = vrot.slane %v3610, 1
        %v3640 = vrot.slane %v3605, 1
        %v3641 = vrot.slane %v3607, 1
        %v3642 = vrot.slane %v3609, 1
        %v3643 = vrot.slane %v3611, 1
        %v3644 = vsel %vm626, %v3636, %v3640
        %v3645 = vsel %vm626, %v3637, %v3641
        %v3646 = vsel %vm626, %v3638, %v3642
        %v3647 = vsel %vm626, %v3639, %v3643
        %v3648 = vsel %vm626, %v3640, %v3636
        %v3649 = vsel %vm626, %v3641, %v3637
        %v3650 = vsel %vm626, %v3642, %v3638
        %v3651 = vsel %vm626, %v3643, %v3639
        %v3652 = vsel %vm637, %v3604, %v3644
        %v3653 = vsel %vm638, %v3605, %v3648
        %v3654 = vsel %vm637, %v3606, %v3645
        %v3655 = vsel %vm638, %v3607, %v3649
        %v3656 = vsel %vm637, %v3608, %v3646
        %v3657 = vsel %vm638, %v3609, %v3650
        %v3658 = vsel %vm637, %v3610, %v3647
        %v3659 = vsel %vm638, %v3611, %v3651
        %v3660 = vmax.f32 %v3628, %v3652
        %v3661 = vmax.f32 %v3629, %v3653
        %v3662 = vmax.f32 %v3630, %v3654
        %v3663 = vmax.f32 %v3631, %v3655
        %v3664 = vmax.f32 %v3632, %v3656
        %v3665 = vmax.f32 %v3633, %v3657
        %v3666 = vmax.f32 %v3634, %v3658
        %v3667 = vmax.f32 %v3635, %v3659
        %v3668 = vmax.f32 %v3604, %v3660
        %v3669 = vmax.f32 %v3605, %v3661
        %v3670 = vmax.f32 %v3606, %v3662
        %v3671 = vmax.f32 %v3607, %v3663
        %v3672 = vmax.f32 %v3608, %v3664
        %v3673 = vmax.f32 %v3609, %v3665
        %v3674 = vmax.f32 %v3610, %v3666
        %v3675 = vmax.f32 %v3611, %v3667
        %3676 = vrot.lane.b32.xlu0 %v3668, 16
        %v3677 = vpop.permute.xlu0 %3676
        %v3678 = vsel %vm663, %v3677, %v3668
        %3679 = vrot.lane.b32.xlu0 %v3669, 16
        %v3680 = vpop.permute.xlu0 %3679
        %v3681 = vsel %vm663, %v3680, %v3669
        %3682 = vrot.lane.b32.xlu0 %v3670, 16
        %v3683 = vpop.permute.xlu0 %3682
        %v3684 = vsel %vm663, %v3683, %v3670
        %3685 = vrot.lane.b32.xlu0 %v3671, 16
        %v3686 = vpop.permute.xlu0 %3685
        %v3687 = vsel %vm663, %v3686, %v3671
        %3688 = vrot.lane.b32.xlu0 %v3672, 16
        %v3689 = vpop.permute.xlu0 %3688
        %v3690 = vsel %vm663, %v3689, %v3672
        %3691 = vrot.lane.b32.xlu0 %v3673, 16
        %v3692 = vpop.permute.xlu0 %3691
        %v3693 = vsel %vm663, %v3692, %v3673
        %3694 = vrot.lane.b32.xlu0 %v3674, 16
        %v3695 = vpop.permute.xlu0 %3694
        %v3696 = vsel %vm663, %v3695, %v3674
        %3697 = vrot.lane.b32.xlu0 %v3675, 16
        %v3698 = vpop.permute.xlu0 %3697
        %v3699 = vsel %vm663, %v3698, %v3675
        %3700 = vrot.lane.b32.xlu0 %v3678, 16
        %v3701 = vpop.permute.xlu0 %3700
        %3702 = vrot.lane.b32.xlu0 %v3681, 16
        %v3703 = vpop.permute.xlu0 %3702
        %3704 = vrot.lane.b32.xlu0 %v3684, 16
        %v3705 = vpop.permute.xlu0 %3704
        %3706 = vrot.lane.b32.xlu0 %v3687, 16
        %v3707 = vpop.permute.xlu0 %3706
        %3708 = vrot.lane.b32.xlu0 %v3690, 16
        %v3709 = vpop.permute.xlu0 %3708
        %3710 = vrot.lane.b32.xlu0 %v3693, 16
        %v3711 = vpop.permute.xlu0 %3710
        %3712 = vrot.lane.b32.xlu0 %v3696, 16
        %v3713 = vpop.permute.xlu0 %3712
        %3714 = vrot.lane.b32.xlu0 %v3699, 16
        %v3715 = vpop.permute.xlu0 %3714
        %v3716 = vsel %vm663, %v3701, %v3668
        %v3717 = vsel %vm663, %v3703, %v3669
        %v3718 = vsel %vm663, %v3705, %v3670
        %v3719 = vsel %vm663, %v3707, %v3671
        %v3720 = vsel %vm663, %v3709, %v3672
        %v3721 = vsel %vm663, %v3711, %v3673
        %v3722 = vsel %vm663, %v3713, %v3674
        %v3723 = vsel %vm663, %v3715, %v3675
        %3732 = vrot.lane.b32.xlu0 %v3716, 113
        %v3733 = vpop.permute.xlu0 %3732
        %3734 = vrot.lane.b32.xlu0 %v3717, 113
        %v3735 = vpop.permute.xlu0 %3734
        %3736 = vrot.lane.b32.xlu0 %v3718, 113
        %v3737 = vpop.permute.xlu0 %3736
        %3738 = vrot.lane.b32.xlu0 %v3719, 113
        %v3739 = vpop.permute.xlu0 %3738
        %3740 = vrot.lane.b32.xlu0 %v3720, 113
        %v3741 = vpop.permute.xlu0 %3740
        %3742 = vrot.lane.b32.xlu0 %v3721, 113
        %v3743 = vpop.permute.xlu0 %3742
        %3744 = vrot.lane.b32.xlu0 %v3722, 113
        %v3745 = vpop.permute.xlu0 %3744
        %3746 = vrot.lane.b32.xlu0 %v3723, 113
        %v3747 = vpop.permute.xlu0 %3746
        %v3756 = vsel %vm713, %v3668, %v3733
        %v3757 = vsel %vm713, %v3669, %v3735
        %v3758 = vsel %vm713, %v3670, %v3737
        %v3759 = vsel %vm713, %v3671, %v3739
        %v3760 = vsel %vm713, %v3672, %v3741
        %v3761 = vsel %vm713, %v3673, %v3743
        %v3762 = vsel %vm713, %v3674, %v3745
        %v3763 = vsel %vm713, %v3675, %v3747
        %3764 = vrot.lane.b32.xlu0 %v3716, 127
        %v3765 = vpop.permute.xlu0 %3764
        %3766 = vrot.lane.b32.xlu0 %v3717, 127
        %v3767 = vpop.permute.xlu0 %3766
        %3768 = vrot.lane.b32.xlu0 %v3718, 127
        %v3769 = vpop.permute.xlu0 %3768
        %3770 = vrot.lane.b32.xlu0 %v3719, 127
        %v3771 = vpop.permute.xlu0 %3770
        %3772 = vrot.lane.b32.xlu0 %v3720, 127
        %v3773 = vpop.permute.xlu0 %3772
        %3774 = vrot.lane.b32.xlu0 %v3721, 127
        %v3775 = vpop.permute.xlu0 %3774
        %3776 = vrot.lane.b32.xlu0 %v3722, 127
        %v3777 = vpop.permute.xlu0 %3776
        %3778 = vrot.lane.b32.xlu0 %v3723, 127
        %v3779 = vpop.permute.xlu0 %3778
        %v3788 = vsel %vm755, %v3668, %v3765
        %v3789 = vsel %vm755, %v3669, %v3767
        %v3790 = vsel %vm755, %v3670, %v3769
        %v3791 = vsel %vm755, %v3671, %v3771
        %v3792 = vsel %vm755, %v3672, %v3773
        %v3793 = vsel %vm755, %v3673, %v3775
        %v3794 = vsel %vm755, %v3674, %v3777
        %v3795 = vsel %vm755, %v3675, %v3779
        %v3796 = vmax.f32 %v3756, %v3788
        %v3797 = vmax.f32 %v3757, %v3789
        %v3798 = vmax.f32 %v3758, %v3790
        %v3799 = vmax.f32 %v3759, %v3791
        %v3800 = vmax.f32 %v3760, %v3792
        %v3801 = vmax.f32 %v3761, %v3793
        %v3802 = vmax.f32 %v3762, %v3794
        %v3803 = vmax.f32 %v3763, %v3795
        %v3804 = vmax.f32 %v3668, %v3796
        %v3805 = vmax.f32 %v3669, %v3797
        %v3806 = vmax.f32 %v3670, %v3798
        %v3807 = vmax.f32 %v3671, %v3799
        %v3808 = vmax.f32 %v3672, %v3800
        %v3809 = vmax.f32 %v3673, %v3801
        %v3810 = vmax.f32 %v3674, %v3802
        %v3811 = vmax.f32 %v3675, %v3803
        %v3812 = vsub.f32 %v3204, %v3804
        %v3813 = vsub.f32 %v3205, %v3805
        %v3814 = vsub.f32 %v3206, %v3806
        %v3815 = vsub.f32 %v3207, %v3807
        %v3816 = vsub.f32 %v3208, %v3808
        %v3817 = vsub.f32 %v3209, %v3809
        %v3818 = vsub.f32 %v3210, %v3810
        %v3819 = vsub.f32 %v3211, %v3811
        %v3820 = vmax.f32 %v3812, 0.0
        %v3821 = vmax.f32 %v3813, 0.0
        %v3822 = vmax.f32 %v3814, 0.0
        %v3823 = vmax.f32 %v3815, 0.0
        %v3824 = vmax.f32 %v3816, 0.0
        %v3825 = vmax.f32 %v3817, 0.0
        %v3826 = vmax.f32 %v3818, 0.0
        %v3827 = vmax.f32 %v3819, 0.0
        %v3828 = vadd.f32 %v3444, %v3820
        %v3829 = vadd.f32 %v3445, %v3821
        %v3830 = vadd.f32 %v3446, %v3822
        %v3831 = vadd.f32 %v3447, %v3823
        %v3832 = vadd.f32 %v3448, %v3824
        %v3833 = vadd.f32 %v3449, %v3825
        %v3834 = vadd.f32 %v3450, %v3826
        %v3835 = vadd.f32 %v3451, %v3827
        %v3836 = vmul.f32 %v3444, %v3820
        %v3837 = vmul.f32 %v3445, %v3821
        %v3838 = vmul.f32 %v3446, %v3822
        %v3839 = vmul.f32 %v3447, %v3823
        %v3840 = vmul.f32 %v3448, %v3824
        %v3841 = vmul.f32 %v3449, %v3825
        %v3842 = vmul.f32 %v3450, %v3826
        %v3843 = vmul.f32 %v3451, %v3827
        %v3844 = vsub.f32 %v3828, %v3836
        %v3845 = vsub.f32 %v3829, %v3837
        %v3846 = vsub.f32 %v3830, %v3838
        %v3847 = vsub.f32 %v3831, %v3839
        %v3848 = vsub.f32 %v3832, %v3840
        %v3849 = vsub.f32 %v3833, %v3841
        %v3850 = vsub.f32 %v3834, %v3842
        %v3851 = vsub.f32 %v3835, %v3843
        %v3852 = vmul.f32 %v2220, %v214
        %v3853 = vmul.f32 %v2221, %v215
        %v3854 = vmul.f32 %v2222, %v216
        %v3855 = vmul.f32 %v2223, %v217
        %v3856 = vmul.f32 %v2224, %v218
        %v3857 = vmul.f32 %v2225, %v219
        %v3858 = vmul.f32 %v2226, %v220
        %v3859 = vmul.f32 %v2227, %v221
        %v3860 = vsel %vm310, %v3852, 0.0
        %v3861 = vsel %vm310, %v3854, 0.0
        %v3862 = vadd.f32 %v3860, %v3861
        %v3863 = vsel %vm310, %v3856, 0.0
        %v3864 = vadd.f32 %v3862, %v3863
        %v3865 = vsel %vm310, %v3858, 0.0
        %v3866 = vadd.f32 %v3864, %v3865
        %v3867 = vsel %vm310, %v3853, 0.0
        %v3868 = vsel %vm310, %v3855, 0.0
        %v3869 = vadd.f32 %v3867, %v3868
        %v3870 = vsel %vm310, %v3857, 0.0
        %v3871 = vadd.f32 %v3869, %v3870
        %v3872 = vsel %vm310, %v3859, 0.0
        %v3873 = vadd.f32 %v3871, %v3872
        %v3874 = vadd.f32 %v3866, 1.0
        %v3875 = vadd.f32 %v3873, 1.0
        %v3876 = vsel %vm310, %v2220, 0.0
        %v3877 = vsel %vm310, %v2222, 0.0
        %v3878 = vadd.f32 %v3876, %v3877
        %v3879 = vsel %vm310, %v2224, 0.0
        %v3880 = vadd.f32 %v3878, %v3879
        %v3881 = vsel %vm310, %v2226, 0.0
        %v3882 = vadd.f32 %v3880, %v3881
        %v3883 = vsel %vm310, %v2221, 0.0
        %v3884 = vsel %vm310, %v2223, 0.0
        %v3885 = vadd.f32 %v3883, %v3884
        %v3886 = vsel %vm310, %v2225, 0.0
        %v3887 = vadd.f32 %v3885, %v3886
        %v3888 = vsel %vm310, %v2227, 0.0
        %v3889 = vadd.f32 %v3887, %v3888
        %v3890 = vadd.f32 %v3882, 1.0
        %v3891 = vadd.f32 %v3889, 1.0
        %v3892 = vrcp.pop %v3890
        %v3893 = vrcp.pop %v3891
        %v3894 = vmul.f32 %v3874, %v3892
        %v3895 = vmul.f32 %v3875, %v3893
        %v3896 = vmul.f32 %v3844, %v471
        %v3897 = vmul.f32 %v3845, %v472
        %v3898 = vmul.f32 %v3846, %v473
        %v3899 = vmul.f32 %v3847, %v474
        %v3900 = vmul.f32 %v3848, %v475
        %v3901 = vmul.f32 %v3849, %v476
        %v3902 = vmul.f32 %v3850, %v477
        %v3903 = vmul.f32 %v3851, %v478
        %v3904 = vsel %vm310, %v3896, 0.0
        %v3905 = vsel %vm310, %v3898, 0.0
        %v3906 = vadd.f32 %v3904, %v3905
        %v3907 = vsel %vm310, %v3900, 0.0
        %v3908 = vadd.f32 %v3906, %v3907
        %v3909 = vsel %vm310, %v3902, 0.0
        %v3910 = vadd.f32 %v3908, %v3909
        %v3911 = vsel %vm310, %v3897, 0.0
        %v3912 = vsel %vm310, %v3899, 0.0
        %v3913 = vadd.f32 %v3911, %v3912
        %v3914 = vsel %vm310, %v3901, 0.0
        %v3915 = vadd.f32 %v3913, %v3914
        %v3916 = vsel %vm310, %v3903, 0.0
        %v3917 = vadd.f32 %v3915, %v3916
        %v3918 = vadd.f32 %v3910, 1.0
        %v3919 = vadd.f32 %v3917, 1.0
        %v3920 = vsel %vm310, %v3844, 0.0
        %v3921 = vsel %vm310, %v3846, 0.0
        %v3922 = vadd.f32 %v3920, %v3921
        %v3923 = vsel %vm310, %v3848, 0.0
        %v3924 = vadd.f32 %v3922, %v3923
        %v3925 = vsel %vm310, %v3850, 0.0
        %v3926 = vadd.f32 %v3924, %v3925
        %v3927 = vsel %vm310, %v3845, 0.0
        %v3928 = vsel %vm310, %v3847, 0.0
        %v3929 = vadd.f32 %v3927, %v3928
        %v3930 = vsel %vm310, %v3849, 0.0
        %v3931 = vadd.f32 %v3929, %v3930
        %v3932 = vsel %vm310, %v3851, 0.0
        %v3933 = vadd.f32 %v3931, %v3932
        %v3934 = vadd.f32 %v3926, 1.0
        %v3935 = vadd.f32 %v3933, 1.0
        %v3936 = vrcp.pop %v3934
        %v3937 = vrcp.pop %v3935
        %v3938 = vmul.f32 %v3918, %v3936
        %v3939 = vmul.f32 %v3919, %v3937
        %v3940 = vmul.f32 %v3894, %v3938
        %v3941 = vmul.f32 %v3895, %v3939
        %v3942 = vmul.f32 %v3940, 2.0
        %v3943 = vmul.f32 %v3941, 2.0
        %v3944 = vadd.f32 %v3894, %v3938
        %v3945 = vadd.f32 %v3895, %v3939
        %v3946 = vrcp.pop %v3944
        %v3947 = vrcp.pop %v3945
        %v3948 = vmul.f32 %v3942, %v3946
        %v3949 = vmul.f32 %v3943, %v3947
        %v3950 = vsub.f32 1.0, %v3948
        %v3951 = vsub.f32 1.0, %v3949
        %v3952 = vsel %vm310, %v3950, 0.0
        %v3953 = vsel %vm310, %v3951, 0.0
        %v3954 = vadd.f32 %v3952, %v3953
        %3955 = vadd.xlane.f32.xlu0 %v3954
        %v3956 = vpop.xlane.xlu0 %3955
        %v3957 = vrot.slane %v3956, 4
        %v3958 = vadd.f32 %v3956, %v3957
        %v3959 = vrot.slane %v3958, 2
        %v3960 = vadd.f32 %v3958, %v3959
        %v3961 = vrot.slane %v3960, 1
        %v3962 = vadd.f32 %v3960, %v3961
        %s3963 = vtos %v3962
        %v3964 = vrcp.pop 256.0
        %v3965 = vmul.f32 256.0, %v3964
        %v3966 = vsub.f32 1.0, %v3965
        %v3967 = vmul.f32 %v3964, %v3966
        %v3968 = vadd.f32 %v3964, %v3967
        %vm3969 = vweird.f32 %v3964
        %v3970 = vsel %vm3969, %v3964, %v3968
        %s3971 = vtos %v3970
        %s3972 = smul.f32 %s3963, %s3971
        %s3973 = smul.f32 %s334, 0.5
        %v3974 = vrcp.pop 2048.0
        %v3975 = vmul.f32 2048.0, %v3974
        %v3976 = vsub.f32 1.0, %v3975
        %v3977 = vmul.f32 %v3974, %v3976
        %v3978 = vadd.f32 %v3974, %v3977
        %vm3979 = vweird.f32 %v3974
        %v3980 = vsel %vm3979, %v3974, %v3978
        %s3981 = vtos %v3980
        %s3982 = smul.f32 %s3973, %s3981
        %s3983 = smul.f32 %s577, 0.5
        %s3984 = smul.f32 %s3972, 0.5
        %s3985 = sadd.f32 %s3983, %s3984
        %s3986 = smul.f32 %s3985, 0.5
        %v3987 = vrcp.pop 2.0
        %v3988 = vmul.f32 2.0, %v3987
        %v3989 = vsub.f32 1.0, %v3988
        %v3990 = vmul.f32 %v3987, %v3989
        %v3991 = vadd.f32 %v3987, %v3990
        %vm3992 = vweird.f32 %v3987
        %v3993 = vsel %vm3992, %v3987, %v3991
        %s3994 = vtos %v3993
        %s3995 = smul.f32 %s3986, %s3994
        %s3996 = sadd.f32 %s3982, %s3995
        %v3997 = vstv %s3996
        %3998 = vst [vmem:[%s205] sm:$0xff] %v3997
        %s3999 = sand.u32 %s82, 1
        %s4000 = scalar_lea.sflag [#allocation4], %s3999
        %s4001 = sand.u32 %s82, 1
        %s4002 = smul.addr %s4001, 8
        %s4003 = scalar_lea.vmem [#allocation7], %s4002
        // Predicated region
        $region37: #{tpu_custom_call.1} parent=27 // pred_check
          %p4004 = pneg %p92
        $region38: #{tpu_custom_call.1} parent=27 // pred_check_branch
          %4006 = sbr.rel (%p4004) target = $region40
        $region39: #{tpu_custom_call.1} parent=27 // pred_region
          %4008 = vsyncadd %s4000, 0
          %s4009 = smul.addr %s22, 8
          %s4010 = scalar_lea.hbm %s2, %s4009
          %s4012 = sshll.u32 %s4003, 4
          %s4013 = int_to_ptr.vmem [resolvable:$true] %s4012
          %s4014 = sshll.u32 %s4010, 4
          %s4015 = int_to_ptr.hbm [resolvable:$true] %s4014
          %4017 = dma.vmem_to_hbm [thread:$0]  %s4013, 128, %s4015, %s4000
        $region40: #{tpu_custom_call.1} parent=27 // pred_fallthru
          _
      $region28: #{tpu_custom_call.1} parent=5 // pred_fallthru
        _
      %p4018 = scmp.le.s32.totalorder 2, %s17
      // Predicated region
      $region41: #{tpu_custom_call.1} parent=5 // pred_check
        %p4019 = pneg %p4018
      $region42: #{tpu_custom_call.1} parent=5 // pred_check_branch
        %4021 = sbr.rel (%p4019) target = $region44
      $region43: #{tpu_custom_call.1} parent=5 // pred_region
        %s4022 = ssub.s32 %s17, 2
        // Predicated region
        $region45: #{tpu_custom_call.1} parent=43 // pred_check
          %p4023 = pneg %p98
        $region46: #{tpu_custom_call.1} parent=43 // pred_check_branch
          %4025 = sbr.rel (%p4023) target = $region48
        $region47: #{tpu_custom_call.1} parent=43 // pred_region
          %s4026 = sand.u32 %s83, 1
          %s4027 = scalar_lea.sflag [#allocation4], %s4026
          %s4028 = sand.u32 %s83, 1
          %s4029 = smul.addr %s4028, 8
          %s4030 = scalar_lea.vmem [#allocation7], %s4029
          %4032 = dma.done %s4027, 128
        $region48: #{tpu_custom_call.1} parent=43 // pred_fallthru
          _
      $region44: #{tpu_custom_call.1} parent=5 // pred_fallthru
        _
    $region6: #{tpu_custom_call.1} parent=1 // loop_footer
      %s21 = sadd.s32 1, %s17
    $region7: #{tpu_custom_call.1} parent=1 // loop_footer_branch
      %16 = sbr.rel target = $region3
    $region8: #{tpu_custom_call.1} parent=1 // loop_exit
      _
    %4033 = vsyncpa [#allocation3], 1
    %s4034 = scalar_lea.sflag [#allocation3], 1
    %4035 = vsyncpa %s4034, 1
    %4036 = vsyncpa [#allocation6], 1
    %s4037 = scalar_lea.sflag [#allocation6], 1
    %4038 = vsyncpa %s4037, 1
    %4039 = vsyncpa [#allocation4], 1
    %s4040 = scalar_lea.sflag [#allocation4], 1
    %4041 = vsyncpa %s4040, 1

</llo_original>
